<compile_context>
chip_gen: v6e
topology: v6e:2x2x1
jax: 0.10.0
libtpu: 0.0.40
codegen_flags: <defaults>
</compile_context>

<pallas_src>
import functools

import jax
import jax.numpy as jnp
from jax.experimental import pallas as pl
from jax.experimental.pallas import tpu as pltpu

_HP = jax.lax.Precision.HIGHEST


def _conv_cbam_kernel(patches_ref, w3_ref, w1_ref, wc1_ref, wc2_ref, msa_ref,
                      sab_ref, o_ref, *, is_norm=True):
    # patches_ref : (1, 9*Cin, HW)   im2col'd, zero-padded input (taps on sublane)
    # w3_ref      : (Cout, 9*Cin)    3x3 conv weights, flattened (O, I*kH*kW)
    # w1_ref      : (Cout, Cout)     1x1 conv weights (out, in)
    # wc1_ref     : (Chid, Cout)     channel-attention MLP layer 1 (out, in)
    # wc2_ref     : (Cout, Chid)     channel-attention MLP layer 2 (out, in)
    # msa_ref     : (2, HW, HW)      7x7 'same' conv as matrices [avg-map, max-map]
    # sab_ref     : (1,)  SMEM       spatial-attention conv bias
    # o_ref       : (1, Cout, HW)    lane-dense output (== flattened NCHW)
    _, _, HW = o_ref.shape

    x = patches_ref[0]                                          # (9*Cin, HW)

    # ---- 3x3 conv (no bias) as one matmul ------------------------------------
    acc = jnp.dot(w3_ref[...], x, preferred_element_type=jnp.float32,
                  precision=_HP)                                # (Cout, HW)

    # ---- InstanceNorm2d (per-channel over HW, biased var, eps=1e-5), one pass -
    if is_norm:
        inv_hw = 1.0 / HW
        mean = jnp.sum(acc, axis=1, keepdims=True) * inv_hw     # (Cout, 1)
        ex2 = jnp.sum(acc * acc, axis=1, keepdims=True) * inv_hw
        var = jnp.maximum(ex2 - mean * mean, 0.0)
        y = (acc - mean) * jax.lax.rsqrt(var + 1e-5)
    else:
        y = acc

    # ---- LeakyReLU(0.1) -------------------------------------------------------
    y = jnp.where(y > 0, y, 0.1 * y)

    # ---- 1x1 conv (no bias) ---------------------------------------------------
    y = jnp.dot(w1_ref[...], y, preferred_element_type=jnp.float32,
                precision=_HP)                                  # (Cout, HW)

    # ---- CBAM: channel attention (ratio=2) ------------------------------------
    avg_p = jnp.mean(y, axis=1, keepdims=True)                  # (Cout, 1)
    max_p = jnp.max(y, axis=1, keepdims=True)                   # (Cout, 1)

    def mlp(v):                                                 # v: (Cout, 1)
        h = jnp.dot(wc1_ref[...], v, preferred_element_type=jnp.float32,
                    precision=_HP)                              # (Chid, 1)
        h = jnp.maximum(h, 0.0)
        return jnp.dot(wc2_ref[...], h, preferred_element_type=jnp.float32,
                       precision=_HP)                           # (Cout, 1)

    ca = jax.nn.sigmoid(mlp(avg_p) + mlp(max_p))                # (Cout, 1)
    y = y * ca

    # ---- CBAM: spatial attention (7x7 'same' conv) as two lane-dense matvecs --
    avg_c = jnp.mean(y, axis=0, keepdims=True)                  # (1, HW)
    max_c = jnp.max(y, axis=0, keepdims=True)                   # (1, HW)
    sa = (jnp.dot(avg_c, msa_ref[0], preferred_element_type=jnp.float32,
                  precision=_HP)
          + jnp.dot(max_c, msa_ref[1], preferred_element_type=jnp.float32,
                    precision=_HP)
          + sab_ref[0])                                         # (1, HW)
    sa = jax.nn.sigmoid(sa)
    y = y * sa

    # ---- final LeakyReLU(0.1) -------------------------------------------------
    y = jnp.where(y > 0, y, 0.1 * y)
    o_ref[...] = y[None].astype(o_ref.dtype)


# ----------------------------- wrapper-side glue -----------------------------
def _im2col_nchw(x, kh, kw, stride, pad):
    """x: (N, C, H, W) -> patches (N, C*kh*kw, Ho*Wo) matching w.reshape(O, I*kh*kw)."""
    N, C, H, W = x.shape
    Ho = (H + 2 * pad - kh) // stride + 1
    Wo = (W + 2 * pad - kw) // stride + 1
    xp = jnp.pad(x, ((0, 0), (0, 0), (pad, pad), (pad, pad)))
    taps = []
    for dy in range(kh):
        for dx in range(kw):
            taps.append(xp[:, :, dy:dy + stride * Ho:stride,
                           dx:dx + stride * Wo:stride])
    patches = jnp.stack(taps, axis=2)                    # (N, C, kh*kw, Ho, Wo)
    return patches.reshape(N, C * kh * kw, Ho * Wo), Ho, Wo


def _spatial_attn_matrices(wsa, Ho, Wo):
    """(1,2,7,7) weights -> (2, HW, HW) M with (map_flat @ M[c]) == 7x7 'same' conv."""
    k = wsa.shape[-1]
    r = k // 2
    dy = jnp.arange(Ho)[:, None] - jnp.arange(Ho)[None, :] + r   # src_h - dst_h + r
    dx = jnp.arange(Wo)[:, None] - jnp.arange(Wo)[None, :] + r
    vy = (dy >= 0) & (dy < k)
    vx = (dx >= 0) & (dx < k)
    ky = jnp.clip(dy, 0, k - 1)
    kx = jnp.clip(dx, 0, k - 1)
    w = wsa[0].astype(jnp.float32)                               # (2, k, k)
    taps = w[:, ky[:, :, None, None], kx[None, None, :, :]]      # (2,Hs,Hd,Ws,Wd)
    mask = vy[:, :, None, None] & vx[None, None, :, :]
    taps = jnp.where(mask[None], taps, 0.0)
    return jnp.transpose(taps, (0, 1, 3, 2, 4)).reshape(2, Ho * Wo, Ho * Wo)


def conv_cbam_block(x_nchw, params, *, kernel_size=3, stride=1, padding=1,
                    is_norm=True):
    """Forward of ConvCBAMBlock. x_nchw: (N, Cin, H, W). Returns NCHW."""
    w3, w1, wc1, wc2, wsa, sab = params          # PyTorch (O, I, kH, kW) layouts
    N, Cin, H, W = x_nchw.shape
    Cout = w3.shape[0]
    Chid = wc1.shape[0]
    kh = kw = int(kernel_size)

    patches, Ho, Wo = _im2col_nchw(x_nchw.astype(jnp.float32), kh, kw, stride,
                                   padding)
    HW = Ho * Wo

    w3_f = w3.reshape(Cout, Cin * kh * kw).astype(jnp.float32)   # (Cout, 9*Cin)
    w1_f = w1[:, :, 0, 0].astype(jnp.float32)                    # (Cout, Cout)
    wc1_f = wc1[:, :, 0, 0].astype(jnp.float32)                  # (Chid, Cout)
    wc2_f = wc2[:, :, 0, 0].astype(jnp.float32)                  # (Cout, Chid)
    msa = _spatial_attn_matrices(wsa, Ho, Wo)                    # (2, HW, HW)
    sab_f = sab.reshape(-1).astype(jnp.float32)                  # (1,)

    kernel = functools.partial(_conv_cbam_kernel, is_norm=is_norm)

    out_flat = pl.pallas_call(
        kernel,
        out_shape=jax.ShapeDtypeStruct((N, Cout, HW), jnp.float32),
        grid_spec=pltpu.PrefetchScalarGridSpec(
            num_scalar_prefetch=0,
            grid=(N,),                                   # one batch element per step
            in_specs=[
                pl.BlockSpec((1, Cin * kh * kw, HW), lambda n: (n, 0, 0)),
                pl.BlockSpec((Cout, Cin * kh * kw), lambda n: (0, 0)),
                pl.BlockSpec((Cout, Cout), lambda n: (0, 0)),
                pl.BlockSpec((Chid, Cout), lambda n: (0, 0)),
                pl.BlockSpec((Cout, Chid), lambda n: (0, 0)),
                pl.BlockSpec((2, HW, HW), lambda n: (0, 0, 0)),
                pl.BlockSpec(memory_space=pltpu.MemorySpace.SMEM),
            ],
            out_specs=pl.BlockSpec((1, Cout, HW), lambda n: (n, 0, 0)),
        ),
        compiler_params=pltpu.CompilerParams(
            dimension_semantics=("parallel",)),          # v7x: 2 TCs split the batch
    )(patches, w3_f, w1_f, wc1_f, wc2_f, msa, sab_f)

    return out_flat.reshape(N, Cout, Ho, Wo)             # pure reshape (already NCHW)


# ------------------------- pure-JAX reference (for checking) -------------------------
def _conv2d_nchw(x, w, stride, pad):
    return jax.lax.conv_general_dilated(
        x, w, window_strides=(stride, stride), padding=[(pad, pad), (pad, pad)],
        dimension_numbers=("NCHW", "OIHW", "NCHW"), precision=_HP)


def ref_forward(x, params, *, kernel_size=3, stride=1, padding=1, is_norm=True):
    w3, w1, wc1, wc2, wsa, sab = params
    out = _conv2d_nchw(x, w3, stride, padding)
    if is_norm:
        mean = out.mean(axis=(2, 3), keepdims=True)
        var = ((out - mean) ** 2).mean(axis=(2, 3), keepdims=True)
        out = (out - mean) / jnp.sqrt(var + 1e-5)
    out = jnp.where(out > 0, out, 0.1 * out)
    out = _conv2d_nchw(out, w1, 1, 0)
    avg = out.mean(axis=(2, 3), keepdims=True)
    mx = out.max(axis=(2, 3), keepdims=True)

    def mlp(v):
        h = jnp.maximum(_conv2d_nchw(v, wc1, 1, 0), 0.0)
        return _conv2d_nchw(h, wc2, 1, 0)

    ca = jax.nn.sigmoid(mlp(avg) + mlp(mx))
    out = ca * out
    avg_c = out.mean(axis=1, keepdims=True)
    max_c = out.max(axis=1, keepdims=True)
    cat = jnp.concatenate([avg_c, max_c], axis=1)
    sa = jax.nn.sigmoid(_conv2d_nchw(cat, wsa, 1, 3) + sab.reshape(1, 1, 1, 1))
    out = sa * out
    return jnp.where(out > 0, out, 0.1 * out)


if __name__ == "__main__":
    # ConvCBAMBlock(in_channel=4, out_channel=8, kernel_size=3, stride=1, padding=1)
    N, Cin, H, W = 2, 4, 16, 16
    Cout = 8

    key = jax.random.PRNGKey(0)
    ks = jax.random.split(key, 7)
    w3 = jax.random.normal(ks[0], (Cout, Cin, 3, 3), jnp.float32) * 0.2       # conv_1
    w1 = jax.random.normal(ks[1], (Cout, Cout, 1, 1), jnp.float32) * 0.2      # conv_2
    wc1 = jax.random.normal(ks[2], (Cout // 2, Cout, 1, 1), jnp.float32) * 0.2
    wc2 = jax.random.normal(ks[3], (Cout, Cout // 2, 1, 1), jnp.float32) * 0.2
    wsa = jax.random.normal(ks[4], (1, 2, 7, 7), jnp.float32) * 0.2           # spatial attn
    sab = jax.random.normal(ks[5], (1,), jnp.float32) * 0.2                   # spatial attn bias
    x = jax.random.normal(ks[6], (N, Cin, H, W), jnp.float32)
    params = (w3, w1, wc1, wc2, wsa, sab)

    fwd = jax.jit(lambda xx: conv_cbam_block(xx, params))
    out = jax.block_until_ready(fwd(x))

    ref = jax.block_until_ready(ref_forward(x, params))
    assert out.shape == (N, Cout, H, W), out.shape
    assert jnp.allclose(out, ref, atol=1e-3, rtol=1e-3), \
        float(jnp.max(jnp.abs(out - ref)))

    print("KERNEL_OK")
</pallas_src>

<mosaic_0001>
module attributes {stable_mosaic.version = 11 : i64} {
  func.func @_conv_cbam_kernel(%arg0: i32, %arg1: memref<1x36x256xf32, #tpu.memory_space<vmem>>, %arg2: memref<8x36xf32, #tpu.memory_space<vmem>>, %arg3: memref<8x8xf32, #tpu.memory_space<vmem>>, %arg4: memref<4x8xf32, #tpu.memory_space<vmem>>, %arg5: memref<8x4xf32, #tpu.memory_space<vmem>>, %arg6: memref<2x256x256xf32, #tpu.memory_space<vmem>>, %arg7: memref<1xf32, #tpu.memory_space<smem>>, %arg8: memref<1x8x256xf32, #tpu.memory_space<vmem>>) attributes {dimension_semantics = [#tpu.dimension_semantics<parallel>], iteration_bounds = array<i64: 2>, scalar_prefetch = 0 : i64, scratch_operands = 0 : i64, tpu.core_type = #tpu.core_type<tc>, window_params = [{transform_indices = @transform_0, window_bounds = array<i64: 1, 36, 256>}, {pipeline_mode = #tpu.pipeline_mode<synchronous>, transform_indices = @transform_1, window_bounds = array<i64: 8, 36>}, {pipeline_mode = #tpu.pipeline_mode<synchronous>, transform_indices = @transform_2, window_bounds = array<i64: 8, 8>}, {pipeline_mode = #tpu.pipeline_mode<synchronous>, transform_indices = @transform_3, window_bounds = array<i64: 4, 8>}, {pipeline_mode = #tpu.pipeline_mode<synchronous>, transform_indices = @transform_4, window_bounds = array<i64: 8, 4>}, {pipeline_mode = #tpu.pipeline_mode<synchronous>, transform_indices = @transform_5, window_bounds = array<i64: 2, 256, 256>}, {transform_indices = @transform_6, window_bounds = array<i64: 1>}, {transform_indices = @transform_7, window_bounds = array<i64: 1, 8, 256>}]} {
    %c0 = arith.constant 0 : index
    %c0_0 = arith.constant 0 : index
    %c0_1 = arith.constant 0 : index
    %0 = vector.load %arg1[%c0, %c0_0, %c0_1] : memref<1x36x256xf32, #tpu.memory_space<vmem>>, vector<1x36x256xf32>
    %1 = vector.shape_cast %0 : vector<1x36x256xf32> to vector<36x256xf32>
    %c0_2 = arith.constant 0 : index
    %c0_3 = arith.constant 0 : index
    %2 = vector.load %arg2[%c0_2, %c0_3] : memref<8x36xf32, #tpu.memory_space<vmem>>, vector<8x36xf32>
    %cst = arith.constant dense<0.000000e+00> : vector<8x256xf32>
    %3 = tpu.matmul %2, %1, %cst {dimension_numbers = #tpu.dot_dimension_numbers<[1], [0], [0], [1], [0, 0, 1, 1], [], []>, precision = #tpu.contract_precision<fp32>} : vector<8x36xf32>, vector<36x256xf32>, vector<8x256xf32> -> vector<8x256xf32>
    %cst_4 = arith.constant dense<0.000000e+00> : vector<8xf32>
    %4 = vector.multi_reduction <add>, %3, %cst_4 [1] : vector<8x256xf32> to vector<8xf32>
    %5 = vector.shape_cast %4 : vector<8xf32> to vector<8x1xf32>
    %cst_5 = arith.constant 3.906250e-03 : f32
    %6 = vector.broadcast %cst_5 : f32 to vector<8x1xf32>
    %7 = arith.mulf %5, %6 : vector<8x1xf32>
    %8 = arith.mulf %3, %3 : vector<8x256xf32>
    %cst_6 = arith.constant dense<0.000000e+00> : vector<8xf32>
    %9 = vector.multi_reduction <add>, %8, %cst_6 [1] : vector<8x256xf32> to vector<8xf32>
    %10 = vector.shape_cast %9 : vector<8xf32> to vector<8x1xf32>
    %cst_7 = arith.constant 3.906250e-03 : f32
    %11 = vector.broadcast %cst_7 : f32 to vector<8x1xf32>
    %12 = arith.mulf %10, %11 : vector<8x1xf32>
    %13 = arith.mulf %7, %7 : vector<8x1xf32>
    %14 = arith.subf %12, %13 : vector<8x1xf32>
    %cst_8 = arith.constant 0.000000e+00 : f32
    %15 = vector.broadcast %cst_8 : f32 to vector<8x1xf32>
    %16 = arith.maximumf %14, %15 : vector<8x1xf32>
    %17 = vector.broadcast %7 : vector<8x1xf32> to vector<8x256xf32>
    %18 = arith.subf %3, %17 : vector<8x256xf32>
    %cst_9 = arith.constant 9.99999974E-6 : f32
    %19 = vector.broadcast %cst_9 : f32 to vector<8x1xf32>
    %20 = arith.addf %16, %19 : vector<8x1xf32>
    %21 = math.rsqrt %20 : vector<8x1xf32>
    %22 = vector.broadcast %21 : vector<8x1xf32> to vector<8x256xf32>
    %23 = arith.mulf %18, %22 : vector<8x256xf32>
    %cst_10 = arith.constant 0.000000e+00 : f32
    %24 = vector.broadcast %cst_10 : f32 to vector<8x256xf32>
    %25 = arith.cmpf ogt, %23, %24 : vector<8x256xf32>
    %cst_11 = arith.constant 1.000000e-01 : f32
    %26 = vector.broadcast %cst_11 : f32 to vector<8x256xf32>
    %27 = arith.mulf %26, %23 : vector<8x256xf32>
    %28 = arith.select %25, %23, %27 : vector<8x256xi1>, vector<8x256xf32>
    %c0_12 = arith.constant 0 : index
    %c0_13 = arith.constant 0 : index
    %29 = vector.load %arg3[%c0_12, %c0_13] : memref<8x8xf32, #tpu.memory_space<vmem>>, vector<8x8xf32>
    %cst_14 = arith.constant dense<0.000000e+00> : vector<8x256xf32>
    %30 = tpu.matmul %29, %28, %cst_14 {dimension_numbers = #tpu.dot_dimension_numbers<[1], [0], [0], [1], [0, 0, 1, 1], [], []>, precision = #tpu.contract_precision<fp32>} : vector<8x8xf32>, vector<8x256xf32>, vector<8x256xf32> -> vector<8x256xf32>
    %cst_15 = arith.constant dense<0.000000e+00> : vector<8xf32>
    %31 = vector.multi_reduction <add>, %30, %cst_15 [1] : vector<8x256xf32> to vector<8xf32>
    %32 = vector.shape_cast %31 : vector<8xf32> to vector<8x1xf32>
    %cst_16 = arith.constant 2.560000e+02 : f32
    %33 = vector.broadcast %cst_16 : f32 to vector<8x1xf32>
    %34 = arith.divf %32, %33 : vector<8x1xf32>
    %cst_17 = arith.constant dense<0xFF800000> : vector<8xf32>
    %35 = vector.multi_reduction <maximumf>, %30, %cst_17 [1] : vector<8x256xf32> to vector<8xf32>
    %36 = vector.shape_cast %35 : vector<8xf32> to vector<8x1xf32>
    %c0_18 = arith.constant 0 : index
    %c0_19 = arith.constant 0 : index
    %37 = vector.load %arg4[%c0_18, %c0_19] : memref<4x8xf32, #tpu.memory_space<vmem>>, vector<4x8xf32>
    %cst_20 = arith.constant dense<0.000000e+00> : vector<4x1xf32>
    %38 = tpu.matmul %37, %34, %cst_20 {dimension_numbers = #tpu.dot_dimension_numbers<[1], [0], [0], [1], [0, 0, 1, 1], [], []>, precision = #tpu.contract_precision<fp32>} : vector<4x8xf32>, vector<8x1xf32>, vector<4x1xf32> -> vector<4x1xf32>
    %cst_21 = arith.constant 0.000000e+00 : f32
    %39 = vector.broadcast %cst_21 : f32 to vector<4x1xf32>
    %40 = arith.maximumf %38, %39 : vector<4x1xf32>
    %c0_22 = arith.constant 0 : index
    %c0_23 = arith.constant 0 : index
    %41 = vector.load %arg5[%c0_22, %c0_23] : memref<8x4xf32, #tpu.memory_space<vmem>>, vector<8x4xf32>
    %cst_24 = arith.constant dense<0.000000e+00> : vector<8x1xf32>
    %42 = tpu.matmul %41, %40, %cst_24 {dimension_numbers = #tpu.dot_dimension_numbers<[1], [0], [0], [1], [0, 0, 1, 1], [], []>, precision = #tpu.contract_precision<fp32>} : vector<8x4xf32>, vector<4x1xf32>, vector<8x1xf32> -> vector<8x1xf32>
    %c0_25 = arith.constant 0 : index
    %c0_26 = arith.constant 0 : index
    %43 = vector.load %arg4[%c0_25, %c0_26] : memref<4x8xf32, #tpu.memory_space<vmem>>, vector<4x8xf32>
    %cst_27 = arith.constant dense<0.000000e+00> : vector<4x1xf32>
    %44 = tpu.matmul %43, %36, %cst_27 {dimension_numbers = #tpu.dot_dimension_numbers<[1], [0], [0], [1], [0, 0, 1, 1], [], []>, precision = #tpu.contract_precision<fp32>} : vector<4x8xf32>, vector<8x1xf32>, vector<4x1xf32> -> vector<4x1xf32>
    %cst_28 = arith.constant 0.000000e+00 : f32
    %45 = vector.broadcast %cst_28 : f32 to vector<4x1xf32>
    %46 = arith.maximumf %44, %45 : vector<4x1xf32>
    %c0_29 = arith.constant 0 : index
    %c0_30 = arith.constant 0 : index
    %47 = vector.load %arg5[%c0_29, %c0_30] : memref<8x4xf32, #tpu.memory_space<vmem>>, vector<8x4xf32>
    %cst_31 = arith.constant dense<0.000000e+00> : vector<8x1xf32>
    %48 = tpu.matmul %47, %46, %cst_31 {dimension_numbers = #tpu.dot_dimension_numbers<[1], [0], [0], [1], [0, 0, 1, 1], [], []>, precision = #tpu.contract_precision<fp32>} : vector<8x4xf32>, vector<4x1xf32>, vector<8x1xf32> -> vector<8x1xf32>
    %49 = arith.addf %42, %48 : vector<8x1xf32>
    %50 = arith.negf %49 : vector<8x1xf32>
    %51 = math.exp %50 : vector<8x1xf32>
    %cst_32 = arith.constant 1.000000e+00 : f32
    %52 = vector.broadcast %cst_32 : f32 to vector<8x1xf32>
    %53 = arith.addf %52, %51 : vector<8x1xf32>
    %54 = arith.divf %52, %53 : vector<8x1xf32>
    %55 = vector.broadcast %54 : vector<8x1xf32> to vector<8x256xf32>
    %56 = arith.mulf %30, %55 : vector<8x256xf32>
    %cst_33 = arith.constant dense<0.000000e+00> : vector<256xf32>
    %57 = vector.multi_reduction <add>, %56, %cst_33 [0] : vector<8x256xf32> to vector<256xf32>
    %58 = vector.shape_cast %57 : vector<256xf32> to vector<1x256xf32>
    %cst_34 = arith.constant 8.000000e+00 : f32
    %59 = vector.broadcast %cst_34 : f32 to vector<1x256xf32>
    %60 = arith.divf %58, %59 : vector<1x256xf32>
    %cst_35 = arith.constant dense<0xFF800000> : vector<256xf32>
    %61 = vector.multi_reduction <maximumf>, %56, %cst_35 [0] : vector<8x256xf32> to vector<256xf32>
    %62 = vector.shape_cast %61 : vector<256xf32> to vector<1x256xf32>
    %c0_36 = arith.constant 0 : index
    %c0_37 = arith.constant 0 : index
    %c0_38 = arith.constant 0 : index
    %63 = vector.load %arg6[%c0_36, %c0_37, %c0_38] : memref<2x256x256xf32, #tpu.memory_space<vmem>>, vector<1x256x256xf32>
    %64 = vector.shape_cast %63 : vector<1x256x256xf32> to vector<256x256xf32>
    %cst_39 = arith.constant dense<0.000000e+00> : vector<1x256xf32>
    %65 = tpu.matmul %60, %64, %cst_39 {dimension_numbers = #tpu.dot_dimension_numbers<[1], [0], [0], [1], [0, 0, 1, 1], [], []>, precision = #tpu.contract_precision<fp32>} : vector<1x256xf32>, vector<256x256xf32>, vector<1x256xf32> -> vector<1x256xf32>
    %c1 = arith.constant 1 : index
    %c0_40 = arith.constant 0 : index
    %c0_41 = arith.constant 0 : index
    %66 = vector.load %arg6[%c1, %c0_40, %c0_41] : memref<2x256x256xf32, #tpu.memory_space<vmem>>, vector<1x256x256xf32>
    %67 = vector.shape_cast %66 : vector<1x256x256xf32> to vector<256x256xf32>
    %cst_42 = arith.constant dense<0.000000e+00> : vector<1x256xf32>
    %68 = tpu.matmul %62, %67, %cst_42 {dimension_numbers = #tpu.dot_dimension_numbers<[1], [0], [0], [1], [0, 0, 1, 1], [], []>, precision = #tpu.contract_precision<fp32>} : vector<1x256xf32>, vector<256x256xf32>, vector<1x256xf32> -> vector<1x256xf32>
    %69 = arith.addf %65, %68 : vector<1x256xf32>
    %c0_43 = arith.constant 0 : index
    %70 = memref.load %arg7[%c0_43] : memref<1xf32, #tpu.memory_space<smem>>
    %71 = vector.broadcast %70 : f32 to vector<1x256xf32>
    %72 = arith.addf %69, %71 : vector<1x256xf32>
    %73 = arith.negf %72 : vector<1x256xf32>
    %74 = math.exp %73 : vector<1x256xf32>
    %cst_44 = arith.constant 1.000000e+00 : f32
    %75 = vector.broadcast %cst_44 : f32 to vector<1x256xf32>
    %76 = arith.addf %75, %74 : vector<1x256xf32>
    %77 = arith.divf %75, %76 : vector<1x256xf32>
    %78 = vector.broadcast %77 : vector<1x256xf32> to vector<8x256xf32>
    %79 = arith.mulf %56, %78 : vector<8x256xf32>
    %cst_45 = arith.constant 0.000000e+00 : f32
    %80 = vector.broadcast %cst_45 : f32 to vector<8x256xf32>
    %81 = arith.cmpf ogt, %79, %80 : vector<8x256xf32>
    %cst_46 = arith.constant 1.000000e-01 : f32
    %82 = vector.broadcast %cst_46 : f32 to vector<8x256xf32>
    %83 = arith.mulf %82, %79 : vector<8x256xf32>
    %84 = arith.select %81, %79, %83 : vector<8x256xi1>, vector<8x256xf32>
    %85 = vector.shape_cast %84 : vector<8x256xf32> to vector<1x8x256xf32>
    %c0_47 = arith.constant 0 : index
    %c0_48 = arith.constant 0 : index
    %c0_49 = arith.constant 0 : index
    %86 = vector.load %arg8[%c0_47, %c0_48, %c0_49] : memref<1x8x256xf32, #tpu.memory_space<vmem>>, vector<1x8x256xf32>
    tpu.vector_store %arg8[%c0_47, %c0_48, %c0_49], %85 {strides = array<i32>} : memref<1x8x256xf32, #tpu.memory_space<vmem>>, vector<1x8x256xf32>,
    return
  }
  func.func @transform_0(%arg0: i32) -> (i32, i32, i32) {
    %c0_i32 = arith.constant 0 : i32
    %c0_i32_0 = arith.constant 0 : i32
    %c0_i32_1 = arith.constant 0 : i32
    return %arg0, %c0_i32, %c0_i32_0 : i32, i32, i32
  }
  func.func @transform_1(%arg0: i32) -> (i32, i32) {
    %c0_i32 = arith.constant 0 : i32
    %c0_i32_0 = arith.constant 0 : i32
    %c0_i32_1 = arith.constant 0 : i32
    return %c0_i32, %c0_i32_0 : i32, i32
  }
  func.func @transform_2(%arg0: i32) -> (i32, i32) {
    %c0_i32 = arith.constant 0 : i32
    %c0_i32_0 = arith.constant 0 : i32
    %c0_i32_1 = arith.constant 0 : i32
    return %c0_i32, %c0_i32_0 : i32, i32
  }
  func.func @transform_3(%arg0: i32) -> (i32, i32) {
    %c0_i32 = arith.constant 0 : i32
    %c0_i32_0 = arith.constant 0 : i32
    %c0_i32_1 = arith.constant 0 : i32
    return %c0_i32, %c0_i32_0 : i32, i32
  }
  func.func @transform_4(%arg0: i32) -> (i32, i32) {
    %c0_i32 = arith.constant 0 : i32
    %c0_i32_0 = arith.constant 0 : i32
    %c0_i32_1 = arith.constant 0 : i32
    return %c0_i32, %c0_i32_0 : i32, i32
  }
  func.func @transform_5(%arg0: i32) -> (i32, i32, i32) {
    %c0_i32 = arith.constant 0 : i32
    %c0_i32_0 = arith.constant 0 : i32
    %c0_i32_1 = arith.constant 0 : i32
    %c0_i32_2 = arith.constant 0 : i32
    return %c0_i32, %c0_i32_0, %c0_i32_1 : i32, i32, i32
  }
  func.func @transform_6(%arg0: i32) -> i32 {
    %c0_i32 = arith.constant 0 : i32
    %c0_i32_0 = arith.constant 0 : i32
    return %c0_i32 : i32
  }
  func.func @transform_7(%arg0: i32) -> (i32, i32, i32) {
    %c0_i32 = arith.constant 0 : i32
    %c0_i32_0 = arith.constant 0 : i32
    %c0_i32_1 = arith.constant 0 : i32
    return %arg0, %c0_i32, %c0_i32_0 : i32, i32, i32
  }
}

</mosaic_0001>

<llo_original>
// kernel: _lambda_.1
$region0: #{_lambda_.1}
  #allocation0 [shape = 'u32[]', space=smem, size = 0x4, offset = 0x4, fixed_abs, tag = 'smem constant byte address 0x4 - core index']
  #allocation1 [shape = 'u32[144,128]{1,0:T(1,128)}', space=vmem, size = 0x12000, scoped, tag = 'internal scratch']
  #allocation2 [shape = 'f32[1]{0:T(128)S(6)}', space=smem, size = 0x200, scoped, tag = 'scoped memory for _lambda_.1']
  %s0 = inlined_call_operand.vmem [shape: f32[2,36,256], index: 0, kind: input, shape index: {}]
  %s1 = inlined_call_operand.vmem [shape: f32[8,36], index: 1, kind: input, shape index: {}]
  %s2 = inlined_call_operand.vmem [shape: f32[8,8], index: 2, kind: input, shape index: {}]
  %s3 = inlined_call_operand.vmem [shape: f32[4,8], index: 3, kind: input, shape index: {}]
  %s4 = inlined_call_operand.vmem [shape: f32[8,4], index: 4, kind: input, shape index: {}]
  %s5 = inlined_call_operand.vmem [shape: f32[2,256,256], index: 5, kind: input, shape index: {}]
  %s6 = inlined_call_operand.<no memory space> [shape: f32[1], index: 6, kind: input, shape index: {}]
  %s7 = inlined_call_operand.vmem [shape: f32[2,8,256], index: 7, kind: output, shape index: {}]
  %s8 = sld [smem:[#allocation0]]
  $region61: #{_lambda_.1} parent=0
    _
  %s10 = ssub.s32 1, %s8
  %s11 = scalar_select 0, %s10, %s8
  %12 = sst [smem:[#allocation2]] %s6
  loop: start=0, step=1, limit=4
  $region2: #{_lambda_.1} parent=0 // loop_pre_header
    _
  $region3: #{_lambda_.1} parent=0 // loop_header
    %s14 = sphi 0, %s18
    %p15 = scmp.ge.s32.totalorder %s14, 4
    %s24 = sphi 0, %s26
    %s27 = sphi 0, %s24
    %s28 = sphi 0, %s27
    %s44 = sphi 0, %s28
    %s48 = sphi 0, %s48
    %s50 = sphi 0, %s48
    %s51 = sphi 0, %s50
    %s65 = sphi 0, %s51
    %s69 = sphi 0, %s69
    %s71 = sphi 0, %s69
    %s72 = sphi 0, %s71
    %s86 = sphi 0, %s72
    %s90 = sphi 0, %s90
    %s92 = sphi 0, %s90
    %s93 = sphi 0, %s92
    %s107 = sphi 0, %s93
    %s111 = sphi 0, %s111
    %s113 = sphi 0, %s111
    %s114 = sphi 0, %s113
    %s128 = sphi 0, %s114
    %s132 = sphi 0, %s132
    %s134 = sphi 0, %s132
    %s135 = sphi 0, %s134
    %s149 = sphi 0, %s135
    %s153 = sphi 0, %s153
    %s155 = sphi 0, %s153
    %s156 = sphi 0, %s155
    %s170 = sphi 0, %s156
    %s176 = sphi 0, %s178
    %s179 = sphi 0, %s176
    %s180 = sphi 0, %s179
    %s196 = sphi 0, %s180
  $region4: #{_lambda_.1} parent=0 // loop_header_branch
    %17 = sbr.rel (%p15) target = $region8
  $region5: #{_lambda_.1} parent=0 // loop_body
    %s19 = ssub.s32 %s14, 1
    %s20 = ssub.s32 %s14, 2
    %s21 = sadd.s32 %s14, 1
    %s22 = ssub.s32 %s14, %s21
    %p23 = scmp.eq.s32.totalorder %s22, 0
    %s25 = sadd.s32 %s24, 1
    %s26 = scalar_select %p23, %s24, %s25
    %p29 = pneg %p23
    %p30 = scmp.eq.s32.totalorder %s14, 1
    %p31 = por %p29, %p30
    %p32 = scmp.ne.s32.totalorder %s24, %s27
    %p33 = scmp.eq.s32.totalorder %s14, 0
    %p34 = por %p32, %p33
    %p35 = scmp.ne.s32.totalorder %s24, %s27
    %p36 = scmp.eq.s32.totalorder %s19, 1
    %p37 = por %p35, %p36
    %p38 = scmp.ne.s32.totalorder %s27, %s28
    %p39 = scmp.eq.s32.totalorder %s19, 0
    %p40 = por %p38, %p39
    %p41 = scmp.ne.s32.totalorder %s27, %s28
    %p42 = scmp.eq.s32.totalorder %s20, 1
    %p43 = por %p41, %p42
    %p45 = scmp.ne.s32.totalorder %s28, %s44
    %p46 = scmp.eq.s32.totalorder %s20, 0
    %p47 = por %p45, %p46
    %s49 = sadd.s32 %s48, 1
    %p52 = scmp.eq.s32.totalorder %s14, 1
    %p53 = scmp.ne.s32.totalorder %s48, %s50
    %p54 = scmp.eq.s32.totalorder %s14, 0
    %p55 = por %p53, %p54
    %p56 = scmp.ne.s32.totalorder %s48, %s50
    %p57 = scmp.eq.s32.totalorder %s19, 1
    %p58 = por %p56, %p57
    %p59 = scmp.ne.s32.totalorder %s50, %s51
    %p60 = scmp.eq.s32.totalorder %s19, 0
    %p61 = por %p59, %p60
    %p62 = scmp.ne.s32.totalorder %s50, %s51
    %p63 = scmp.eq.s32.totalorder %s20, 1
    %p64 = por %p62, %p63
    %p66 = scmp.ne.s32.totalorder %s51, %s65
    %p67 = scmp.eq.s32.totalorder %s20, 0
    %p68 = por %p66, %p67
    %s70 = sadd.s32 %s69, 1
    %p73 = scmp.eq.s32.totalorder %s14, 1
    %p74 = scmp.ne.s32.totalorder %s69, %s71
    %p75 = scmp.eq.s32.totalorder %s14, 0
    %p76 = por %p74, %p75
    %p77 = scmp.ne.s32.totalorder %s69, %s71
    %p78 = scmp.eq.s32.totalorder %s19, 1
    %p79 = por %p77, %p78
    %p80 = scmp.ne.s32.totalorder %s71, %s72
    %p81 = scmp.eq.s32.totalorder %s19, 0
    %p82 = por %p80, %p81
    %p83 = scmp.ne.s32.totalorder %s71, %s72
    %p84 = scmp.eq.s32.totalorder %s20, 1
    %p85 = por %p83, %p84
    %p87 = scmp.ne.s32.totalorder %s72, %s86
    %p88 = scmp.eq.s32.totalorder %s20, 0
    %p89 = por %p87, %p88
    %s91 = sadd.s32 %s90, 1
    %p94 = scmp.eq.s32.totalorder %s14, 1
    %p95 = scmp.ne.s32.totalorder %s90, %s92
    %p96 = scmp.eq.s32.totalorder %s14, 0
    %p97 = por %p95, %p96
    %p98 = scmp.ne.s32.totalorder %s90, %s92
    %p99 = scmp.eq.s32.totalorder %s19, 1
    %p100 = por %p98, %p99
    %p101 = scmp.ne.s32.totalorder %s92, %s93
    %p102 = scmp.eq.s32.totalorder %s19, 0
    %p103 = por %p101, %p102
    %p104 = scmp.ne.s32.totalorder %s92, %s93
    %p105 = scmp.eq.s32.totalorder %s20, 1
    %p106 = por %p104, %p105
    %p108 = scmp.ne.s32.totalorder %s93, %s107
    %p109 = scmp.eq.s32.totalorder %s20, 0
    %p110 = por %p108, %p109
    %s112 = sadd.s32 %s111, 1
    %p115 = scmp.eq.s32.totalorder %s14, 1
    %p116 = scmp.ne.s32.totalorder %s111, %s113
    %p117 = scmp.eq.s32.totalorder %s14, 0
    %p118 = por %p116, %p117
    %p119 = scmp.ne.s32.totalorder %s111, %s113
    %p120 = scmp.eq.s32.totalorder %s19, 1
    %p121 = por %p119, %p120
    %p122 = scmp.ne.s32.totalorder %s113, %s114
    %p123 = scmp.eq.s32.totalorder %s19, 0
    %p124 = por %p122, %p123
    %p125 = scmp.ne.s32.totalorder %s113, %s114
    %p126 = scmp.eq.s32.totalorder %s20, 1
    %p127 = por %p125, %p126
    %p129 = scmp.ne.s32.totalorder %s114, %s128
    %p130 = scmp.eq.s32.totalorder %s20, 0
    %p131 = por %p129, %p130
    %s133 = sadd.s32 %s132, 1
    %p136 = scmp.eq.s32.totalorder %s14, 1
    %p137 = scmp.ne.s32.totalorder %s132, %s134
    %p138 = scmp.eq.s32.totalorder %s14, 0
    %p139 = por %p137, %p138
    %p140 = scmp.ne.s32.totalorder %s132, %s134
    %p141 = scmp.eq.s32.totalorder %s19, 1
    %p142 = por %p140, %p141
    %p143 = scmp.ne.s32.totalorder %s134, %s135
    %p144 = scmp.eq.s32.totalorder %s19, 0
    %p145 = por %p143, %p144
    %p146 = scmp.ne.s32.totalorder %s134, %s135
    %p147 = scmp.eq.s32.totalorder %s20, 1
    %p148 = por %p146, %p147
    %p150 = scmp.ne.s32.totalorder %s135, %s149
    %p151 = scmp.eq.s32.totalorder %s20, 0
    %p152 = por %p150, %p151
    %s154 = sadd.s32 %s153, 1
    %p157 = scmp.eq.s32.totalorder %s14, 1
    %p158 = scmp.ne.s32.totalorder %s153, %s155
    %p159 = scmp.eq.s32.totalorder %s14, 0
    %p160 = por %p158, %p159
    %p161 = scmp.ne.s32.totalorder %s153, %s155
    %p162 = scmp.eq.s32.totalorder %s19, 1
    %p163 = por %p161, %p162
    %p164 = scmp.ne.s32.totalorder %s155, %s156
    %p165 = scmp.eq.s32.totalorder %s19, 0
    %p166 = por %p164, %p165
    %p167 = scmp.ne.s32.totalorder %s155, %s156
    %p168 = scmp.eq.s32.totalorder %s20, 1
    %p169 = por %p167, %p168
    %p171 = scmp.ne.s32.totalorder %s156, %s170
    %p172 = scmp.eq.s32.totalorder %s20, 0
    %p173 = por %p171, %p172
    %s174 = ssub.s32 %s14, %s21
    %p175 = scmp.eq.s32.totalorder %s174, 0
    %s177 = sadd.s32 %s176, 1
    %s178 = scalar_select %p175, %s176, %s177
    %p181 = pneg %p175
    %p182 = scmp.eq.s32.totalorder %s14, 1
    %p183 = por %p181, %p182
    %p184 = scmp.ne.s32.totalorder %s176, %s179
    %p185 = scmp.eq.s32.totalorder %s14, 0
    %p186 = por %p184, %p185
    %p187 = scmp.ne.s32.totalorder %s176, %s179
    %p188 = scmp.eq.s32.totalorder %s19, 1
    %p189 = por %p187, %p188
    %p190 = scmp.ne.s32.totalorder %s179, %s180
    %p191 = scmp.eq.s32.totalorder %s19, 0
    %p192 = por %p190, %p191
    %p193 = scmp.ne.s32.totalorder %s179, %s180
    %p194 = scmp.eq.s32.totalorder %s20, 1
    %p195 = por %p193, %p194
    %p197 = scmp.ne.s32.totalorder %s180, %s196
    %p198 = scmp.eq.s32.totalorder %s20, 0
    %p199 = por %p197, %p198
    %p200 = scmp.le.s32.totalorder 1, %s14
    %p201 = scmp.lt.s32.totalorder %s14, 3
    %p202 = pnand %p200, %p201
    %p203 = pneg %p202
    // Predicated region
    $region9: #{_lambda_.1} parent=5 // pred_check
      _
    $region10: #{_lambda_.1} parent=5 // pred_check_branch
      %205 = sbr.rel (%p202) target = $region12
    $region11: #{_lambda_.1} parent=5 // pred_region
      %s206 = ssub.s32 %s14, 1
      // Predicated region
      $region13: #{_lambda_.1} parent=11 // pred_check
        %p207 = pneg %p61
      $region14: #{_lambda_.1} parent=11 // pred_check_branch
        %209 = sbr.rel (%p207) target = $region16
      $region15: #{_lambda_.1} parent=11 // pred_region
        _
      $region16: #{_lambda_.1} parent=11 // pred_fallthru
        _
      // Predicated region
      $region17: #{_lambda_.1} parent=11 // pred_check
        %p210 = pneg %p82
      $region18: #{_lambda_.1} parent=11 // pred_check_branch
        %212 = sbr.rel (%p210) target = $region20
      $region19: #{_lambda_.1} parent=11 // pred_region
        _
      $region20: #{_lambda_.1} parent=11 // pred_fallthru
        _
      // Predicated region
      $region21: #{_lambda_.1} parent=11 // pred_check
        %p213 = pneg %p103
      $region22: #{_lambda_.1} parent=11 // pred_check_branch
        %215 = sbr.rel (%p213) target = $region24
      $region23: #{_lambda_.1} parent=11 // pred_region
        _
      $region24: #{_lambda_.1} parent=11 // pred_fallthru
        _
      // Predicated region
      $region25: #{_lambda_.1} parent=11 // pred_check
        %p216 = pneg %p124
      $region26: #{_lambda_.1} parent=11 // pred_check_branch
        %218 = sbr.rel (%p216) target = $region28
      $region27: #{_lambda_.1} parent=11 // pred_region
        _
      $region28: #{_lambda_.1} parent=11 // pred_fallthru
        _
      // Predicated region
      $region29: #{_lambda_.1} parent=11 // pred_check
        %p219 = pneg %p145
      $region30: #{_lambda_.1} parent=11 // pred_check_branch
        %221 = sbr.rel (%p219) target = $region32
      $region31: #{_lambda_.1} parent=11 // pred_region
        _
      $region32: #{_lambda_.1} parent=11 // pred_fallthru
        _
      // Predicated region
      $region33: #{_lambda_.1} parent=11 // pred_check
        %p222 = pneg %p166
      $region34: #{_lambda_.1} parent=11 // pred_check_branch
        %224 = sbr.rel (%p222) target = $region36
      $region35: #{_lambda_.1} parent=11 // pred_region
        _
      $region36: #{_lambda_.1} parent=11 // pred_fallthru
        _
    $region12: #{_lambda_.1} parent=5 // pred_fallthru
      _
    %p225 = scmp.lt.s32.totalorder %s14, 2
    // Predicated region
    $region37: #{_lambda_.1} parent=5 // pred_check
      %p226 = pneg %p225
    $region38: #{_lambda_.1} parent=5 // pred_check_branch
      %228 = sbr.rel (%p226) target = $region40
    $region39: #{_lambda_.1} parent=5 // pred_region
      // Predicated region
      $region41: #{_lambda_.1} parent=39 // pred_check
        %p229 = pneg %p34
      $region42: #{_lambda_.1} parent=39 // pred_check_branch
        %231 = sbr.rel (%p229) target = $region44
      $region43: #{_lambda_.1} parent=39 // pred_region
        %p232 = scmp.lt.s32.totalorder %s14, 1
        %s233 = scalar_select %p232, %s14, 1
        %s234 = smul.addr %s233, 10
        %s235 = smul.addr %s234, 8
        %s236 = scalar_lea.vmem %s0, %s235
      $region44: #{_lambda_.1} parent=39 // pred_fallthru
        _
    $region40: #{_lambda_.1} parent=5 // pred_fallthru
      _
    %p237 = scmp.le.s32.totalorder 1, %s14
    %p238 = scmp.lt.s32.totalorder %s14, 3
    %p239 = pnand %p237, %p238
    %p240 = pneg %p239
    // Predicated region
    $region45: #{_lambda_.1} parent=5 // pred_check
      _
    $region46: #{_lambda_.1} parent=5 // pred_check_branch
      %242 = sbr.rel (%p239) target = $region48
    $region47: #{_lambda_.1} parent=5 // pred_region
      %s243 = ssub.s32 %s14, 1
      %p244 = scmp.lt.s32.totalorder %s19, 1
      %s245 = scalar_select %p244, %s19, 1
      %s246 = smul.addr %s245, 10
      %s247 = smul.addr %s246, 8
      %s248 = scalar_lea.vmem %s0, %s247
      %p249 = pneg %p40
      %p250 = pneg %p37
      %p251 = pneg %p61
      %p252 = pneg %p58
      %p253 = pneg %p82
      %p254 = pneg %p79
      %p255 = pneg %p103
      %p256 = pneg %p100
      %p257 = pneg %p124
      %p258 = pneg %p121
      %p259 = pneg %p145
      %p260 = pneg %p142
      %p261 = pneg %p166
      %p262 = pneg %p163
      %p263 = pneg %p192
      %p264 = pneg %p189
      %p265 = scmp.lt.s32.totalorder %s19, 1
      %s266 = scalar_select %p265, %s19, 1
      %s267 = smul.addr %s266, 2
      %s268 = smul.addr %s267, 8
      %s269 = scalar_lea.vmem %s7, %s268
      %p270 = scmp.lt.s32.totalorder %s19, 1
      %s271 = scalar_select %p270, %s19, 1
      %s272 = smul.addr %s271, 10
      %s273 = smul.addr %s272, 8
      %s274 = scalar_lea.vmem %s0, %s273
      %p275 = scmp.lt.s32.totalorder %s19, 1
      %s276 = scalar_select %p275, %s19, 1
      %s277 = smul.addr %s276, 2
      %s278 = smul.addr %s277, 8
      %s279 = scalar_lea.vmem %s7, %s278
      %v280 = vld [vmem:[%s274] sm:$0xff]
      %v281 = vld [vmem:[%s274 + $0x8] sm:$0xff]
      %v282 = vld [vmem:[%s274 + $0x10] sm:$0xff]
      %v283 = vld [vmem:[%s274 + $0x18] sm:$0xff]
      %v284 = vld [vmem:[%s274 + $0x20] sm:$0xff]
      %v285 = vld [vmem:[%s274 + $0x28] sm:$0xff]
      %v286 = vld [vmem:[%s274 + $0x30] sm:$0xff]
      %v287 = vld [vmem:[%s274 + $0x38] sm:$0xff]
      %v288 = vld [vmem:[%s274 + $0x40] sm:$0xf]
      %v289 = vld [vmem:[%s274 + $0x48] sm:$0xf]
      %v290 = vld [vmem:[%s1] sm:$0xff]
      %vm291 = vcmask 293888
      %v293 = vsel %vm291, %v290, 0
      %vm295 = vcmask 1043456
      %v297 = vsel %vm295, %v288, 0
      %v300 = vsel %vm295, %v289, 0
      %302 = vmatprep.subr.mxu0 0.0
      %303 = vmatpush1.msra.mxu0 0.0
      %304 = vmatprep.subr.mxu0 0.0
      %305 = vmatpush1.msra.mxu0 0.0
      %306 = vmatprep.subr.mxu0 0.0
      %307 = vmatpush1.msra.mxu0 0.0
      %308 = vmatprep.subr.mxu0 0.0
      %309 = vmatpush1.msra.mxu0 0.0
      %310 = vmatprep.subr.mxu0 0.0
      %311 = vmatpush1.msra.mxu0 0.0
      %312 = vmatprep.subr.mxu0 0.0
      %313 = vmatpush1.msra.mxu0 0.0
      %314 = vmatprep.subr.mxu0 0.0
      %315 = vmatpush1.msra.mxu0 0.0
      %316 = vmatprep.subr.mxu0 0.0
      %317 = vmatpush1.msra.mxu0 0.0
      %318 = vmatprep.subr.mxu0 0.0
      %319 = vmatpush1.msra.mxu0 0.0
      %320 = vmatprep.subr.mxu0 0.0
      %321 = vmatpush1.msra.mxu0 0.0
      %322 = vmatprep.subr.mxu0 0.0
      %323 = vmatpush1.msra.mxu0 0.0
      %v324 = vand.u32 %v300, 4294901760
      %325 = vmatprep.subr.mxu0 %v324
      %v326 = vand.u32 %v297, 4294901760
      %327 = vmatpush1.msra.mxu0 %v326
      %v328 = vand.u32 %v287, 4294901760
      %329 = vmatprep.subr.mxu0 %v328
      %v330 = vand.u32 %v286, 4294901760
      %331 = vmatpush1.msra.mxu0 %v330
      %v332 = vand.u32 %v285, 4294901760
      %333 = vmatprep.subr.mxu0 %v332
      %v334 = vand.u32 %v284, 4294901760
      %335 = vmatpush1.msra.mxu0 %v334
      %v336 = vand.u32 %v283, 4294901760
      %337 = vmatprep.subr.mxu0 %v336
      %v338 = vand.u32 %v282, 4294901760
      %339 = vmatpush1.msra.mxu0 %v338
      %v340 = vand.u32 %v281, 4294901760
      %341 = vmatprep.subr.mxu0 %v340
      %v342 = vand.u32 %v280, 4294901760
      %343 = vmatpush1.msra.mxu0 %v342
      %344 = vmatprep.subr.mxu0 0.0
      %345 = vmatpush2.msra.mxu0 0.0
      %346 = vmatprep.subr.mxu0 0.0
      %347 = vmatpush2.msra.mxu0 0.0
      %348 = vmatprep.subr.mxu0 0.0
      %349 = vmatpush2.msra.mxu0 0.0
      %350 = vmatprep.subr.mxu0 0.0
      %351 = vmatpush2.msra.mxu0 0.0
      %352 = vmatprep.subr.mxu0 0.0
      %353 = vmatpush2.msra.mxu0 0.0
      %354 = vmatprep.subr.mxu0 0.0
      %355 = vmatpush2.msra.mxu0 0.0
      %356 = vmatprep.subr.mxu0 0.0
      %357 = vmatpush2.msra.mxu0 0.0
      %358 = vmatprep.subr.mxu0 0.0
      %359 = vmatpush2.msra.mxu0 0.0
      %360 = vmatprep.subr.mxu0 0.0
      %361 = vmatpush2.msra.mxu0 0.0
      %362 = vmatprep.subr.mxu0 0.0
      %363 = vmatpush2.msra.mxu0 0.0
      %364 = vmatprep.subr.mxu0 0.0
      %365 = vmatpush2.msra.mxu0 0.0
      %366 = vmatprep.subr.mxu0 0.0
      %367 = vmatpush2.msra.mxu0 0.0
      %368 = vmatprep.subr.mxu0 0.0
      %369 = vmatpush2.msra.mxu0 0.0
      %370 = vmatprep.subr.mxu0 0.0
      %371 = vmatpush2.msra.mxu0 0.0
      %372 = vmatprep.subr.mxu0 0.0
      %373 = vmatpush2.msra.mxu0 0.0
      %374 = vmatprep.subr.mxu0 0.0
      %375 = vmatpush2.msra.mxu0 0.0
      %376 = vmatprep.mubr.f32.mxu0 0.0
      %v377 = vand.u32 %v293, 4294901760
      %v378 = vsub.f32 %v293, %v377
      %v379 = vand.u32 %v378, 4294901760
      %v380 = vsub.f32 %v378, %v379
      %v381 = vand.u32 %v380, 4294901760
      %382 = vmatmul.mubr.f32.gmra.mxu0 %v381
      %v383 = vpop.f32.mrf.mxu0
      %v384 = vadd.f32 0.0, %v383
      %v385 = vpop.f32.mrf.mxu0
      %v386 = vadd.f32 0.0, %v385
      %387 = vdwg.mxu0
      %388 = vmatprep.subr.mxu0 0.0
      %389 = vmatpush1.msra.mxu0 0.0
      %390 = vmatprep.subr.mxu0 0.0
      %391 = vmatpush1.msra.mxu0 0.0
      %392 = vmatprep.subr.mxu0 0.0
      %393 = vmatpush1.msra.mxu0 0.0
      %394 = vmatprep.subr.mxu0 0.0
      %395 = vmatpush1.msra.mxu0 0.0
      %396 = vmatprep.subr.mxu0 0.0
      %397 = vmatpush1.msra.mxu0 0.0
      %398 = vmatprep.subr.mxu0 0.0
      %399 = vmatpush1.msra.mxu0 0.0
      %400 = vmatprep.subr.mxu0 0.0
      %401 = vmatpush1.msra.mxu0 0.0
      %402 = vmatprep.subr.mxu0 0.0
      %403 = vmatpush1.msra.mxu0 0.0
      %404 = vmatprep.subr.mxu0 0.0
      %405 = vmatpush1.msra.mxu0 0.0
      %406 = vmatprep.subr.mxu0 0.0
      %407 = vmatpush1.msra.mxu0 0.0
      %408 = vmatprep.subr.mxu0 0.0
      %409 = vmatpush1.msra.mxu0 0.0
      %v410 = vand.u32 %v300, 4294901760
      %v411 = vsub.f32 %v300, %v410
      %v412 = vand.u32 %v411, 4294901760
      %v413 = vsub.f32 %v411, %v412
      %v414 = vand.u32 %v413, 4294901760
      %415 = vmatprep.subr.mxu0 %v414
      %v416 = vand.u32 %v297, 4294901760
      %v417 = vsub.f32 %v297, %v416
      %v418 = vand.u32 %v417, 4294901760
      %v419 = vsub.f32 %v417, %v418
      %v420 = vand.u32 %v419, 4294901760
      %421 = vmatpush1.msra.mxu0 %v420
      %v422 = vand.u32 %v287, 4294901760
      %v423 = vsub.f32 %v287, %v422
      %v424 = vand.u32 %v423, 4294901760
      %v425 = vsub.f32 %v423, %v424
      %v426 = vand.u32 %v425, 4294901760
      %427 = vmatprep.subr.mxu0 %v426
      %v428 = vand.u32 %v286, 4294901760
      %v429 = vsub.f32 %v286, %v428
      %v430 = vand.u32 %v429, 4294901760
      %v431 = vsub.f32 %v429, %v430
      %v432 = vand.u32 %v431, 4294901760
      %433 = vmatpush1.msra.mxu0 %v432
      %v434 = vand.u32 %v285, 4294901760
      %v435 = vsub.f32 %v285, %v434
      %v436 = vand.u32 %v435, 4294901760
      %v437 = vsub.f32 %v435, %v436
      %v438 = vand.u32 %v437, 4294901760
      %439 = vmatprep.subr.mxu0 %v438
      %v440 = vand.u32 %v284, 4294901760
      %v441 = vsub.f32 %v284, %v440
      %v442 = vand.u32 %v441, 4294901760
      %v443 = vsub.f32 %v441, %v442
      %v444 = vand.u32 %v443, 4294901760
      %445 = vmatpush1.msra.mxu0 %v444
      %v446 = vand.u32 %v283, 4294901760
      %v447 = vsub.f32 %v283, %v446
      %v448 = vand.u32 %v447, 4294901760
      %v449 = vsub.f32 %v447, %v448
      %v450 = vand.u32 %v449, 4294901760
      %451 = vmatprep.subr.mxu0 %v450
      %v452 = vand.u32 %v282, 4294901760
      %v453 = vsub.f32 %v282, %v452
      %v454 = vand.u32 %v453, 4294901760
      %v455 = vsub.f32 %v453, %v454
      %v456 = vand.u32 %v455, 4294901760
      %457 = vmatpush1.msra.mxu0 %v456
      %v458 = vand.u32 %v281, 4294901760
      %v459 = vsub.f32 %v281, %v458
      %v460 = vand.u32 %v459, 4294901760
      %v461 = vsub.f32 %v459, %v460
      %v462 = vand.u32 %v461, 4294901760
      %463 = vmatprep.subr.mxu0 %v462
      %v464 = vand.u32 %v280, 4294901760
      %v465 = vsub.f32 %v280, %v464
      %v466 = vand.u32 %v465, 4294901760
      %v467 = vsub.f32 %v465, %v466
      %v468 = vand.u32 %v467, 4294901760
      %469 = vmatpush1.msra.mxu0 %v468
      %470 = vmatprep.subr.mxu0 0.0
      %471 = vmatpush2.msra.mxu0 0.0
      %472 = vmatprep.subr.mxu0 0.0
      %473 = vmatpush2.msra.mxu0 0.0
      %474 = vmatprep.subr.mxu0 0.0
      %475 = vmatpush2.msra.mxu0 0.0
      %476 = vmatprep.subr.mxu0 0.0
      %477 = vmatpush2.msra.mxu0 0.0
      %478 = vmatprep.subr.mxu0 0.0
      %479 = vmatpush2.msra.mxu0 0.0
      %480 = vmatprep.subr.mxu0 0.0
      %481 = vmatpush2.msra.mxu0 0.0
      %482 = vmatprep.subr.mxu0 0.0
      %483 = vmatpush2.msra.mxu0 0.0
      %484 = vmatprep.subr.mxu0 0.0
      %485 = vmatpush2.msra.mxu0 0.0
      %486 = vmatprep.subr.mxu0 0.0
      %487 = vmatpush2.msra.mxu0 0.0
      %488 = vmatprep.subr.mxu0 0.0
      %489 = vmatpush2.msra.mxu0 0.0
      %490 = vmatprep.subr.mxu0 0.0
      %491 = vmatpush2.msra.mxu0 0.0
      %492 = vmatprep.subr.mxu0 0.0
      %493 = vmatpush2.msra.mxu0 0.0
      %494 = vmatprep.subr.mxu0 0.0
      %495 = vmatpush2.msra.mxu0 0.0
      %496 = vmatprep.subr.mxu0 0.0
      %497 = vmatpush2.msra.mxu0 0.0
      %498 = vmatprep.subr.mxu0 0.0
      %499 = vmatpush2.msra.mxu0 0.0
      %500 = vmatprep.subr.mxu0 0.0
      %501 = vmatpush2.msra.mxu0 0.0
      %502 = vmatprep.mubr.f32.mxu0 0.0
      %v503 = vand.u32 %v293, 4294901760
      %504 = vmatmul.mubr.f32.gmra.mxu0 %v503
      %v505 = vpop.f32.mrf.mxu0
      %v506 = vadd.f32 %v384, %v505
      %v507 = vpop.f32.mrf.mxu0
      %v508 = vadd.f32 %v386, %v507
      %509 = vdwg.mxu0
      %510 = vmatprep.subr.mxu0 0.0
      %511 = vmatpush1.msra.mxu0 0.0
      %512 = vmatprep.subr.mxu0 0.0
      %513 = vmatpush1.msra.mxu0 0.0
      %514 = vmatprep.subr.mxu0 0.0
      %515 = vmatpush1.msra.mxu0 0.0
      %516 = vmatprep.subr.mxu0 0.0
      %517 = vmatpush1.msra.mxu0 0.0
      %518 = vmatprep.subr.mxu0 0.0
      %519 = vmatpush1.msra.mxu0 0.0
      %520 = vmatprep.subr.mxu0 0.0
      %521 = vmatpush1.msra.mxu0 0.0
      %522 = vmatprep.subr.mxu0 0.0
      %523 = vmatpush1.msra.mxu0 0.0
      %524 = vmatprep.subr.mxu0 0.0
      %525 = vmatpush1.msra.mxu0 0.0
      %526 = vmatprep.subr.mxu0 0.0
      %527 = vmatpush1.msra.mxu0 0.0
      %528 = vmatprep.subr.mxu0 0.0
      %529 = vmatpush1.msra.mxu0 0.0
      %530 = vmatprep.subr.mxu0 0.0
      %531 = vmatpush1.msra.mxu0 0.0
      %v532 = vand.u32 %v300, 4294901760
      %v533 = vsub.f32 %v300, %v532
      %534 = vmatprep.subr.mxu0 %v533
      %v535 = vand.u32 %v297, 4294901760
      %v536 = vsub.f32 %v297, %v535
      %537 = vmatpush1.msra.mxu0 %v536
      %v538 = vand.u32 %v287, 4294901760
      %v539 = vsub.f32 %v287, %v538
      %540 = vmatprep.subr.mxu0 %v539
      %v541 = vand.u32 %v286, 4294901760
      %v542 = vsub.f32 %v286, %v541
      %543 = vmatpush1.msra.mxu0 %v542
      %v544 = vand.u32 %v285, 4294901760
      %v545 = vsub.f32 %v285, %v544
      %546 = vmatprep.subr.mxu0 %v545
      %v547 = vand.u32 %v284, 4294901760
      %v548 = vsub.f32 %v284, %v547
      %549 = vmatpush1.msra.mxu0 %v548
      %v550 = vand.u32 %v283, 4294901760
      %v551 = vsub.f32 %v283, %v550
      %552 = vmatprep.subr.mxu0 %v551
      %v553 = vand.u32 %v282, 4294901760
      %v554 = vsub.f32 %v282, %v553
      %555 = vmatpush1.msra.mxu0 %v554
      %v556 = vand.u32 %v281, 4294901760
      %v557 = vsub.f32 %v281, %v556
      %558 = vmatprep.subr.mxu0 %v557
      %v559 = vand.u32 %v280, 4294901760
      %v560 = vsub.f32 %v280, %v559
      %561 = vmatpush1.msra.mxu0 %v560
      %562 = vmatprep.subr.mxu0 0.0
      %563 = vmatpush2.msra.mxu0 0.0
      %564 = vmatprep.subr.mxu0 0.0
      %565 = vmatpush2.msra.mxu0 0.0
      %566 = vmatprep.subr.mxu0 0.0
      %567 = vmatpush2.msra.mxu0 0.0
      %568 = vmatprep.subr.mxu0 0.0
      %569 = vmatpush2.msra.mxu0 0.0
      %570 = vmatprep.subr.mxu0 0.0
      %571 = vmatpush2.msra.mxu0 0.0
      %572 = vmatprep.subr.mxu0 0.0
      %573 = vmatpush2.msra.mxu0 0.0
      %574 = vmatprep.subr.mxu0 0.0
      %575 = vmatpush2.msra.mxu0 0.0
      %576 = vmatprep.subr.mxu0 0.0
      %577 = vmatpush2.msra.mxu0 0.0
      %578 = vmatprep.subr.mxu0 0.0
      %579 = vmatpush2.msra.mxu0 0.0
      %580 = vmatprep.subr.mxu0 0.0
      %581 = vmatpush2.msra.mxu0 0.0
      %582 = vmatprep.subr.mxu0 0.0
      %583 = vmatpush2.msra.mxu0 0.0
      %584 = vmatprep.subr.mxu0 0.0
      %585 = vmatpush2.msra.mxu0 0.0
      %586 = vmatprep.subr.mxu0 0.0
      %587 = vmatpush2.msra.mxu0 0.0
      %588 = vmatprep.subr.mxu0 0.0
      %589 = vmatpush2.msra.mxu0 0.0
      %590 = vmatprep.subr.mxu0 0.0
      %591 = vmatpush2.msra.mxu0 0.0
      %592 = vmatprep.subr.mxu0 0.0
      %593 = vmatpush2.msra.mxu0 0.0
      %594 = vmatprep.mubr.f32.mxu0 0.0
      %v595 = vand.u32 %v293, 4294901760
      %v596 = vsub.f32 %v293, %v595
      %597 = vmatmul.mubr.f32.gmra.mxu0 %v596
      %v598 = vpop.f32.mrf.mxu0
      %v599 = vadd.f32 %v506, %v598
      %v600 = vpop.f32.mrf.mxu0
      %v601 = vadd.f32 %v508, %v600
      %602 = vdwg.mxu0
      %603 = vmatprep.subr.mxu0 0.0
      %604 = vmatpush1.msra.mxu0 0.0
      %605 = vmatprep.subr.mxu0 0.0
      %606 = vmatpush1.msra.mxu0 0.0
      %607 = vmatprep.subr.mxu0 0.0
      %608 = vmatpush1.msra.mxu0 0.0
      %609 = vmatprep.subr.mxu0 0.0
      %610 = vmatpush1.msra.mxu0 0.0
      %611 = vmatprep.subr.mxu0 0.0
      %612 = vmatpush1.msra.mxu0 0.0
      %613 = vmatprep.subr.mxu0 0.0
      %614 = vmatpush1.msra.mxu0 0.0
      %615 = vmatprep.subr.mxu0 0.0
      %616 = vmatpush1.msra.mxu0 0.0
      %617 = vmatprep.subr.mxu0 0.0
      %618 = vmatpush1.msra.mxu0 0.0
      %619 = vmatprep.subr.mxu0 0.0
      %620 = vmatpush1.msra.mxu0 0.0
      %621 = vmatprep.subr.mxu0 0.0
      %622 = vmatpush1.msra.mxu0 0.0
      %623 = vmatprep.subr.mxu0 0.0
      %624 = vmatpush1.msra.mxu0 0.0
      %v625 = vand.u32 %v300, 4294901760
      %626 = vmatprep.subr.mxu0 %v625
      %v627 = vand.u32 %v297, 4294901760
      %628 = vmatpush1.msra.mxu0 %v627
      %v629 = vand.u32 %v287, 4294901760
      %630 = vmatprep.subr.mxu0 %v629
      %v631 = vand.u32 %v286, 4294901760
      %632 = vmatpush1.msra.mxu0 %v631
      %v633 = vand.u32 %v285, 4294901760
      %634 = vmatprep.subr.mxu0 %v633
      %v635 = vand.u32 %v284, 4294901760
      %636 = vmatpush1.msra.mxu0 %v635
      %v637 = vand.u32 %v283, 4294901760
      %638 = vmatprep.subr.mxu0 %v637
      %v639 = vand.u32 %v282, 4294901760
      %640 = vmatpush1.msra.mxu0 %v639
      %v641 = vand.u32 %v281, 4294901760
      %642 = vmatprep.subr.mxu0 %v641
      %v643 = vand.u32 %v280, 4294901760
      %644 = vmatpush1.msra.mxu0 %v643
      %645 = vmatprep.subr.mxu0 0.0
      %646 = vmatpush2.msra.mxu0 0.0
      %647 = vmatprep.subr.mxu0 0.0
      %648 = vmatpush2.msra.mxu0 0.0
      %649 = vmatprep.subr.mxu0 0.0
      %650 = vmatpush2.msra.mxu0 0.0
      %651 = vmatprep.subr.mxu0 0.0
      %652 = vmatpush2.msra.mxu0 0.0
      %653 = vmatprep.subr.mxu0 0.0
      %654 = vmatpush2.msra.mxu0 0.0
      %655 = vmatprep.subr.mxu0 0.0
      %656 = vmatpush2.msra.mxu0 0.0
      %657 = vmatprep.subr.mxu0 0.0
      %658 = vmatpush2.msra.mxu0 0.0
      %659 = vmatprep.subr.mxu0 0.0
      %660 = vmatpush2.msra.mxu0 0.0
      %661 = vmatprep.subr.mxu0 0.0
      %662 = vmatpush2.msra.mxu0 0.0
      %663 = vmatprep.subr.mxu0 0.0
      %664 = vmatpush2.msra.mxu0 0.0
      %665 = vmatprep.subr.mxu0 0.0
      %666 = vmatpush2.msra.mxu0 0.0
      %667 = vmatprep.subr.mxu0 0.0
      %668 = vmatpush2.msra.mxu0 0.0
      %669 = vmatprep.subr.mxu0 0.0
      %670 = vmatpush2.msra.mxu0 0.0
      %671 = vmatprep.subr.mxu0 0.0
      %672 = vmatpush2.msra.mxu0 0.0
      %673 = vmatprep.subr.mxu0 0.0
      %674 = vmatpush2.msra.mxu0 0.0
      %675 = vmatprep.subr.mxu0 0.0
      %676 = vmatpush2.msra.mxu0 0.0
      %677 = vmatprep.mubr.f32.mxu0 0.0
      %v678 = vand.u32 %v293, 4294901760
      %v679 = vsub.f32 %v293, %v678
      %v680 = vand.u32 %v679, 4294901760
      %681 = vmatmul.mubr.f32.gmra.mxu0 %v680
      %v682 = vpop.f32.mrf.mxu0
      %v683 = vadd.f32 %v599, %v682
      %v684 = vpop.f32.mrf.mxu0
      %v685 = vadd.f32 %v601, %v684
      %686 = vdwg.mxu0
      %687 = vmatprep.subr.mxu0 0.0
      %688 = vmatpush1.msra.mxu0 0.0
      %689 = vmatprep.subr.mxu0 0.0
      %690 = vmatpush1.msra.mxu0 0.0
      %691 = vmatprep.subr.mxu0 0.0
      %692 = vmatpush1.msra.mxu0 0.0
      %693 = vmatprep.subr.mxu0 0.0
      %694 = vmatpush1.msra.mxu0 0.0
      %695 = vmatprep.subr.mxu0 0.0
      %696 = vmatpush1.msra.mxu0 0.0
      %697 = vmatprep.subr.mxu0 0.0
      %698 = vmatpush1.msra.mxu0 0.0
      %699 = vmatprep.subr.mxu0 0.0
      %700 = vmatpush1.msra.mxu0 0.0
      %701 = vmatprep.subr.mxu0 0.0
      %702 = vmatpush1.msra.mxu0 0.0
      %703 = vmatprep.subr.mxu0 0.0
      %704 = vmatpush1.msra.mxu0 0.0
      %705 = vmatprep.subr.mxu0 0.0
      %706 = vmatpush1.msra.mxu0 0.0
      %707 = vmatprep.subr.mxu0 0.0
      %708 = vmatpush1.msra.mxu0 0.0
      %v709 = vand.u32 %v300, 4294901760
      %v710 = vsub.f32 %v300, %v709
      %v711 = vand.u32 %v710, 4294901760
      %712 = vmatprep.subr.mxu0 %v711
      %v713 = vand.u32 %v297, 4294901760
      %v714 = vsub.f32 %v297, %v713
      %v715 = vand.u32 %v714, 4294901760
      %716 = vmatpush1.msra.mxu0 %v715
      %v717 = vand.u32 %v287, 4294901760
      %v718 = vsub.f32 %v287, %v717
      %v719 = vand.u32 %v718, 4294901760
      %720 = vmatprep.subr.mxu0 %v719
      %v721 = vand.u32 %v286, 4294901760
      %v722 = vsub.f32 %v286, %v721
      %v723 = vand.u32 %v722, 4294901760
      %724 = vmatpush1.msra.mxu0 %v723
      %v725 = vand.u32 %v285, 4294901760
      %v726 = vsub.f32 %v285, %v725
      %v727 = vand.u32 %v726, 4294901760
      %728 = vmatprep.subr.mxu0 %v727
      %v729 = vand.u32 %v284, 4294901760
      %v730 = vsub.f32 %v284, %v729
      %v731 = vand.u32 %v730, 4294901760
      %732 = vmatpush1.msra.mxu0 %v731
      %v733 = vand.u32 %v283, 4294901760
      %v734 = vsub.f32 %v283, %v733
      %v735 = vand.u32 %v734, 4294901760
      %736 = vmatprep.subr.mxu0 %v735
      %v737 = vand.u32 %v282, 4294901760
      %v738 = vsub.f32 %v282, %v737
      %v739 = vand.u32 %v738, 4294901760
      %740 = vmatpush1.msra.mxu0 %v739
      %v741 = vand.u32 %v281, 4294901760
      %v742 = vsub.f32 %v281, %v741
      %v743 = vand.u32 %v742, 4294901760
      %744 = vmatprep.subr.mxu0 %v743
      %v745 = vand.u32 %v280, 4294901760
      %v746 = vsub.f32 %v280, %v745
      %v747 = vand.u32 %v746, 4294901760
      %748 = vmatpush1.msra.mxu0 %v747
      %749 = vmatprep.subr.mxu0 0.0
      %750 = vmatpush2.msra.mxu0 0.0
      %751 = vmatprep.subr.mxu0 0.0
      %752 = vmatpush2.msra.mxu0 0.0
      %753 = vmatprep.subr.mxu0 0.0
      %754 = vmatpush2.msra.mxu0 0.0
      %755 = vmatprep.subr.mxu0 0.0
      %756 = vmatpush2.msra.mxu0 0.0
      %757 = vmatprep.subr.mxu0 0.0
      %758 = vmatpush2.msra.mxu0 0.0
      %759 = vmatprep.subr.mxu0 0.0
      %760 = vmatpush2.msra.mxu0 0.0
      %761 = vmatprep.subr.mxu0 0.0
      %762 = vmatpush2.msra.mxu0 0.0
      %763 = vmatprep.subr.mxu0 0.0
      %764 = vmatpush2.msra.mxu0 0.0
      %765 = vmatprep.subr.mxu0 0.0
      %766 = vmatpush2.msra.mxu0 0.0
      %767 = vmatprep.subr.mxu0 0.0
      %768 = vmatpush2.msra.mxu0 0.0
      %769 = vmatprep.subr.mxu0 0.0
      %770 = vmatpush2.msra.mxu0 0.0
      %771 = vmatprep.subr.mxu0 0.0
      %772 = vmatpush2.msra.mxu0 0.0
      %773 = vmatprep.subr.mxu0 0.0
      %774 = vmatpush2.msra.mxu0 0.0
      %775 = vmatprep.subr.mxu0 0.0
      %776 = vmatpush2.msra.mxu0 0.0
      %777 = vmatprep.subr.mxu0 0.0
      %778 = vmatpush2.msra.mxu0 0.0
      %779 = vmatprep.subr.mxu0 0.0
      %780 = vmatpush2.msra.mxu0 0.0
      %781 = vmatprep.mubr.f32.mxu0 0.0
      %v782 = vand.u32 %v293, 4294901760
      %783 = vmatmul.mubr.f32.gmra.mxu0 %v782
      %v784 = vpop.f32.mrf.mxu0
      %v785 = vadd.f32 %v683, %v784
      %v786 = vpop.f32.mrf.mxu0
      %v787 = vadd.f32 %v685, %v786
      %788 = vdwg.mxu0
      %789 = vmatprep.subr.mxu0 0.0
      %790 = vmatpush1.msra.mxu0 0.0
      %791 = vmatprep.subr.mxu0 0.0
      %792 = vmatpush1.msra.mxu0 0.0
      %793 = vmatprep.subr.mxu0 0.0
      %794 = vmatpush1.msra.mxu0 0.0
      %795 = vmatprep.subr.mxu0 0.0
      %796 = vmatpush1.msra.mxu0 0.0
      %797 = vmatprep.subr.mxu0 0.0
      %798 = vmatpush1.msra.mxu0 0.0
      %799 = vmatprep.subr.mxu0 0.0
      %800 = vmatpush1.msra.mxu0 0.0
      %801 = vmatprep.subr.mxu0 0.0
      %802 = vmatpush1.msra.mxu0 0.0
      %803 = vmatprep.subr.mxu0 0.0
      %804 = vmatpush1.msra.mxu0 0.0
      %805 = vmatprep.subr.mxu0 0.0
      %806 = vmatpush1.msra.mxu0 0.0
      %807 = vmatprep.subr.mxu0 0.0
      %808 = vmatpush1.msra.mxu0 0.0
      %809 = vmatprep.subr.mxu0 0.0
      %810 = vmatpush1.msra.mxu0 0.0
      %v811 = vand.u32 %v300, 4294901760
      %812 = vmatprep.subr.mxu0 %v811
      %v813 = vand.u32 %v297, 4294901760
      %814 = vmatpush1.msra.mxu0 %v813
      %v815 = vand.u32 %v287, 4294901760
      %816 = vmatprep.subr.mxu0 %v815
      %v817 = vand.u32 %v286, 4294901760
      %818 = vmatpush1.msra.mxu0 %v817
      %v819 = vand.u32 %v285, 4294901760
      %820 = vmatprep.subr.mxu0 %v819
      %v821 = vand.u32 %v284, 4294901760
      %822 = vmatpush1.msra.mxu0 %v821
      %v823 = vand.u32 %v283, 4294901760
      %824 = vmatprep.subr.mxu0 %v823
      %v825 = vand.u32 %v282, 4294901760
      %826 = vmatpush1.msra.mxu0 %v825
      %v827 = vand.u32 %v281, 4294901760
      %828 = vmatprep.subr.mxu0 %v827
      %v829 = vand.u32 %v280, 4294901760
      %830 = vmatpush1.msra.mxu0 %v829
      %831 = vmatprep.subr.mxu0 0.0
      %832 = vmatpush2.msra.mxu0 0.0
      %833 = vmatprep.subr.mxu0 0.0
      %834 = vmatpush2.msra.mxu0 0.0
      %835 = vmatprep.subr.mxu0 0.0
      %836 = vmatpush2.msra.mxu0 0.0
      %837 = vmatprep.subr.mxu0 0.0
      %838 = vmatpush2.msra.mxu0 0.0
      %839 = vmatprep.subr.mxu0 0.0
      %840 = vmatpush2.msra.mxu0 0.0
      %841 = vmatprep.subr.mxu0 0.0
      %842 = vmatpush2.msra.mxu0 0.0
      %843 = vmatprep.subr.mxu0 0.0
      %844 = vmatpush2.msra.mxu0 0.0
      %845 = vmatprep.subr.mxu0 0.0
      %846 = vmatpush2.msra.mxu0 0.0
      %847 = vmatprep.subr.mxu0 0.0
      %848 = vmatpush2.msra.mxu0 0.0
      %849 = vmatprep.subr.mxu0 0.0
      %850 = vmatpush2.msra.mxu0 0.0
      %851 = vmatprep.subr.mxu0 0.0
      %852 = vmatpush2.msra.mxu0 0.0
      %853 = vmatprep.subr.mxu0 0.0
      %854 = vmatpush2.msra.mxu0 0.0
      %855 = vmatprep.subr.mxu0 0.0
      %856 = vmatpush2.msra.mxu0 0.0
      %857 = vmatprep.subr.mxu0 0.0
      %858 = vmatpush2.msra.mxu0 0.0
      %859 = vmatprep.subr.mxu0 0.0
      %860 = vmatpush2.msra.mxu0 0.0
      %861 = vmatprep.subr.mxu0 0.0
      %862 = vmatpush2.msra.mxu0 0.0
      %863 = vmatprep.mubr.f32.mxu0 0.0
      %v864 = vand.u32 %v293, 4294901760
      %865 = vmatmul.mubr.f32.gmra.mxu0 %v864
      %v866 = vpop.f32.mrf.mxu0
      %v867 = vadd.f32 %v785, %v866
      %v868 = vpop.f32.mrf.mxu0
      %v869 = vadd.f32 %v787, %v868
      %870 = vdwg.mxu0
      %v871 = vadd.f32 %v867, %v869
      %872 = vadd.xlane.f32.xlu0 %v871
      %v873 = vpop.xlane.xlu0 %872
      %v874 = vmul.f32 %v873, 0.00390625
      %v875 = vmul.f32 %v867, %v867
      %v876 = vmul.f32 %v869, %v869
      %v877 = vadd.f32 %v875, %v876
      %878 = vadd.xlane.f32.xlu0 %v877
      %v879 = vpop.xlane.xlu0 %878
      %v880 = vmul.f32 %v879, 0.00390625
      %v881 = vmul.f32 %v874, %v874
      %v882 = vsub.f32 %v880, %v881
      %v883 = vmax.f32 %v882, 0.0
      %v884 = vsub.f32 %v867, %v874
      %v885 = vsub.f32 %v869, %v874
      %v886 = vadd.f32 %v883, 1e-05
      %v887 = vrsqrt.pop %v886
      %v888 = vmul.f32 %v884, %v887
      %v889 = vmul.f32 %v885, %v887
      %vm890 = vcmp.gt.f32.partialorder %v888, 0.0
      %vm891 = vcmp.gt.f32.partialorder %v889, 0.0
      %v892 = vmul.f32 %v888, 0.1
      %v893 = vmul.f32 %v889, 0.1
      %v894 = vsel %vm890, %v888, %v892
      %v895 = vsel %vm891, %v889, %v893
      %v896 = vld [vmem:[%s2] sm:$0xff]
      %vm897 = vcmask 64512
      %v899 = vsel %vm897, %v896, 0
      %901 = vmatprep.subr.mxu0 0.0
      %902 = vmatpush1.msra.mxu0 0.0
      %903 = vmatprep.subr.mxu0 0.0
      %904 = vmatpush1.msra.mxu0 0.0
      %905 = vmatprep.subr.mxu0 0.0
      %906 = vmatpush1.msra.mxu0 0.0
      %907 = vmatprep.subr.mxu0 0.0
      %908 = vmatpush1.msra.mxu0 0.0
      %909 = vmatprep.subr.mxu0 0.0
      %910 = vmatpush1.msra.mxu0 0.0
      %911 = vmatprep.subr.mxu0 0.0
      %912 = vmatpush1.msra.mxu0 0.0
      %913 = vmatprep.subr.mxu0 0.0
      %914 = vmatpush1.msra.mxu0 0.0
      %915 = vmatprep.subr.mxu0 0.0
      %916 = vmatpush1.msra.mxu0 0.0
      %917 = vmatprep.subr.mxu0 0.0
      %918 = vmatpush1.msra.mxu0 0.0
      %919 = vmatprep.subr.mxu0 0.0
      %920 = vmatpush1.msra.mxu0 0.0
      %921 = vmatprep.subr.mxu0 0.0
      %922 = vmatpush1.msra.mxu0 0.0
      %923 = vmatprep.subr.mxu0 0.0
      %924 = vmatpush1.msra.mxu0 0.0
      %925 = vmatprep.subr.mxu0 0.0
      %926 = vmatpush1.msra.mxu0 0.0
      %927 = vmatprep.subr.mxu0 0.0
      %928 = vmatpush1.msra.mxu0 0.0
      %929 = vmatprep.subr.mxu0 0.0
      %930 = vmatpush1.msra.mxu0 0.0
      %v931 = vand.u32 %v895, 4294901760
      %932 = vmatprep.subr.mxu0 %v931
      %v933 = vand.u32 %v894, 4294901760
      %934 = vmatpush1.msra.mxu0 %v933
      %935 = vmatprep.subr.mxu0 0.0
      %936 = vmatpush2.msra.mxu0 0.0
      %937 = vmatprep.subr.mxu0 0.0
      %938 = vmatpush2.msra.mxu0 0.0
      %939 = vmatprep.subr.mxu0 0.0
      %940 = vmatpush2.msra.mxu0 0.0
      %941 = vmatprep.subr.mxu0 0.0
      %942 = vmatpush2.msra.mxu0 0.0
      %943 = vmatprep.subr.mxu0 0.0
      %944 = vmatpush2.msra.mxu0 0.0
      %945 = vmatprep.subr.mxu0 0.0
      %946 = vmatpush2.msra.mxu0 0.0
      %947 = vmatprep.subr.mxu0 0.0
      %948 = vmatpush2.msra.mxu0 0.0
      %949 = vmatprep.subr.mxu0 0.0
      %950 = vmatpush2.msra.mxu0 0.0
      %951 = vmatprep.subr.mxu0 0.0
      %952 = vmatpush2.msra.mxu0 0.0
      %953 = vmatprep.subr.mxu0 0.0
      %954 = vmatpush2.msra.mxu0 0.0
      %955 = vmatprep.subr.mxu0 0.0
      %956 = vmatpush2.msra.mxu0 0.0
      %957 = vmatprep.subr.mxu0 0.0
      %958 = vmatpush2.msra.mxu0 0.0
      %959 = vmatprep.subr.mxu0 0.0
      %960 = vmatpush2.msra.mxu0 0.0
      %961 = vmatprep.subr.mxu0 0.0
      %962 = vmatpush2.msra.mxu0 0.0
      %963 = vmatprep.subr.mxu0 0.0
      %964 = vmatpush2.msra.mxu0 0.0
      %965 = vmatprep.subr.mxu0 0.0
      %966 = vmatpush2.msra.mxu0 0.0
      %967 = vmatprep.mubr.f32.mxu0 0.0
      %v968 = vand.u32 %v899, 4294901760
      %v969 = vsub.f32 %v899, %v968
      %v970 = vand.u32 %v969, 4294901760
      %v971 = vsub.f32 %v969, %v970
      %v972 = vand.u32 %v971, 4294901760
      %973 = vmatmul.mubr.f32.gmra.mxu0 %v972
      %v974 = vpop.f32.mrf.mxu0
      %v975 = vadd.f32 0.0, %v974
      %v976 = vpop.f32.mrf.mxu0
      %v977 = vadd.f32 0.0, %v976
      %978 = vdwg.mxu0
      %979 = vmatprep.subr.mxu0 0.0
      %980 = vmatpush1.msra.mxu0 0.0
      %981 = vmatprep.subr.mxu0 0.0
      %982 = vmatpush1.msra.mxu0 0.0
      %983 = vmatprep.subr.mxu0 0.0
      %984 = vmatpush1.msra.mxu0 0.0
      %985 = vmatprep.subr.mxu0 0.0
      %986 = vmatpush1.msra.mxu0 0.0
      %987 = vmatprep.subr.mxu0 0.0
      %988 = vmatpush1.msra.mxu0 0.0
      %989 = vmatprep.subr.mxu0 0.0
      %990 = vmatpush1.msra.mxu0 0.0
      %991 = vmatprep.subr.mxu0 0.0
      %992 = vmatpush1.msra.mxu0 0.0
      %993 = vmatprep.subr.mxu0 0.0
      %994 = vmatpush1.msra.mxu0 0.0
      %995 = vmatprep.subr.mxu0 0.0
      %996 = vmatpush1.msra.mxu0 0.0
      %997 = vmatprep.subr.mxu0 0.0
      %998 = vmatpush1.msra.mxu0 0.0
      %999 = vmatprep.subr.mxu0 0.0
      %1000 = vmatpush1.msra.mxu0 0.0
      %1001 = vmatprep.subr.mxu0 0.0
      %1002 = vmatpush1.msra.mxu0 0.0
      %1003 = vmatprep.subr.mxu0 0.0
      %1004 = vmatpush1.msra.mxu0 0.0
      %1005 = vmatprep.subr.mxu0 0.0
      %1006 = vmatpush1.msra.mxu0 0.0
      %1007 = vmatprep.subr.mxu0 0.0
      %1008 = vmatpush1.msra.mxu0 0.0
      %v1009 = vand.u32 %v895, 4294901760
      %v1010 = vsub.f32 %v895, %v1009
      %v1011 = vand.u32 %v1010, 4294901760
      %v1012 = vsub.f32 %v1010, %v1011
      %v1013 = vand.u32 %v1012, 4294901760
      %1014 = vmatprep.subr.mxu0 %v1013
      %v1015 = vand.u32 %v894, 4294901760
      %v1016 = vsub.f32 %v894, %v1015
      %v1017 = vand.u32 %v1016, 4294901760
      %v1018 = vsub.f32 %v1016, %v1017
      %v1019 = vand.u32 %v1018, 4294901760
      %1020 = vmatpush1.msra.mxu0 %v1019
      %1021 = vmatprep.subr.mxu0 0.0
      %1022 = vmatpush2.msra.mxu0 0.0
      %1023 = vmatprep.subr.mxu0 0.0
      %1024 = vmatpush2.msra.mxu0 0.0
      %1025 = vmatprep.subr.mxu0 0.0
      %1026 = vmatpush2.msra.mxu0 0.0
      %1027 = vmatprep.subr.mxu0 0.0
      %1028 = vmatpush2.msra.mxu0 0.0
      %1029 = vmatprep.subr.mxu0 0.0
      %1030 = vmatpush2.msra.mxu0 0.0
      %1031 = vmatprep.subr.mxu0 0.0
      %1032 = vmatpush2.msra.mxu0 0.0
      %1033 = vmatprep.subr.mxu0 0.0
      %1034 = vmatpush2.msra.mxu0 0.0
      %1035 = vmatprep.subr.mxu0 0.0
      %1036 = vmatpush2.msra.mxu0 0.0
      %1037 = vmatprep.subr.mxu0 0.0
      %1038 = vmatpush2.msra.mxu0 0.0
      %1039 = vmatprep.subr.mxu0 0.0
      %1040 = vmatpush2.msra.mxu0 0.0
      %1041 = vmatprep.subr.mxu0 0.0
      %1042 = vmatpush2.msra.mxu0 0.0
      %1043 = vmatprep.subr.mxu0 0.0
      %1044 = vmatpush2.msra.mxu0 0.0
      %1045 = vmatprep.subr.mxu0 0.0
      %1046 = vmatpush2.msra.mxu0 0.0
      %1047 = vmatprep.subr.mxu0 0.0
      %1048 = vmatpush2.msra.mxu0 0.0
      %1049 = vmatprep.subr.mxu0 0.0
      %1050 = vmatpush2.msra.mxu0 0.0
      %1051 = vmatprep.subr.mxu0 0.0
      %1052 = vmatpush2.msra.mxu0 0.0
      %1053 = vmatprep.mubr.f32.mxu0 0.0
      %v1054 = vand.u32 %v899, 4294901760
      %1055 = vmatmul.mubr.f32.gmra.mxu0 %v1054
      %v1056 = vpop.f32.mrf.mxu0
      %v1057 = vadd.f32 %v975, %v1056
      %v1058 = vpop.f32.mrf.mxu0
      %v1059 = vadd.f32 %v977, %v1058
      %1060 = vdwg.mxu0
      %1061 = vmatprep.subr.mxu0 0.0
      %1062 = vmatpush1.msra.mxu0 0.0
      %1063 = vmatprep.subr.mxu0 0.0
      %1064 = vmatpush1.msra.mxu0 0.0
      %1065 = vmatprep.subr.mxu0 0.0
      %1066 = vmatpush1.msra.mxu0 0.0
      %1067 = vmatprep.subr.mxu0 0.0
      %1068 = vmatpush1.msra.mxu0 0.0
      %1069 = vmatprep.subr.mxu0 0.0
      %1070 = vmatpush1.msra.mxu0 0.0
      %1071 = vmatprep.subr.mxu0 0.0
      %1072 = vmatpush1.msra.mxu0 0.0
      %1073 = vmatprep.subr.mxu0 0.0
      %1074 = vmatpush1.msra.mxu0 0.0
      %1075 = vmatprep.subr.mxu0 0.0
      %1076 = vmatpush1.msra.mxu0 0.0
      %1077 = vmatprep.subr.mxu0 0.0
      %1078 = vmatpush1.msra.mxu0 0.0
      %1079 = vmatprep.subr.mxu0 0.0
      %1080 = vmatpush1.msra.mxu0 0.0
      %1081 = vmatprep.subr.mxu0 0.0
      %1082 = vmatpush1.msra.mxu0 0.0
      %1083 = vmatprep.subr.mxu0 0.0
      %1084 = vmatpush1.msra.mxu0 0.0
      %1085 = vmatprep.subr.mxu0 0.0
      %1086 = vmatpush1.msra.mxu0 0.0
      %1087 = vmatprep.subr.mxu0 0.0
      %1088 = vmatpush1.msra.mxu0 0.0
      %1089 = vmatprep.subr.mxu0 0.0
      %1090 = vmatpush1.msra.mxu0 0.0
      %v1091 = vand.u32 %v895, 4294901760
      %v1092 = vsub.f32 %v895, %v1091
      %1093 = vmatprep.subr.mxu0 %v1092
      %v1094 = vand.u32 %v894, 4294901760
      %v1095 = vsub.f32 %v894, %v1094
      %1096 = vmatpush1.msra.mxu0 %v1095
      %1097 = vmatprep.subr.mxu0 0.0
      %1098 = vmatpush2.msra.mxu0 0.0
      %1099 = vmatprep.subr.mxu0 0.0
      %1100 = vmatpush2.msra.mxu0 0.0
      %1101 = vmatprep.subr.mxu0 0.0
      %1102 = vmatpush2.msra.mxu0 0.0
      %1103 = vmatprep.subr.mxu0 0.0
      %1104 = vmatpush2.msra.mxu0 0.0
      %1105 = vmatprep.subr.mxu0 0.0
      %1106 = vmatpush2.msra.mxu0 0.0
      %1107 = vmatprep.subr.mxu0 0.0
      %1108 = vmatpush2.msra.mxu0 0.0
      %1109 = vmatprep.subr.mxu0 0.0
      %1110 = vmatpush2.msra.mxu0 0.0
      %1111 = vmatprep.subr.mxu0 0.0
      %1112 = vmatpush2.msra.mxu0 0.0
      %1113 = vmatprep.subr.mxu0 0.0
      %1114 = vmatpush2.msra.mxu0 0.0
      %1115 = vmatprep.subr.mxu0 0.0
      %1116 = vmatpush2.msra.mxu0 0.0
      %1117 = vmatprep.subr.mxu0 0.0
      %1118 = vmatpush2.msra.mxu0 0.0
      %1119 = vmatprep.subr.mxu0 0.0
      %1120 = vmatpush2.msra.mxu0 0.0
      %1121 = vmatprep.subr.mxu0 0.0
      %1122 = vmatpush2.msra.mxu0 0.0
      %1123 = vmatprep.subr.mxu0 0.0
      %1124 = vmatpush2.msra.mxu0 0.0
      %1125 = vmatprep.subr.mxu0 0.0
      %1126 = vmatpush2.msra.mxu0 0.0
      %1127 = vmatprep.subr.mxu0 0.0
      %1128 = vmatpush2.msra.mxu0 0.0
      %1129 = vmatprep.mubr.f32.mxu0 0.0
      %v1130 = vand.u32 %v899, 4294901760
      %v1131 = vsub.f32 %v899, %v1130
      %1132 = vmatmul.mubr.f32.gmra.mxu0 %v1131
      %v1133 = vpop.f32.mrf.mxu0
      %v1134 = vadd.f32 %v1057, %v1133
      %v1135 = vpop.f32.mrf.mxu0
      %v1136 = vadd.f32 %v1059, %v1135
      %1137 = vdwg.mxu0
      %1138 = vmatprep.subr.mxu0 0.0
      %1139 = vmatpush1.msra.mxu0 0.0
      %1140 = vmatprep.subr.mxu0 0.0
      %1141 = vmatpush1.msra.mxu0 0.0
      %1142 = vmatprep.subr.mxu0 0.0
      %1143 = vmatpush1.msra.mxu0 0.0
      %1144 = vmatprep.subr.mxu0 0.0
      %1145 = vmatpush1.msra.mxu0 0.0
      %1146 = vmatprep.subr.mxu0 0.0
      %1147 = vmatpush1.msra.mxu0 0.0
      %1148 = vmatprep.subr.mxu0 0.0
      %1149 = vmatpush1.msra.mxu0 0.0
      %1150 = vmatprep.subr.mxu0 0.0
      %1151 = vmatpush1.msra.mxu0 0.0
      %1152 = vmatprep.subr.mxu0 0.0
      %1153 = vmatpush1.msra.mxu0 0.0
      %1154 = vmatprep.subr.mxu0 0.0
      %1155 = vmatpush1.msra.mxu0 0.0
      %1156 = vmatprep.subr.mxu0 0.0
      %1157 = vmatpush1.msra.mxu0 0.0
      %1158 = vmatprep.subr.mxu0 0.0
      %1159 = vmatpush1.msra.mxu0 0.0
      %1160 = vmatprep.subr.mxu0 0.0
      %1161 = vmatpush1.msra.mxu0 0.0
      %1162 = vmatprep.subr.mxu0 0.0
      %1163 = vmatpush1.msra.mxu0 0.0
      %1164 = vmatprep.subr.mxu0 0.0
      %1165 = vmatpush1.msra.mxu0 0.0
      %1166 = vmatprep.subr.mxu0 0.0
      %1167 = vmatpush1.msra.mxu0 0.0
      %v1168 = vand.u32 %v895, 4294901760
      %1169 = vmatprep.subr.mxu0 %v1168
      %v1170 = vand.u32 %v894, 4294901760
      %1171 = vmatpush1.msra.mxu0 %v1170
      %1172 = vmatprep.subr.mxu0 0.0
      %1173 = vmatpush2.msra.mxu0 0.0
      %1174 = vmatprep.subr.mxu0 0.0
      %1175 = vmatpush2.msra.mxu0 0.0
      %1176 = vmatprep.subr.mxu0 0.0
      %1177 = vmatpush2.msra.mxu0 0.0
      %1178 = vmatprep.subr.mxu0 0.0
      %1179 = vmatpush2.msra.mxu0 0.0
      %1180 = vmatprep.subr.mxu0 0.0
      %1181 = vmatpush2.msra.mxu0 0.0
      %1182 = vmatprep.subr.mxu0 0.0
      %1183 = vmatpush2.msra.mxu0 0.0
      %1184 = vmatprep.subr.mxu0 0.0
      %1185 = vmatpush2.msra.mxu0 0.0
      %1186 = vmatprep.subr.mxu0 0.0
      %1187 = vmatpush2.msra.mxu0 0.0
      %1188 = vmatprep.subr.mxu0 0.0
      %1189 = vmatpush2.msra.mxu0 0.0
      %1190 = vmatprep.subr.mxu0 0.0
      %1191 = vmatpush2.msra.mxu0 0.0
      %1192 = vmatprep.subr.mxu0 0.0
      %1193 = vmatpush2.msra.mxu0 0.0
      %1194 = vmatprep.subr.mxu0 0.0
      %1195 = vmatpush2.msra.mxu0 0.0
      %1196 = vmatprep.subr.mxu0 0.0
      %1197 = vmatpush2.msra.mxu0 0.0
      %1198 = vmatprep.subr.mxu0 0.0
      %1199 = vmatpush2.msra.mxu0 0.0
      %1200 = vmatprep.subr.mxu0 0.0
      %1201 = vmatpush2.msra.mxu0 0.0
      %1202 = vmatprep.subr.mxu0 0.0
      %1203 = vmatpush2.msra.mxu0 0.0
      %1204 = vmatprep.mubr.f32.mxu0 0.0
      %v1205 = vand.u32 %v899, 4294901760
      %v1206 = vsub.f32 %v899, %v1205
      %v1207 = vand.u32 %v1206, 4294901760
      %1208 = vmatmul.mubr.f32.gmra.mxu0 %v1207
      %v1209 = vpop.f32.mrf.mxu0
      %v1210 = vadd.f32 %v1134, %v1209
      %v1211 = vpop.f32.mrf.mxu0
      %v1212 = vadd.f32 %v1136, %v1211
      %1213 = vdwg.mxu0
      %1214 = vmatprep.subr.mxu0 0.0
      %1215 = vmatpush1.msra.mxu0 0.0
      %1216 = vmatprep.subr.mxu0 0.0
      %1217 = vmatpush1.msra.mxu0 0.0
      %1218 = vmatprep.subr.mxu0 0.0
      %1219 = vmatpush1.msra.mxu0 0.0
      %1220 = vmatprep.subr.mxu0 0.0
      %1221 = vmatpush1.msra.mxu0 0.0
      %1222 = vmatprep.subr.mxu0 0.0
      %1223 = vmatpush1.msra.mxu0 0.0
      %1224 = vmatprep.subr.mxu0 0.0
      %1225 = vmatpush1.msra.mxu0 0.0
      %1226 = vmatprep.subr.mxu0 0.0
      %1227 = vmatpush1.msra.mxu0 0.0
      %1228 = vmatprep.subr.mxu0 0.0
      %1229 = vmatpush1.msra.mxu0 0.0
      %1230 = vmatprep.subr.mxu0 0.0
      %1231 = vmatpush1.msra.mxu0 0.0
      %1232 = vmatprep.subr.mxu0 0.0
      %1233 = vmatpush1.msra.mxu0 0.0
      %1234 = vmatprep.subr.mxu0 0.0
      %1235 = vmatpush1.msra.mxu0 0.0
      %1236 = vmatprep.subr.mxu0 0.0
      %1237 = vmatpush1.msra.mxu0 0.0
      %1238 = vmatprep.subr.mxu0 0.0
      %1239 = vmatpush1.msra.mxu0 0.0
      %1240 = vmatprep.subr.mxu0 0.0
      %1241 = vmatpush1.msra.mxu0 0.0
      %1242 = vmatprep.subr.mxu0 0.0
      %1243 = vmatpush1.msra.mxu0 0.0
      %v1244 = vand.u32 %v895, 4294901760
      %v1245 = vsub.f32 %v895, %v1244
      %v1246 = vand.u32 %v1245, 4294901760
      %1247 = vmatprep.subr.mxu0 %v1246
      %v1248 = vand.u32 %v894, 4294901760
      %v1249 = vsub.f32 %v894, %v1248
      %v1250 = vand.u32 %v1249, 4294901760
      %1251 = vmatpush1.msra.mxu0 %v1250
      %1252 = vmatprep.subr.mxu0 0.0
      %1253 = vmatpush2.msra.mxu0 0.0
      %1254 = vmatprep.subr.mxu0 0.0
      %1255 = vmatpush2.msra.mxu0 0.0
      %1256 = vmatprep.subr.mxu0 0.0
      %1257 = vmatpush2.msra.mxu0 0.0
      %1258 = vmatprep.subr.mxu0 0.0
      %1259 = vmatpush2.msra.mxu0 0.0
      %1260 = vmatprep.subr.mxu0 0.0
      %1261 = vmatpush2.msra.mxu0 0.0
      %1262 = vmatprep.subr.mxu0 0.0
      %1263 = vmatpush2.msra.mxu0 0.0
      %1264 = vmatprep.subr.mxu0 0.0
      %1265 = vmatpush2.msra.mxu0 0.0
      %1266 = vmatprep.subr.mxu0 0.0
      %1267 = vmatpush2.msra.mxu0 0.0
      %1268 = vmatprep.subr.mxu0 0.0
      %1269 = vmatpush2.msra.mxu0 0.0
      %1270 = vmatprep.subr.mxu0 0.0
      %1271 = vmatpush2.msra.mxu0 0.0
      %1272 = vmatprep.subr.mxu0 0.0
      %1273 = vmatpush2.msra.mxu0 0.0
      %1274 = vmatprep.subr.mxu0 0.0
      %1275 = vmatpush2.msra.mxu0 0.0
      %1276 = vmatprep.subr.mxu0 0.0
      %1277 = vmatpush2.msra.mxu0 0.0
      %1278 = vmatprep.subr.mxu0 0.0
      %1279 = vmatpush2.msra.mxu0 0.0
      %1280 = vmatprep.subr.mxu0 0.0
      %1281 = vmatpush2.msra.mxu0 0.0
      %1282 = vmatprep.subr.mxu0 0.0
      %1283 = vmatpush2.msra.mxu0 0.0
      %1284 = vmatprep.mubr.f32.mxu0 0.0
      %v1285 = vand.u32 %v899, 4294901760
      %1286 = vmatmul.mubr.f32.gmra.mxu0 %v1285
      %v1287 = vpop.f32.mrf.mxu0
      %v1288 = vadd.f32 %v1210, %v1287
      %v1289 = vpop.f32.mrf.mxu0
      %v1290 = vadd.f32 %v1212, %v1289
      %1291 = vdwg.mxu0
      %1292 = vmatprep.subr.mxu0 0.0
      %1293 = vmatpush1.msra.mxu0 0.0
      %1294 = vmatprep.subr.mxu0 0.0
      %1295 = vmatpush1.msra.mxu0 0.0
      %1296 = vmatprep.subr.mxu0 0.0
      %1297 = vmatpush1.msra.mxu0 0.0
      %1298 = vmatprep.subr.mxu0 0.0
      %1299 = vmatpush1.msra.mxu0 0.0
      %1300 = vmatprep.subr.mxu0 0.0
      %1301 = vmatpush1.msra.mxu0 0.0
      %1302 = vmatprep.subr.mxu0 0.0
      %1303 = vmatpush1.msra.mxu0 0.0
      %1304 = vmatprep.subr.mxu0 0.0
      %1305 = vmatpush1.msra.mxu0 0.0
      %1306 = vmatprep.subr.mxu0 0.0
      %1307 = vmatpush1.msra.mxu0 0.0
      %1308 = vmatprep.subr.mxu0 0.0
      %1309 = vmatpush1.msra.mxu0 0.0
      %1310 = vmatprep.subr.mxu0 0.0
      %1311 = vmatpush1.msra.mxu0 0.0
      %1312 = vmatprep.subr.mxu0 0.0
      %1313 = vmatpush1.msra.mxu0 0.0
      %1314 = vmatprep.subr.mxu0 0.0
      %1315 = vmatpush1.msra.mxu0 0.0
      %1316 = vmatprep.subr.mxu0 0.0
      %1317 = vmatpush1.msra.mxu0 0.0
      %1318 = vmatprep.subr.mxu0 0.0
      %1319 = vmatpush1.msra.mxu0 0.0
      %1320 = vmatprep.subr.mxu0 0.0
      %1321 = vmatpush1.msra.mxu0 0.0
      %v1322 = vand.u32 %v895, 4294901760
      %1323 = vmatprep.subr.mxu0 %v1322
      %v1324 = vand.u32 %v894, 4294901760
      %1325 = vmatpush1.msra.mxu0 %v1324
      %1326 = vmatprep.subr.mxu0 0.0
      %1327 = vmatpush2.msra.mxu0 0.0
      %1328 = vmatprep.subr.mxu0 0.0
      %1329 = vmatpush2.msra.mxu0 0.0
      %1330 = vmatprep.subr.mxu0 0.0
      %1331 = vmatpush2.msra.mxu0 0.0
      %1332 = vmatprep.subr.mxu0 0.0
      %1333 = vmatpush2.msra.mxu0 0.0
      %1334 = vmatprep.subr.mxu0 0.0
      %1335 = vmatpush2.msra.mxu0 0.0
      %1336 = vmatprep.subr.mxu0 0.0
      %1337 = vmatpush2.msra.mxu0 0.0
      %1338 = vmatprep.subr.mxu0 0.0
      %1339 = vmatpush2.msra.mxu0 0.0
      %1340 = vmatprep.subr.mxu0 0.0
      %1341 = vmatpush2.msra.mxu0 0.0
      %1342 = vmatprep.subr.mxu0 0.0
      %1343 = vmatpush2.msra.mxu0 0.0
      %1344 = vmatprep.subr.mxu0 0.0
      %1345 = vmatpush2.msra.mxu0 0.0
      %1346 = vmatprep.subr.mxu0 0.0
      %1347 = vmatpush2.msra.mxu0 0.0
      %1348 = vmatprep.subr.mxu0 0.0
      %1349 = vmatpush2.msra.mxu0 0.0
      %1350 = vmatprep.subr.mxu0 0.0
      %1351 = vmatpush2.msra.mxu0 0.0
      %1352 = vmatprep.subr.mxu0 0.0
      %1353 = vmatpush2.msra.mxu0 0.0
      %1354 = vmatprep.subr.mxu0 0.0
      %1355 = vmatpush2.msra.mxu0 0.0
      %1356 = vmatprep.subr.mxu0 0.0
      %1357 = vmatpush2.msra.mxu0 0.0
      %1358 = vmatprep.mubr.f32.mxu0 0.0
      %v1359 = vand.u32 %v899, 4294901760
      %1360 = vmatmul.mubr.f32.gmra.mxu0 %v1359
      %v1361 = vpop.f32.mrf.mxu0
      %v1362 = vadd.f32 %v1288, %v1361
      %v1363 = vpop.f32.mrf.mxu0
      %v1364 = vadd.f32 %v1290, %v1363
      %1365 = vdwg.mxu0
      %v1366 = vadd.f32 %v1362, %v1364
      %1367 = vadd.xlane.f32.xlu0 %v1366
      %v1368 = vpop.xlane.xlu0 %1367
      %v1369 = vrcp.pop 256.0
      %v1370 = vmul.f32 %v1368, %v1369
      %v1371 = vmax.f32 %v1362, %v1364
      %1372 = vmax.xlane.f32.xlu0 %v1371
      %v1373 = vpop.xlane.xlu0 %1372
      %v1374 = vld [vmem:[%s3] sm:$0xf]
      %v1376 = vsel %vm897, %v1374, 0
      %1378 = vmatprep.subr.mxu0 0.0
      %1379 = vmatpush1.msra.mxu0 0.0
      %1380 = vmatprep.subr.mxu0 0.0
      %1381 = vmatpush1.msra.mxu0 0.0
      %1382 = vmatprep.subr.mxu0 0.0
      %1383 = vmatpush1.msra.mxu0 0.0
      %1384 = vmatprep.subr.mxu0 0.0
      %1385 = vmatpush1.msra.mxu0 0.0
      %1386 = vmatprep.subr.mxu0 0.0
      %1387 = vmatpush1.msra.mxu0 0.0
      %1388 = vmatprep.subr.mxu0 0.0
      %1389 = vmatpush1.msra.mxu0 0.0
      %1390 = vmatprep.subr.mxu0 0.0
      %1391 = vmatpush1.msra.mxu0 0.0
      %1392 = vmatprep.subr.mxu0 0.0
      %1393 = vmatpush1.msra.mxu0 0.0
      %1394 = vmatprep.subr.mxu0 0.0
      %1395 = vmatpush1.msra.mxu0 0.0
      %1396 = vmatprep.subr.mxu0 0.0
      %1397 = vmatpush1.msra.mxu0 0.0
      %1398 = vmatprep.subr.mxu0 0.0
      %1399 = vmatpush1.msra.mxu0 0.0
      %1400 = vmatprep.subr.mxu0 0.0
      %1401 = vmatpush1.msra.mxu0 0.0
      %1402 = vmatprep.subr.mxu0 0.0
      %1403 = vmatpush1.msra.mxu0 0.0
      %1404 = vmatprep.subr.mxu0 0.0
      %1405 = vmatpush1.msra.mxu0 0.0
      %1406 = vmatprep.subr.mxu0 0.0
      %1407 = vmatpush1.msra.mxu0 0.0
      %1408 = vmatprep.subr.mxu0 0.0
      %v1409 = vand.u32 %v1370, 4294901760
      %1410 = vmatpush1.msra.mxu0 %v1409
      %1411 = vmatprep.subr.mxu0 0.0
      %1412 = vmatpush2.msra.mxu0 0.0
      %1413 = vmatprep.subr.mxu0 0.0
      %1414 = vmatpush2.msra.mxu0 0.0
      %1415 = vmatprep.subr.mxu0 0.0
      %1416 = vmatpush2.msra.mxu0 0.0
      %1417 = vmatprep.subr.mxu0 0.0
      %1418 = vmatpush2.msra.mxu0 0.0
      %1419 = vmatprep.subr.mxu0 0.0
      %1420 = vmatpush2.msra.mxu0 0.0
      %1421 = vmatprep.subr.mxu0 0.0
      %1422 = vmatpush2.msra.mxu0 0.0
      %1423 = vmatprep.subr.mxu0 0.0
      %1424 = vmatpush2.msra.mxu0 0.0
      %1425 = vmatprep.subr.mxu0 0.0
      %1426 = vmatpush2.msra.mxu0 0.0
      %1427 = vmatprep.subr.mxu0 0.0
      %1428 = vmatpush2.msra.mxu0 0.0
      %1429 = vmatprep.subr.mxu0 0.0
      %1430 = vmatpush2.msra.mxu0 0.0
      %1431 = vmatprep.subr.mxu0 0.0
      %1432 = vmatpush2.msra.mxu0 0.0
      %1433 = vmatprep.subr.mxu0 0.0
      %1434 = vmatpush2.msra.mxu0 0.0
      %1435 = vmatprep.subr.mxu0 0.0
      %1436 = vmatpush2.msra.mxu0 0.0
      %1437 = vmatprep.subr.mxu0 0.0
      %1438 = vmatpush2.msra.mxu0 0.0
      %1439 = vmatprep.subr.mxu0 0.0
      %1440 = vmatpush2.msra.mxu0 0.0
      %1441 = vmatprep.subr.mxu0 0.0
      %1442 = vmatpush2.msra.mxu0 0.0
      %1443 = vmatprep.mubr.f32.mxu0 0.0
      %v1444 = vand.u32 %v1376, 4294901760
      %v1445 = vsub.f32 %v1376, %v1444
      %v1446 = vand.u32 %v1445, 4294901760
      %v1447 = vsub.f32 %v1445, %v1446
      %v1448 = vand.u32 %v1447, 4294901760
      %1449 = vmatmul.mubr.f32.gmra.mxu0 %v1448
      %v1450 = vpop.f32.mrf.mxu0
      %v1451 = vadd.f32 0.0, %v1450
      %v1452 = vpop.f32.mrf.mxu0
      %1453 = vdwg.mxu0
      %1454 = vmatprep.subr.mxu0 0.0
      %1455 = vmatpush1.msra.mxu0 0.0
      %1456 = vmatprep.subr.mxu0 0.0
      %1457 = vmatpush1.msra.mxu0 0.0
      %1458 = vmatprep.subr.mxu0 0.0
      %1459 = vmatpush1.msra.mxu0 0.0
      %1460 = vmatprep.subr.mxu0 0.0
      %1461 = vmatpush1.msra.mxu0 0.0
      %1462 = vmatprep.subr.mxu0 0.0
      %1463 = vmatpush1.msra.mxu0 0.0
      %1464 = vmatprep.subr.mxu0 0.0
      %1465 = vmatpush1.msra.mxu0 0.0
      %1466 = vmatprep.subr.mxu0 0.0
      %1467 = vmatpush1.msra.mxu0 0.0
      %1468 = vmatprep.subr.mxu0 0.0
      %1469 = vmatpush1.msra.mxu0 0.0
      %1470 = vmatprep.subr.mxu0 0.0
      %1471 = vmatpush1.msra.mxu0 0.0
      %1472 = vmatprep.subr.mxu0 0.0
      %1473 = vmatpush1.msra.mxu0 0.0
      %1474 = vmatprep.subr.mxu0 0.0
      %1475 = vmatpush1.msra.mxu0 0.0
      %1476 = vmatprep.subr.mxu0 0.0
      %1477 = vmatpush1.msra.mxu0 0.0
      %1478 = vmatprep.subr.mxu0 0.0
      %1479 = vmatpush1.msra.mxu0 0.0
      %1480 = vmatprep.subr.mxu0 0.0
      %1481 = vmatpush1.msra.mxu0 0.0
      %1482 = vmatprep.subr.mxu0 0.0
      %1483 = vmatpush1.msra.mxu0 0.0
      %1484 = vmatprep.subr.mxu0 0.0
      %v1485 = vand.u32 %v1370, 4294901760
      %v1486 = vsub.f32 %v1370, %v1485
      %v1487 = vand.u32 %v1486, 4294901760
      %v1488 = vsub.f32 %v1486, %v1487
      %v1489 = vand.u32 %v1488, 4294901760
      %1490 = vmatpush1.msra.mxu0 %v1489
      %1491 = vmatprep.subr.mxu0 0.0
      %1492 = vmatpush2.msra.mxu0 0.0
      %1493 = vmatprep.subr.mxu0 0.0
      %1494 = vmatpush2.msra.mxu0 0.0
      %1495 = vmatprep.subr.mxu0 0.0
      %1496 = vmatpush2.msra.mxu0 0.0
      %1497 = vmatprep.subr.mxu0 0.0
      %1498 = vmatpush2.msra.mxu0 0.0
      %1499 = vmatprep.subr.mxu0 0.0
      %1500 = vmatpush2.msra.mxu0 0.0
      %1501 = vmatprep.subr.mxu0 0.0
      %1502 = vmatpush2.msra.mxu0 0.0
      %1503 = vmatprep.subr.mxu0 0.0
      %1504 = vmatpush2.msra.mxu0 0.0
      %1505 = vmatprep.subr.mxu0 0.0
      %1506 = vmatpush2.msra.mxu0 0.0
      %1507 = vmatprep.subr.mxu0 0.0
      %1508 = vmatpush2.msra.mxu0 0.0
      %1509 = vmatprep.subr.mxu0 0.0
      %1510 = vmatpush2.msra.mxu0 0.0
      %1511 = vmatprep.subr.mxu0 0.0
      %1512 = vmatpush2.msra.mxu0 0.0
      %1513 = vmatprep.subr.mxu0 0.0
      %1514 = vmatpush2.msra.mxu0 0.0
      %1515 = vmatprep.subr.mxu0 0.0
      %1516 = vmatpush2.msra.mxu0 0.0
      %1517 = vmatprep.subr.mxu0 0.0
      %1518 = vmatpush2.msra.mxu0 0.0
      %1519 = vmatprep.subr.mxu0 0.0
      %1520 = vmatpush2.msra.mxu0 0.0
      %1521 = vmatprep.subr.mxu0 0.0
      %1522 = vmatpush2.msra.mxu0 0.0
      %1523 = vmatprep.mubr.f32.mxu0 0.0
      %v1524 = vand.u32 %v1376, 4294901760
      %1525 = vmatmul.mubr.f32.gmra.mxu0 %v1524
      %v1526 = vpop.f32.mrf.mxu0
      %v1527 = vadd.f32 %v1451, %v1526
      %v1528 = vpop.f32.mrf.mxu0
      %1529 = vdwg.mxu0
      %1530 = vmatprep.subr.mxu0 0.0
      %1531 = vmatpush1.msra.mxu0 0.0
      %1532 = vmatprep.subr.mxu0 0.0
      %1533 = vmatpush1.msra.mxu0 0.0
      %1534 = vmatprep.subr.mxu0 0.0
      %1535 = vmatpush1.msra.mxu0 0.0
      %1536 = vmatprep.subr.mxu0 0.0
      %1537 = vmatpush1.msra.mxu0 0.0
      %1538 = vmatprep.subr.mxu0 0.0
      %1539 = vmatpush1.msra.mxu0 0.0
      %1540 = vmatprep.subr.mxu0 0.0
      %1541 = vmatpush1.msra.mxu0 0.0
      %1542 = vmatprep.subr.mxu0 0.0
      %1543 = vmatpush1.msra.mxu0 0.0
      %1544 = vmatprep.subr.mxu0 0.0
      %1545 = vmatpush1.msra.mxu0 0.0
      %1546 = vmatprep.subr.mxu0 0.0
      %1547 = vmatpush1.msra.mxu0 0.0
      %1548 = vmatprep.subr.mxu0 0.0
      %1549 = vmatpush1.msra.mxu0 0.0
      %1550 = vmatprep.subr.mxu0 0.0
      %1551 = vmatpush1.msra.mxu0 0.0
      %1552 = vmatprep.subr.mxu0 0.0
      %1553 = vmatpush1.msra.mxu0 0.0
      %1554 = vmatprep.subr.mxu0 0.0
      %1555 = vmatpush1.msra.mxu0 0.0
      %1556 = vmatprep.subr.mxu0 0.0
      %1557 = vmatpush1.msra.mxu0 0.0
      %1558 = vmatprep.subr.mxu0 0.0
      %1559 = vmatpush1.msra.mxu0 0.0
      %1560 = vmatprep.subr.mxu0 0.0
      %v1561 = vand.u32 %v1370, 4294901760
      %v1562 = vsub.f32 %v1370, %v1561
      %1563 = vmatpush1.msra.mxu0 %v1562
      %1564 = vmatprep.subr.mxu0 0.0
      %1565 = vmatpush2.msra.mxu0 0.0
      %1566 = vmatprep.subr.mxu0 0.0
      %1567 = vmatpush2.msra.mxu0 0.0
      %1568 = vmatprep.subr.mxu0 0.0
      %1569 = vmatpush2.msra.mxu0 0.0
      %1570 = vmatprep.subr.mxu0 0.0
      %1571 = vmatpush2.msra.mxu0 0.0
      %1572 = vmatprep.subr.mxu0 0.0
      %1573 = vmatpush2.msra.mxu0 0.0
      %1574 = vmatprep.subr.mxu0 0.0
      %1575 = vmatpush2.msra.mxu0 0.0
      %1576 = vmatprep.subr.mxu0 0.0
      %1577 = vmatpush2.msra.mxu0 0.0
      %1578 = vmatprep.subr.mxu0 0.0
      %1579 = vmatpush2.msra.mxu0 0.0
      %1580 = vmatprep.subr.mxu0 0.0
      %1581 = vmatpush2.msra.mxu0 0.0
      %1582 = vmatprep.subr.mxu0 0.0
      %1583 = vmatpush2.msra.mxu0 0.0
      %1584 = vmatprep.subr.mxu0 0.0
      %1585 = vmatpush2.msra.mxu0 0.0
      %1586 = vmatprep.subr.mxu0 0.0
      %1587 = vmatpush2.msra.mxu0 0.0
      %1588 = vmatprep.subr.mxu0 0.0
      %1589 = vmatpush2.msra.mxu0 0.0
      %1590 = vmatprep.subr.mxu0 0.0
      %1591 = vmatpush2.msra.mxu0 0.0
      %1592 = vmatprep.subr.mxu0 0.0
      %1593 = vmatpush2.msra.mxu0 0.0
      %1594 = vmatprep.subr.mxu0 0.0
      %1595 = vmatpush2.msra.mxu0 0.0
      %1596 = vmatprep.mubr.f32.mxu0 0.0
      %v1597 = vand.u32 %v1376, 4294901760
      %v1598 = vsub.f32 %v1376, %v1597
      %1599 = vmatmul.mubr.f32.gmra.mxu0 %v1598
      %v1600 = vpop.f32.mrf.mxu0
      %v1601 = vadd.f32 %v1527, %v1600
      %v1602 = vpop.f32.mrf.mxu0
      %1603 = vdwg.mxu0
      %1604 = vmatprep.subr.mxu0 0.0
      %1605 = vmatpush1.msra.mxu0 0.0
      %1606 = vmatprep.subr.mxu0 0.0
      %1607 = vmatpush1.msra.mxu0 0.0
      %1608 = vmatprep.subr.mxu0 0.0
      %1609 = vmatpush1.msra.mxu0 0.0
      %1610 = vmatprep.subr.mxu0 0.0
      %1611 = vmatpush1.msra.mxu0 0.0
      %1612 = vmatprep.subr.mxu0 0.0
      %1613 = vmatpush1.msra.mxu0 0.0
      %1614 = vmatprep.subr.mxu0 0.0
      %1615 = vmatpush1.msra.mxu0 0.0
      %1616 = vmatprep.subr.mxu0 0.0
      %1617 = vmatpush1.msra.mxu0 0.0
      %1618 = vmatprep.subr.mxu0 0.0
      %1619 = vmatpush1.msra.mxu0 0.0
      %1620 = vmatprep.subr.mxu0 0.0
      %1621 = vmatpush1.msra.mxu0 0.0
      %1622 = vmatprep.subr.mxu0 0.0
      %1623 = vmatpush1.msra.mxu0 0.0
      %1624 = vmatprep.subr.mxu0 0.0
      %1625 = vmatpush1.msra.mxu0 0.0
      %1626 = vmatprep.subr.mxu0 0.0
      %1627 = vmatpush1.msra.mxu0 0.0
      %1628 = vmatprep.subr.mxu0 0.0
      %1629 = vmatpush1.msra.mxu0 0.0
      %1630 = vmatprep.subr.mxu0 0.0
      %1631 = vmatpush1.msra.mxu0 0.0
      %1632 = vmatprep.subr.mxu0 0.0
      %1633 = vmatpush1.msra.mxu0 0.0
      %1634 = vmatprep.subr.mxu0 0.0
      %v1635 = vand.u32 %v1370, 4294901760
      %1636 = vmatpush1.msra.mxu0 %v1635
      %1637 = vmatprep.subr.mxu0 0.0
      %1638 = vmatpush2.msra.mxu0 0.0
      %1639 = vmatprep.subr.mxu0 0.0
      %1640 = vmatpush2.msra.mxu0 0.0
      %1641 = vmatprep.subr.mxu0 0.0
      %1642 = vmatpush2.msra.mxu0 0.0
      %1643 = vmatprep.subr.mxu0 0.0
      %1644 = vmatpush2.msra.mxu0 0.0
      %1645 = vmatprep.subr.mxu0 0.0
      %1646 = vmatpush2.msra.mxu0 0.0
      %1647 = vmatprep.subr.mxu0 0.0
      %1648 = vmatpush2.msra.mxu0 0.0
      %1649 = vmatprep.subr.mxu0 0.0
      %1650 = vmatpush2.msra.mxu0 0.0
      %1651 = vmatprep.subr.mxu0 0.0
      %1652 = vmatpush2.msra.mxu0 0.0
      %1653 = vmatprep.subr.mxu0 0.0
      %1654 = vmatpush2.msra.mxu0 0.0
      %1655 = vmatprep.subr.mxu0 0.0
      %1656 = vmatpush2.msra.mxu0 0.0
      %1657 = vmatprep.subr.mxu0 0.0
      %1658 = vmatpush2.msra.mxu0 0.0
      %1659 = vmatprep.subr.mxu0 0.0
      %1660 = vmatpush2.msra.mxu0 0.0
      %1661 = vmatprep.subr.mxu0 0.0
      %1662 = vmatpush2.msra.mxu0 0.0
      %1663 = vmatprep.subr.mxu0 0.0
      %1664 = vmatpush2.msra.mxu0 0.0
      %1665 = vmatprep.subr.mxu0 0.0
      %1666 = vmatpush2.msra.mxu0 0.0
      %1667 = vmatprep.subr.mxu0 0.0
      %1668 = vmatpush2.msra.mxu0 0.0
      %1669 = vmatprep.mubr.f32.mxu0 0.0
      %v1670 = vand.u32 %v1376, 4294901760
      %v1671 = vsub.f32 %v1376, %v1670
      %v1672 = vand.u32 %v1671, 4294901760
      %1673 = vmatmul.mubr.f32.gmra.mxu0 %v1672
      %v1674 = vpop.f32.mrf.mxu0
      %v1675 = vadd.f32 %v1601, %v1674
      %v1676 = vpop.f32.mrf.mxu0
      %1677 = vdwg.mxu0
      %1678 = vmatprep.subr.mxu0 0.0
      %1679 = vmatpush1.msra.mxu0 0.0
      %1680 = vmatprep.subr.mxu0 0.0
      %1681 = vmatpush1.msra.mxu0 0.0
      %1682 = vmatprep.subr.mxu0 0.0
      %1683 = vmatpush1.msra.mxu0 0.0
      %1684 = vmatprep.subr.mxu0 0.0
      %1685 = vmatpush1.msra.mxu0 0.0
      %1686 = vmatprep.subr.mxu0 0.0
      %1687 = vmatpush1.msra.mxu0 0.0
      %1688 = vmatprep.subr.mxu0 0.0
      %1689 = vmatpush1.msra.mxu0 0.0
      %1690 = vmatprep.subr.mxu0 0.0
      %1691 = vmatpush1.msra.mxu0 0.0
      %1692 = vmatprep.subr.mxu0 0.0
      %1693 = vmatpush1.msra.mxu0 0.0
      %1694 = vmatprep.subr.mxu0 0.0
      %1695 = vmatpush1.msra.mxu0 0.0
      %1696 = vmatprep.subr.mxu0 0.0
      %1697 = vmatpush1.msra.mxu0 0.0
      %1698 = vmatprep.subr.mxu0 0.0
      %1699 = vmatpush1.msra.mxu0 0.0
      %1700 = vmatprep.subr.mxu0 0.0
      %1701 = vmatpush1.msra.mxu0 0.0
      %1702 = vmatprep.subr.mxu0 0.0
      %1703 = vmatpush1.msra.mxu0 0.0
      %1704 = vmatprep.subr.mxu0 0.0
      %1705 = vmatpush1.msra.mxu0 0.0
      %1706 = vmatprep.subr.mxu0 0.0
      %1707 = vmatpush1.msra.mxu0 0.0
      %1708 = vmatprep.subr.mxu0 0.0
      %v1709 = vand.u32 %v1370, 4294901760
      %v1710 = vsub.f32 %v1370, %v1709
      %v1711 = vand.u32 %v1710, 4294901760
      %1712 = vmatpush1.msra.mxu0 %v1711
      %1713 = vmatprep.subr.mxu0 0.0
      %1714 = vmatpush2.msra.mxu0 0.0
      %1715 = vmatprep.subr.mxu0 0.0
      %1716 = vmatpush2.msra.mxu0 0.0
      %1717 = vmatprep.subr.mxu0 0.0
      %1718 = vmatpush2.msra.mxu0 0.0
      %1719 = vmatprep.subr.mxu0 0.0
      %1720 = vmatpush2.msra.mxu0 0.0
      %1721 = vmatprep.subr.mxu0 0.0
      %1722 = vmatpush2.msra.mxu0 0.0
      %1723 = vmatprep.subr.mxu0 0.0
      %1724 = vmatpush2.msra.mxu0 0.0
      %1725 = vmatprep.subr.mxu0 0.0
      %1726 = vmatpush2.msra.mxu0 0.0
      %1727 = vmatprep.subr.mxu0 0.0
      %1728 = vmatpush2.msra.mxu0 0.0
      %1729 = vmatprep.subr.mxu0 0.0
      %1730 = vmatpush2.msra.mxu0 0.0
      %1731 = vmatprep.subr.mxu0 0.0
      %1732 = vmatpush2.msra.mxu0 0.0
      %1733 = vmatprep.subr.mxu0 0.0
      %1734 = vmatpush2.msra.mxu0 0.0
      %1735 = vmatprep.subr.mxu0 0.0
      %1736 = vmatpush2.msra.mxu0 0.0
      %1737 = vmatprep.subr.mxu0 0.0
      %1738 = vmatpush2.msra.mxu0 0.0
      %1739 = vmatprep.subr.mxu0 0.0
      %1740 = vmatpush2.msra.mxu0 0.0
      %1741 = vmatprep.subr.mxu0 0.0
      %1742 = vmatpush2.msra.mxu0 0.0
      %1743 = vmatprep.subr.mxu0 0.0
      %1744 = vmatpush2.msra.mxu0 0.0
      %1745 = vmatprep.mubr.f32.mxu0 0.0
      %v1746 = vand.u32 %v1376, 4294901760
      %1747 = vmatmul.mubr.f32.gmra.mxu0 %v1746
      %v1748 = vpop.f32.mrf.mxu0
      %v1749 = vadd.f32 %v1675, %v1748
      %v1750 = vpop.f32.mrf.mxu0
      %1751 = vdwg.mxu0
      %1752 = vmatprep.subr.mxu0 0.0
      %1753 = vmatpush1.msra.mxu0 0.0
      %1754 = vmatprep.subr.mxu0 0.0
      %1755 = vmatpush1.msra.mxu0 0.0
      %1756 = vmatprep.subr.mxu0 0.0
      %1757 = vmatpush1.msra.mxu0 0.0
      %1758 = vmatprep.subr.mxu0 0.0
      %1759 = vmatpush1.msra.mxu0 0.0
      %1760 = vmatprep.subr.mxu0 0.0
      %1761 = vmatpush1.msra.mxu0 0.0
      %1762 = vmatprep.subr.mxu0 0.0
      %1763 = vmatpush1.msra.mxu0 0.0
      %1764 = vmatprep.subr.mxu0 0.0
      %1765 = vmatpush1.msra.mxu0 0.0
      %1766 = vmatprep.subr.mxu0 0.0
      %1767 = vmatpush1.msra.mxu0 0.0
      %1768 = vmatprep.subr.mxu0 0.0
      %1769 = vmatpush1.msra.mxu0 0.0
      %1770 = vmatprep.subr.mxu0 0.0
      %1771 = vmatpush1.msra.mxu0 0.0
      %1772 = vmatprep.subr.mxu0 0.0
      %1773 = vmatpush1.msra.mxu0 0.0
      %1774 = vmatprep.subr.mxu0 0.0
      %1775 = vmatpush1.msra.mxu0 0.0
      %1776 = vmatprep.subr.mxu0 0.0
      %1777 = vmatpush1.msra.mxu0 0.0
      %1778 = vmatprep.subr.mxu0 0.0
      %1779 = vmatpush1.msra.mxu0 0.0
      %1780 = vmatprep.subr.mxu0 0.0
      %1781 = vmatpush1.msra.mxu0 0.0
      %1782 = vmatprep.subr.mxu0 0.0
      %v1783 = vand.u32 %v1370, 4294901760
      %1784 = vmatpush1.msra.mxu0 %v1783
      %1785 = vmatprep.subr.mxu0 0.0
      %1786 = vmatpush2.msra.mxu0 0.0
      %1787 = vmatprep.subr.mxu0 0.0
      %1788 = vmatpush2.msra.mxu0 0.0
      %1789 = vmatprep.subr.mxu0 0.0
      %1790 = vmatpush2.msra.mxu0 0.0
      %1791 = vmatprep.subr.mxu0 0.0
      %1792 = vmatpush2.msra.mxu0 0.0
      %1793 = vmatprep.subr.mxu0 0.0
      %1794 = vmatpush2.msra.mxu0 0.0
      %1795 = vmatprep.subr.mxu0 0.0
      %1796 = vmatpush2.msra.mxu0 0.0
      %1797 = vmatprep.subr.mxu0 0.0
      %1798 = vmatpush2.msra.mxu0 0.0
      %1799 = vmatprep.subr.mxu0 0.0
      %1800 = vmatpush2.msra.mxu0 0.0
      %1801 = vmatprep.subr.mxu0 0.0
      %1802 = vmatpush2.msra.mxu0 0.0
      %1803 = vmatprep.subr.mxu0 0.0
      %1804 = vmatpush2.msra.mxu0 0.0
      %1805 = vmatprep.subr.mxu0 0.0
      %1806 = vmatpush2.msra.mxu0 0.0
      %1807 = vmatprep.subr.mxu0 0.0
      %1808 = vmatpush2.msra.mxu0 0.0
      %1809 = vmatprep.subr.mxu0 0.0
      %1810 = vmatpush2.msra.mxu0 0.0
      %1811 = vmatprep.subr.mxu0 0.0
      %1812 = vmatpush2.msra.mxu0 0.0
      %1813 = vmatprep.subr.mxu0 0.0
      %1814 = vmatpush2.msra.mxu0 0.0
      %1815 = vmatprep.subr.mxu0 0.0
      %1816 = vmatpush2.msra.mxu0 0.0
      %1817 = vmatprep.mubr.f32.mxu0 0.0
      %v1818 = vand.u32 %v1376, 4294901760
      %1819 = vmatmul.mubr.f32.gmra.mxu0 %v1818
      %v1820 = vpop.f32.mrf.mxu0
      %v1821 = vadd.f32 %v1749, %v1820
      %v1822 = vpop.f32.mrf.mxu0
      %1823 = vdwg.mxu0
      %v1824 = vmax.f32 %v1821, 0.0
      %v1825 = vld [vmem:[%s4] sm:$0xff]
      %1826 = vmatprep.subr.mxu0 0.0
      %1827 = vmatpush1.msra.mxu0 0.0
      %1828 = vmatprep.subr.mxu0 0.0
      %1829 = vmatpush1.msra.mxu0 0.0
      %1830 = vmatprep.subr.mxu0 0.0
      %1831 = vmatpush1.msra.mxu0 0.0
      %1832 = vmatprep.subr.mxu0 0.0
      %1833 = vmatpush1.msra.mxu0 0.0
      %1834 = vmatprep.subr.mxu0 0.0
      %1835 = vmatpush1.msra.mxu0 0.0
      %1836 = vmatprep.subr.mxu0 0.0
      %1837 = vmatpush1.msra.mxu0 0.0
      %1838 = vmatprep.subr.mxu0 0.0
      %1839 = vmatpush1.msra.mxu0 0.0
      %1840 = vmatprep.subr.mxu0 0.0
      %1841 = vmatpush1.msra.mxu0 0.0
      %1842 = vmatprep.subr.mxu0 0.0
      %1843 = vmatpush1.msra.mxu0 0.0
      %1844 = vmatprep.subr.mxu0 0.0
      %1845 = vmatpush1.msra.mxu0 0.0
      %1846 = vmatprep.subr.mxu0 0.0
      %1847 = vmatpush1.msra.mxu0 0.0
      %1848 = vmatprep.subr.mxu0 0.0
      %1849 = vmatpush1.msra.mxu0 0.0
      %1850 = vmatprep.subr.mxu0 0.0
      %1851 = vmatpush1.msra.mxu0 0.0
      %1852 = vmatprep.subr.mxu0 0.0
      %1853 = vmatpush1.msra.mxu0 0.0
      %1854 = vmatprep.subr.mxu0 0.0
      %1855 = vmatpush1.msra.mxu0 0.0
      %1856 = vmatprep.subr.mxu0 0.0
      %v1857 = vand.u32 %v1373, 4294901760
      %1858 = vmatpush1.msra.mxu0 %v1857
      %1859 = vmatprep.subr.mxu0 0.0
      %1860 = vmatpush2.msra.mxu0 0.0
      %1861 = vmatprep.subr.mxu0 0.0
      %1862 = vmatpush2.msra.mxu0 0.0
      %1863 = vmatprep.subr.mxu0 0.0
      %1864 = vmatpush2.msra.mxu0 0.0
      %1865 = vmatprep.subr.mxu0 0.0
      %1866 = vmatpush2.msra.mxu0 0.0
      %1867 = vmatprep.subr.mxu0 0.0
      %1868 = vmatpush2.msra.mxu0 0.0
      %1869 = vmatprep.subr.mxu0 0.0
      %1870 = vmatpush2.msra.mxu0 0.0
      %1871 = vmatprep.subr.mxu0 0.0
      %1872 = vmatpush2.msra.mxu0 0.0
      %1873 = vmatprep.subr.mxu0 0.0
      %1874 = vmatpush2.msra.mxu0 0.0
      %1875 = vmatprep.subr.mxu0 0.0
      %1876 = vmatpush2.msra.mxu0 0.0
      %1877 = vmatprep.subr.mxu0 0.0
      %1878 = vmatpush2.msra.mxu0 0.0
      %1879 = vmatprep.subr.mxu0 0.0
      %1880 = vmatpush2.msra.mxu0 0.0
      %1881 = vmatprep.subr.mxu0 0.0
      %1882 = vmatpush2.msra.mxu0 0.0
      %1883 = vmatprep.subr.mxu0 0.0
      %1884 = vmatpush2.msra.mxu0 0.0
      %1885 = vmatprep.subr.mxu0 0.0
      %1886 = vmatpush2.msra.mxu0 0.0
      %1887 = vmatprep.subr.mxu0 0.0
      %1888 = vmatpush2.msra.mxu0 0.0
      %1889 = vmatprep.subr.mxu0 0.0
      %1890 = vmatpush2.msra.mxu0 0.0
      %1891 = vmatprep.mubr.f32.mxu0 0.0
      %v1892 = vand.u32 %v1376, 4294901760
      %v1893 = vsub.f32 %v1376, %v1892
      %v1894 = vand.u32 %v1893, 4294901760
      %v1895 = vsub.f32 %v1893, %v1894
      %v1896 = vand.u32 %v1895, 4294901760
      %1897 = vmatmul.mubr.f32.gmra.mxu0 %v1896
      %v1898 = vpop.f32.mrf.mxu0
      %v1899 = vadd.f32 0.0, %v1898
      %v1900 = vpop.f32.mrf.mxu0
      %1901 = vdwg.mxu0
      %1902 = vmatprep.subr.mxu0 0.0
      %1903 = vmatpush1.msra.mxu0 0.0
      %1904 = vmatprep.subr.mxu0 0.0
      %1905 = vmatpush1.msra.mxu0 0.0
      %1906 = vmatprep.subr.mxu0 0.0
      %1907 = vmatpush1.msra.mxu0 0.0
      %1908 = vmatprep.subr.mxu0 0.0
      %1909 = vmatpush1.msra.mxu0 0.0
      %1910 = vmatprep.subr.mxu0 0.0
      %1911 = vmatpush1.msra.mxu0 0.0
      %1912 = vmatprep.subr.mxu0 0.0
      %1913 = vmatpush1.msra.mxu0 0.0
      %1914 = vmatprep.subr.mxu0 0.0
      %1915 = vmatpush1.msra.mxu0 0.0
      %1916 = vmatprep.subr.mxu0 0.0
      %1917 = vmatpush1.msra.mxu0 0.0
      %1918 = vmatprep.subr.mxu0 0.0
      %1919 = vmatpush1.msra.mxu0 0.0
      %1920 = vmatprep.subr.mxu0 0.0
      %1921 = vmatpush1.msra.mxu0 0.0
      %1922 = vmatprep.subr.mxu0 0.0
      %1923 = vmatpush1.msra.mxu0 0.0
      %1924 = vmatprep.subr.mxu0 0.0
      %1925 = vmatpush1.msra.mxu0 0.0
      %1926 = vmatprep.subr.mxu0 0.0
      %1927 = vmatpush1.msra.mxu0 0.0
      %1928 = vmatprep.subr.mxu0 0.0
      %1929 = vmatpush1.msra.mxu0 0.0
      %1930 = vmatprep.subr.mxu0 0.0
      %1931 = vmatpush1.msra.mxu0 0.0
      %1932 = vmatprep.subr.mxu0 0.0
      %v1933 = vand.u32 %v1373, 4294901760
      %v1934 = vsub.f32 %v1373, %v1933
      %v1935 = vand.u32 %v1934, 4294901760
      %v1936 = vsub.f32 %v1934, %v1935
      %v1937 = vand.u32 %v1936, 4294901760
      %1938 = vmatpush1.msra.mxu0 %v1937
      %1939 = vmatprep.subr.mxu0 0.0
      %1940 = vmatpush2.msra.mxu0 0.0
      %1941 = vmatprep.subr.mxu0 0.0
      %1942 = vmatpush2.msra.mxu0 0.0
      %1943 = vmatprep.subr.mxu0 0.0
      %1944 = vmatpush2.msra.mxu0 0.0
      %1945 = vmatprep.subr.mxu0 0.0
      %1946 = vmatpush2.msra.mxu0 0.0
      %1947 = vmatprep.subr.mxu0 0.0
      %1948 = vmatpush2.msra.mxu0 0.0
      %1949 = vmatprep.subr.mxu0 0.0
      %1950 = vmatpush2.msra.mxu0 0.0
      %1951 = vmatprep.subr.mxu0 0.0
      %1952 = vmatpush2.msra.mxu0 0.0
      %1953 = vmatprep.subr.mxu0 0.0
      %1954 = vmatpush2.msra.mxu0 0.0
      %1955 = vmatprep.subr.mxu0 0.0
      %1956 = vmatpush2.msra.mxu0 0.0
      %1957 = vmatprep.subr.mxu0 0.0
      %1958 = vmatpush2.msra.mxu0 0.0
      %1959 = vmatprep.subr.mxu0 0.0
      %1960 = vmatpush2.msra.mxu0 0.0
      %1961 = vmatprep.subr.mxu0 0.0
      %1962 = vmatpush2.msra.mxu0 0.0
      %1963 = vmatprep.subr.mxu0 0.0
      %1964 = vmatpush2.msra.mxu0 0.0
      %1965 = vmatprep.subr.mxu0 0.0
      %1966 = vmatpush2.msra.mxu0 0.0
      %1967 = vmatprep.subr.mxu0 0.0
      %1968 = vmatpush2.msra.mxu0 0.0
      %1969 = vmatprep.subr.mxu0 0.0
      %1970 = vmatpush2.msra.mxu0 0.0
      %1971 = vmatprep.mubr.f32.mxu0 0.0
      %v1972 = vand.u32 %v1376, 4294901760
      %1973 = vmatmul.mubr.f32.gmra.mxu0 %v1972
      %v1974 = vpop.f32.mrf.mxu0
      %v1975 = vadd.f32 %v1899, %v1974
      %v1976 = vpop.f32.mrf.mxu0
      %1977 = vdwg.mxu0
      %1978 = vmatprep.subr.mxu0 0.0
      %1979 = vmatpush1.msra.mxu0 0.0
      %1980 = vmatprep.subr.mxu0 0.0
      %1981 = vmatpush1.msra.mxu0 0.0
      %1982 = vmatprep.subr.mxu0 0.0
      %1983 = vmatpush1.msra.mxu0 0.0
      %1984 = vmatprep.subr.mxu0 0.0
      %1985 = vmatpush1.msra.mxu0 0.0
      %1986 = vmatprep.subr.mxu0 0.0
      %1987 = vmatpush1.msra.mxu0 0.0
      %1988 = vmatprep.subr.mxu0 0.0
      %1989 = vmatpush1.msra.mxu0 0.0
      %1990 = vmatprep.subr.mxu0 0.0
      %1991 = vmatpush1.msra.mxu0 0.0
      %1992 = vmatprep.subr.mxu0 0.0
      %1993 = vmatpush1.msra.mxu0 0.0
      %1994 = vmatprep.subr.mxu0 0.0
      %1995 = vmatpush1.msra.mxu0 0.0
      %1996 = vmatprep.subr.mxu0 0.0
      %1997 = vmatpush1.msra.mxu0 0.0
      %1998 = vmatprep.subr.mxu0 0.0
      %1999 = vmatpush1.msra.mxu0 0.0
      %2000 = vmatprep.subr.mxu0 0.0
      %2001 = vmatpush1.msra.mxu0 0.0
      %2002 = vmatprep.subr.mxu0 0.0
      %2003 = vmatpush1.msra.mxu0 0.0
      %2004 = vmatprep.subr.mxu0 0.0
      %2005 = vmatpush1.msra.mxu0 0.0
      %2006 = vmatprep.subr.mxu0 0.0
      %2007 = vmatpush1.msra.mxu0 0.0
      %2008 = vmatprep.subr.mxu0 0.0
      %v2009 = vand.u32 %v1373, 4294901760
      %v2010 = vsub.f32 %v1373, %v2009
      %2011 = vmatpush1.msra.mxu0 %v2010
      %2012 = vmatprep.subr.mxu0 0.0
      %2013 = vmatpush2.msra.mxu0 0.0
      %2014 = vmatprep.subr.mxu0 0.0
      %2015 = vmatpush2.msra.mxu0 0.0
      %2016 = vmatprep.subr.mxu0 0.0
      %2017 = vmatpush2.msra.mxu0 0.0
      %2018 = vmatprep.subr.mxu0 0.0
      %2019 = vmatpush2.msra.mxu0 0.0
      %2020 = vmatprep.subr.mxu0 0.0
      %2021 = vmatpush2.msra.mxu0 0.0
      %2022 = vmatprep.subr.mxu0 0.0
      %2023 = vmatpush2.msra.mxu0 0.0
      %2024 = vmatprep.subr.mxu0 0.0
      %2025 = vmatpush2.msra.mxu0 0.0
      %2026 = vmatprep.subr.mxu0 0.0
      %2027 = vmatpush2.msra.mxu0 0.0
      %2028 = vmatprep.subr.mxu0 0.0
      %2029 = vmatpush2.msra.mxu0 0.0
      %2030 = vmatprep.subr.mxu0 0.0
      %2031 = vmatpush2.msra.mxu0 0.0
      %2032 = vmatprep.subr.mxu0 0.0
      %2033 = vmatpush2.msra.mxu0 0.0
      %2034 = vmatprep.subr.mxu0 0.0
      %2035 = vmatpush2.msra.mxu0 0.0
      %2036 = vmatprep.subr.mxu0 0.0
      %2037 = vmatpush2.msra.mxu0 0.0
      %2038 = vmatprep.subr.mxu0 0.0
      %2039 = vmatpush2.msra.mxu0 0.0
      %2040 = vmatprep.subr.mxu0 0.0
      %2041 = vmatpush2.msra.mxu0 0.0
      %2042 = vmatprep.subr.mxu0 0.0
      %2043 = vmatpush2.msra.mxu0 0.0
      %2044 = vmatprep.mubr.f32.mxu0 0.0
      %v2045 = vand.u32 %v1376, 4294901760
      %v2046 = vsub.f32 %v1376, %v2045
      %2047 = vmatmul.mubr.f32.gmra.mxu0 %v2046
      %v2048 = vpop.f32.mrf.mxu0
      %v2049 = vadd.f32 %v1975, %v2048
      %v2050 = vpop.f32.mrf.mxu0
      %2051 = vdwg.mxu0
      %2052 = vmatprep.subr.mxu0 0.0
      %2053 = vmatpush1.msra.mxu0 0.0
      %2054 = vmatprep.subr.mxu0 0.0
      %2055 = vmatpush1.msra.mxu0 0.0
      %2056 = vmatprep.subr.mxu0 0.0
      %2057 = vmatpush1.msra.mxu0 0.0
      %2058 = vmatprep.subr.mxu0 0.0
      %2059 = vmatpush1.msra.mxu0 0.0
      %2060 = vmatprep.subr.mxu0 0.0
      %2061 = vmatpush1.msra.mxu0 0.0
      %2062 = vmatprep.subr.mxu0 0.0
      %2063 = vmatpush1.msra.mxu0 0.0
      %2064 = vmatprep.subr.mxu0 0.0
      %2065 = vmatpush1.msra.mxu0 0.0
      %2066 = vmatprep.subr.mxu0 0.0
      %2067 = vmatpush1.msra.mxu0 0.0
      %2068 = vmatprep.subr.mxu0 0.0
      %2069 = vmatpush1.msra.mxu0 0.0
      %2070 = vmatprep.subr.mxu0 0.0
      %2071 = vmatpush1.msra.mxu0 0.0
      %2072 = vmatprep.subr.mxu0 0.0
      %2073 = vmatpush1.msra.mxu0 0.0
      %2074 = vmatprep.subr.mxu0 0.0
      %2075 = vmatpush1.msra.mxu0 0.0
      %2076 = vmatprep.subr.mxu0 0.0
      %2077 = vmatpush1.msra.mxu0 0.0
      %2078 = vmatprep.subr.mxu0 0.0
      %2079 = vmatpush1.msra.mxu0 0.0
      %2080 = vmatprep.subr.mxu0 0.0
      %2081 = vmatpush1.msra.mxu0 0.0
      %2082 = vmatprep.subr.mxu0 0.0
      %v2083 = vand.u32 %v1373, 4294901760
      %2084 = vmatpush1.msra.mxu0 %v2083
      %2085 = vmatprep.subr.mxu0 0.0
      %2086 = vmatpush2.msra.mxu0 0.0
      %2087 = vmatprep.subr.mxu0 0.0
      %2088 = vmatpush2.msra.mxu0 0.0
      %2089 = vmatprep.subr.mxu0 0.0
      %2090 = vmatpush2.msra.mxu0 0.0
      %2091 = vmatprep.subr.mxu0 0.0
      %2092 = vmatpush2.msra.mxu0 0.0
      %2093 = vmatprep.subr.mxu0 0.0
      %2094 = vmatpush2.msra.mxu0 0.0
      %2095 = vmatprep.subr.mxu0 0.0
      %2096 = vmatpush2.msra.mxu0 0.0
      %2097 = vmatprep.subr.mxu0 0.0
      %2098 = vmatpush2.msra.mxu0 0.0
      %2099 = vmatprep.subr.mxu0 0.0
      %2100 = vmatpush2.msra.mxu0 0.0
      %2101 = vmatprep.subr.mxu0 0.0
      %2102 = vmatpush2.msra.mxu0 0.0
      %2103 = vmatprep.subr.mxu0 0.0
      %2104 = vmatpush2.msra.mxu0 0.0
      %2105 = vmatprep.subr.mxu0 0.0
      %2106 = vmatpush2.msra.mxu0 0.0
      %2107 = vmatprep.subr.mxu0 0.0
      %2108 = vmatpush2.msra.mxu0 0.0
      %2109 = vmatprep.subr.mxu0 0.0
      %2110 = vmatpush2.msra.mxu0 0.0
      %2111 = vmatprep.subr.mxu0 0.0
      %2112 = vmatpush2.msra.mxu0 0.0
      %2113 = vmatprep.subr.mxu0 0.0
      %2114 = vmatpush2.msra.mxu0 0.0
      %2115 = vmatprep.subr.mxu0 0.0
      %2116 = vmatpush2.msra.mxu0 0.0
      %2117 = vmatprep.mubr.f32.mxu0 0.0
      %v2118 = vand.u32 %v1376, 4294901760
      %v2119 = vsub.f32 %v1376, %v2118
      %v2120 = vand.u32 %v2119, 4294901760
      %2121 = vmatmul.mubr.f32.gmra.mxu0 %v2120
      %v2122 = vpop.f32.mrf.mxu0
      %v2123 = vadd.f32 %v2049, %v2122
      %v2124 = vpop.f32.mrf.mxu0
      %2125 = vdwg.mxu0
      %2126 = vmatprep.subr.mxu0 0.0
      %2127 = vmatpush1.msra.mxu0 0.0
      %2128 = vmatprep.subr.mxu0 0.0
      %2129 = vmatpush1.msra.mxu0 0.0
      %2130 = vmatprep.subr.mxu0 0.0
      %2131 = vmatpush1.msra.mxu0 0.0
      %2132 = vmatprep.subr.mxu0 0.0
      %2133 = vmatpush1.msra.mxu0 0.0
      %2134 = vmatprep.subr.mxu0 0.0
      %2135 = vmatpush1.msra.mxu0 0.0
      %2136 = vmatprep.subr.mxu0 0.0
      %2137 = vmatpush1.msra.mxu0 0.0
      %2138 = vmatprep.subr.mxu0 0.0
      %2139 = vmatpush1.msra.mxu0 0.0
      %2140 = vmatprep.subr.mxu0 0.0
      %2141 = vmatpush1.msra.mxu0 0.0
      %2142 = vmatprep.subr.mxu0 0.0
      %2143 = vmatpush1.msra.mxu0 0.0
      %2144 = vmatprep.subr.mxu0 0.0
      %2145 = vmatpush1.msra.mxu0 0.0
      %2146 = vmatprep.subr.mxu0 0.0
      %2147 = vmatpush1.msra.mxu0 0.0
      %2148 = vmatprep.subr.mxu0 0.0
      %2149 = vmatpush1.msra.mxu0 0.0
      %2150 = vmatprep.subr.mxu0 0.0
      %2151 = vmatpush1.msra.mxu0 0.0
      %2152 = vmatprep.subr.mxu0 0.0
      %2153 = vmatpush1.msra.mxu0 0.0
      %2154 = vmatprep.subr.mxu0 0.0
      %2155 = vmatpush1.msra.mxu0 0.0
      %2156 = vmatprep.subr.mxu0 0.0
      %v2157 = vand.u32 %v1373, 4294901760
      %v2158 = vsub.f32 %v1373, %v2157
      %v2159 = vand.u32 %v2158, 4294901760
      %2160 = vmatpush1.msra.mxu0 %v2159
      %2161 = vmatprep.subr.mxu0 0.0
      %2162 = vmatpush2.msra.mxu0 0.0
      %2163 = vmatprep.subr.mxu0 0.0
      %2164 = vmatpush2.msra.mxu0 0.0
      %2165 = vmatprep.subr.mxu0 0.0
      %2166 = vmatpush2.msra.mxu0 0.0
      %2167 = vmatprep.subr.mxu0 0.0
      %2168 = vmatpush2.msra.mxu0 0.0
      %2169 = vmatprep.subr.mxu0 0.0
      %2170 = vmatpush2.msra.mxu0 0.0
      %2171 = vmatprep.subr.mxu0 0.0
      %2172 = vmatpush2.msra.mxu0 0.0
      %2173 = vmatprep.subr.mxu0 0.0
      %2174 = vmatpush2.msra.mxu0 0.0
      %2175 = vmatprep.subr.mxu0 0.0
      %2176 = vmatpush2.msra.mxu0 0.0
      %2177 = vmatprep.subr.mxu0 0.0
      %2178 = vmatpush2.msra.mxu0 0.0
      %2179 = vmatprep.subr.mxu0 0.0
      %2180 = vmatpush2.msra.mxu0 0.0
      %2181 = vmatprep.subr.mxu0 0.0
      %2182 = vmatpush2.msra.mxu0 0.0
      %2183 = vmatprep.subr.mxu0 0.0
      %2184 = vmatpush2.msra.mxu0 0.0
      %2185 = vmatprep.subr.mxu0 0.0
      %2186 = vmatpush2.msra.mxu0 0.0
      %2187 = vmatprep.subr.mxu0 0.0
      %2188 = vmatpush2.msra.mxu0 0.0
      %2189 = vmatprep.subr.mxu0 0.0
      %2190 = vmatpush2.msra.mxu0 0.0
      %2191 = vmatprep.subr.mxu0 0.0
      %2192 = vmatpush2.msra.mxu0 0.0
      %2193 = vmatprep.mubr.f32.mxu0 0.0
      %v2194 = vand.u32 %v1376, 4294901760
      %2195 = vmatmul.mubr.f32.gmra.mxu0 %v2194
      %v2196 = vpop.f32.mrf.mxu0
      %v2197 = vadd.f32 %v2123, %v2196
      %v2198 = vpop.f32.mrf.mxu0
      %2199 = vdwg.mxu0
      %2200 = vmatprep.subr.mxu0 0.0
      %2201 = vmatpush1.msra.mxu0 0.0
      %2202 = vmatprep.subr.mxu0 0.0
      %2203 = vmatpush1.msra.mxu0 0.0
      %2204 = vmatprep.subr.mxu0 0.0
      %2205 = vmatpush1.msra.mxu0 0.0
      %2206 = vmatprep.subr.mxu0 0.0
      %2207 = vmatpush1.msra.mxu0 0.0
      %2208 = vmatprep.subr.mxu0 0.0
      %2209 = vmatpush1.msra.mxu0 0.0
      %2210 = vmatprep.subr.mxu0 0.0
      %2211 = vmatpush1.msra.mxu0 0.0
      %2212 = vmatprep.subr.mxu0 0.0
      %2213 = vmatpush1.msra.mxu0 0.0
      %2214 = vmatprep.subr.mxu0 0.0
      %2215 = vmatpush1.msra.mxu0 0.0
      %2216 = vmatprep.subr.mxu0 0.0
      %2217 = vmatpush1.msra.mxu0 0.0
      %2218 = vmatprep.subr.mxu0 0.0
      %2219 = vmatpush1.msra.mxu0 0.0
      %2220 = vmatprep.subr.mxu0 0.0
      %2221 = vmatpush1.msra.mxu0 0.0
      %2222 = vmatprep.subr.mxu0 0.0
      %2223 = vmatpush1.msra.mxu0 0.0
      %2224 = vmatprep.subr.mxu0 0.0
      %2225 = vmatpush1.msra.mxu0 0.0
      %2226 = vmatprep.subr.mxu0 0.0
      %2227 = vmatpush1.msra.mxu0 0.0
      %2228 = vmatprep.subr.mxu0 0.0
      %2229 = vmatpush1.msra.mxu0 0.0
      %2230 = vmatprep.subr.mxu0 0.0
      %v2231 = vand.u32 %v1373, 4294901760
      %2232 = vmatpush1.msra.mxu0 %v2231
      %2233 = vmatprep.subr.mxu0 0.0
      %2234 = vmatpush2.msra.mxu0 0.0
      %2235 = vmatprep.subr.mxu0 0.0
      %2236 = vmatpush2.msra.mxu0 0.0
      %2237 = vmatprep.subr.mxu0 0.0
      %2238 = vmatpush2.msra.mxu0 0.0
      %2239 = vmatprep.subr.mxu0 0.0
      %2240 = vmatpush2.msra.mxu0 0.0
      %2241 = vmatprep.subr.mxu0 0.0
      %2242 = vmatpush2.msra.mxu0 0.0
      %2243 = vmatprep.subr.mxu0 0.0
      %2244 = vmatpush2.msra.mxu0 0.0
      %2245 = vmatprep.subr.mxu0 0.0
      %2246 = vmatpush2.msra.mxu0 0.0
      %2247 = vmatprep.subr.mxu0 0.0
      %2248 = vmatpush2.msra.mxu0 0.0
      %2249 = vmatprep.subr.mxu0 0.0
      %2250 = vmatpush2.msra.mxu0 0.0
      %2251 = vmatprep.subr.mxu0 0.0
      %2252 = vmatpush2.msra.mxu0 0.0
      %2253 = vmatprep.subr.mxu0 0.0
      %2254 = vmatpush2.msra.mxu0 0.0
      %2255 = vmatprep.subr.mxu0 0.0
      %2256 = vmatpush2.msra.mxu0 0.0
      %2257 = vmatprep.subr.mxu0 0.0
      %2258 = vmatpush2.msra.mxu0 0.0
      %2259 = vmatprep.subr.mxu0 0.0
      %2260 = vmatpush2.msra.mxu0 0.0
      %2261 = vmatprep.subr.mxu0 0.0
      %2262 = vmatpush2.msra.mxu0 0.0
      %2263 = vmatprep.subr.mxu0 0.0
      %2264 = vmatpush2.msra.mxu0 0.0
      %2265 = vmatprep.mubr.f32.mxu0 0.0
      %v2266 = vand.u32 %v1376, 4294901760
      %2267 = vmatmul.mubr.f32.gmra.mxu0 %v2266
      %v2268 = vpop.f32.mrf.mxu0
      %v2269 = vadd.f32 %v2197, %v2268
      %v2270 = vpop.f32.mrf.mxu0
      %2271 = vdwg.mxu0
      %v2272 = vmax.f32 %v2269, 0.0
      %vm2273 = vcmask 31744
      %v2275 = vsel %vm2273, %v1825, 0
      %v2278 = vsel %vm295, %v2272, 0
      %2280 = vmatprep.subr.mxu0 0.0
      %2281 = vmatpush1.msra.mxu0 0.0
      %2282 = vmatprep.subr.mxu0 0.0
      %2283 = vmatpush1.msra.mxu0 0.0
      %2284 = vmatprep.subr.mxu0 0.0
      %2285 = vmatpush1.msra.mxu0 0.0
      %2286 = vmatprep.subr.mxu0 0.0
      %2287 = vmatpush1.msra.mxu0 0.0
      %2288 = vmatprep.subr.mxu0 0.0
      %2289 = vmatpush1.msra.mxu0 0.0
      %2290 = vmatprep.subr.mxu0 0.0
      %2291 = vmatpush1.msra.mxu0 0.0
      %2292 = vmatprep.subr.mxu0 0.0
      %2293 = vmatpush1.msra.mxu0 0.0
      %2294 = vmatprep.subr.mxu0 0.0
      %2295 = vmatpush1.msra.mxu0 0.0
      %2296 = vmatprep.subr.mxu0 0.0
      %2297 = vmatpush1.msra.mxu0 0.0
      %2298 = vmatprep.subr.mxu0 0.0
      %2299 = vmatpush1.msra.mxu0 0.0
      %2300 = vmatprep.subr.mxu0 0.0
      %2301 = vmatpush1.msra.mxu0 0.0
      %2302 = vmatprep.subr.mxu0 0.0
      %2303 = vmatpush1.msra.mxu0 0.0
      %2304 = vmatprep.subr.mxu0 0.0
      %2305 = vmatpush1.msra.mxu0 0.0
      %2306 = vmatprep.subr.mxu0 0.0
      %2307 = vmatpush1.msra.mxu0 0.0
      %2308 = vmatprep.subr.mxu0 0.0
      %2309 = vmatpush1.msra.mxu0 0.0
      %2310 = vmatprep.subr.mxu0 0.0
      %v2311 = vand.u32 %v2278, 4294901760
      %2312 = vmatpush1.msra.mxu0 %v2311
      %2313 = vmatprep.subr.mxu0 0.0
      %2314 = vmatpush2.msra.mxu0 0.0
      %2315 = vmatprep.subr.mxu0 0.0
      %2316 = vmatpush2.msra.mxu0 0.0
      %2317 = vmatprep.subr.mxu0 0.0
      %2318 = vmatpush2.msra.mxu0 0.0
      %2319 = vmatprep.subr.mxu0 0.0
      %2320 = vmatpush2.msra.mxu0 0.0
      %2321 = vmatprep.subr.mxu0 0.0
      %2322 = vmatpush2.msra.mxu0 0.0
      %2323 = vmatprep.subr.mxu0 0.0
      %2324 = vmatpush2.msra.mxu0 0.0
      %2325 = vmatprep.subr.mxu0 0.0
      %2326 = vmatpush2.msra.mxu0 0.0
      %2327 = vmatprep.subr.mxu0 0.0
      %2328 = vmatpush2.msra.mxu0 0.0
      %2329 = vmatprep.subr.mxu0 0.0
      %2330 = vmatpush2.msra.mxu0 0.0
      %2331 = vmatprep.subr.mxu0 0.0
      %2332 = vmatpush2.msra.mxu0 0.0
      %2333 = vmatprep.subr.mxu0 0.0
      %2334 = vmatpush2.msra.mxu0 0.0
      %2335 = vmatprep.subr.mxu0 0.0
      %2336 = vmatpush2.msra.mxu0 0.0
      %2337 = vmatprep.subr.mxu0 0.0
      %2338 = vmatpush2.msra.mxu0 0.0
      %2339 = vmatprep.subr.mxu0 0.0
      %2340 = vmatpush2.msra.mxu0 0.0
      %2341 = vmatprep.subr.mxu0 0.0
      %2342 = vmatpush2.msra.mxu0 0.0
      %2343 = vmatprep.subr.mxu0 0.0
      %2344 = vmatpush2.msra.mxu0 0.0
      %2345 = vmatprep.mubr.f32.mxu0 0.0
      %v2346 = vand.u32 %v2275, 4294901760
      %v2347 = vsub.f32 %v2275, %v2346
      %v2348 = vand.u32 %v2347, 4294901760
      %v2349 = vsub.f32 %v2347, %v2348
      %v2350 = vand.u32 %v2349, 4294901760
      %2351 = vmatmul.mubr.f32.gmra.mxu0 %v2350
      %v2352 = vpop.f32.mrf.mxu0
      %v2353 = vadd.f32 0.0, %v2352
      %v2354 = vpop.f32.mrf.mxu0
      %2355 = vdwg.mxu0
      %2356 = vmatprep.subr.mxu0 0.0
      %2357 = vmatpush1.msra.mxu0 0.0
      %2358 = vmatprep.subr.mxu0 0.0
      %2359 = vmatpush1.msra.mxu0 0.0
      %2360 = vmatprep.subr.mxu0 0.0
      %2361 = vmatpush1.msra.mxu0 0.0
      %2362 = vmatprep.subr.mxu0 0.0
      %2363 = vmatpush1.msra.mxu0 0.0
      %2364 = vmatprep.subr.mxu0 0.0
      %2365 = vmatpush1.msra.mxu0 0.0
      %2366 = vmatprep.subr.mxu0 0.0
      %2367 = vmatpush1.msra.mxu0 0.0
      %2368 = vmatprep.subr.mxu0 0.0
      %2369 = vmatpush1.msra.mxu0 0.0
      %2370 = vmatprep.subr.mxu0 0.0
      %2371 = vmatpush1.msra.mxu0 0.0
      %2372 = vmatprep.subr.mxu0 0.0
      %2373 = vmatpush1.msra.mxu0 0.0
      %2374 = vmatprep.subr.mxu0 0.0
      %2375 = vmatpush1.msra.mxu0 0.0
      %2376 = vmatprep.subr.mxu0 0.0
      %2377 = vmatpush1.msra.mxu0 0.0
      %2378 = vmatprep.subr.mxu0 0.0
      %2379 = vmatpush1.msra.mxu0 0.0
      %2380 = vmatprep.subr.mxu0 0.0
      %2381 = vmatpush1.msra.mxu0 0.0
      %2382 = vmatprep.subr.mxu0 0.0
      %2383 = vmatpush1.msra.mxu0 0.0
      %2384 = vmatprep.subr.mxu0 0.0
      %2385 = vmatpush1.msra.mxu0 0.0
      %2386 = vmatprep.subr.mxu0 0.0
      %v2387 = vand.u32 %v2278, 4294901760
      %v2388 = vsub.f32 %v2278, %v2387
      %v2389 = vand.u32 %v2388, 4294901760
      %v2390 = vsub.f32 %v2388, %v2389
      %v2391 = vand.u32 %v2390, 4294901760
      %2392 = vmatpush1.msra.mxu0 %v2391
      %2393 = vmatprep.subr.mxu0 0.0
      %2394 = vmatpush2.msra.mxu0 0.0
      %2395 = vmatprep.subr.mxu0 0.0
      %2396 = vmatpush2.msra.mxu0 0.0
      %2397 = vmatprep.subr.mxu0 0.0
      %2398 = vmatpush2.msra.mxu0 0.0
      %2399 = vmatprep.subr.mxu0 0.0
      %2400 = vmatpush2.msra.mxu0 0.0
      %2401 = vmatprep.subr.mxu0 0.0
      %2402 = vmatpush2.msra.mxu0 0.0
      %2403 = vmatprep.subr.mxu0 0.0
      %2404 = vmatpush2.msra.mxu0 0.0
      %2405 = vmatprep.subr.mxu0 0.0
      %2406 = vmatpush2.msra.mxu0 0.0
      %2407 = vmatprep.subr.mxu0 0.0
      %2408 = vmatpush2.msra.mxu0 0.0
      %2409 = vmatprep.subr.mxu0 0.0
      %2410 = vmatpush2.msra.mxu0 0.0
      %2411 = vmatprep.subr.mxu0 0.0
      %2412 = vmatpush2.msra.mxu0 0.0
      %2413 = vmatprep.subr.mxu0 0.0
      %2414 = vmatpush2.msra.mxu0 0.0
      %2415 = vmatprep.subr.mxu0 0.0
      %2416 = vmatpush2.msra.mxu0 0.0
      %2417 = vmatprep.subr.mxu0 0.0
      %2418 = vmatpush2.msra.mxu0 0.0
      %2419 = vmatprep.subr.mxu0 0.0
      %2420 = vmatpush2.msra.mxu0 0.0
      %2421 = vmatprep.subr.mxu0 0.0
      %2422 = vmatpush2.msra.mxu0 0.0
      %2423 = vmatprep.subr.mxu0 0.0
      %2424 = vmatpush2.msra.mxu0 0.0
      %2425 = vmatprep.mubr.f32.mxu0 0.0
      %v2426 = vand.u32 %v2275, 4294901760
      %2427 = vmatmul.mubr.f32.gmra.mxu0 %v2426
      %v2428 = vpop.f32.mrf.mxu0
      %v2429 = vadd.f32 %v2353, %v2428
      %v2430 = vpop.f32.mrf.mxu0
      %2431 = vdwg.mxu0
      %2432 = vmatprep.subr.mxu0 0.0
      %2433 = vmatpush1.msra.mxu0 0.0
      %2434 = vmatprep.subr.mxu0 0.0
      %2435 = vmatpush1.msra.mxu0 0.0
      %2436 = vmatprep.subr.mxu0 0.0
      %2437 = vmatpush1.msra.mxu0 0.0
      %2438 = vmatprep.subr.mxu0 0.0
      %2439 = vmatpush1.msra.mxu0 0.0
      %2440 = vmatprep.subr.mxu0 0.0
      %2441 = vmatpush1.msra.mxu0 0.0
      %2442 = vmatprep.subr.mxu0 0.0
      %2443 = vmatpush1.msra.mxu0 0.0
      %2444 = vmatprep.subr.mxu0 0.0
      %2445 = vmatpush1.msra.mxu0 0.0
      %2446 = vmatprep.subr.mxu0 0.0
      %2447 = vmatpush1.msra.mxu0 0.0
      %2448 = vmatprep.subr.mxu0 0.0
      %2449 = vmatpush1.msra.mxu0 0.0
      %2450 = vmatprep.subr.mxu0 0.0
      %2451 = vmatpush1.msra.mxu0 0.0
      %2452 = vmatprep.subr.mxu0 0.0
      %2453 = vmatpush1.msra.mxu0 0.0
      %2454 = vmatprep.subr.mxu0 0.0
      %2455 = vmatpush1.msra.mxu0 0.0
      %2456 = vmatprep.subr.mxu0 0.0
      %2457 = vmatpush1.msra.mxu0 0.0
      %2458 = vmatprep.subr.mxu0 0.0
      %2459 = vmatpush1.msra.mxu0 0.0
      %2460 = vmatprep.subr.mxu0 0.0
      %2461 = vmatpush1.msra.mxu0 0.0
      %2462 = vmatprep.subr.mxu0 0.0
      %v2463 = vand.u32 %v2278, 4294901760
      %v2464 = vsub.f32 %v2278, %v2463
      %2465 = vmatpush1.msra.mxu0 %v2464
      %2466 = vmatprep.subr.mxu0 0.0
      %2467 = vmatpush2.msra.mxu0 0.0
      %2468 = vmatprep.subr.mxu0 0.0
      %2469 = vmatpush2.msra.mxu0 0.0
      %2470 = vmatprep.subr.mxu0 0.0
      %2471 = vmatpush2.msra.mxu0 0.0
      %2472 = vmatprep.subr.mxu0 0.0
      %2473 = vmatpush2.msra.mxu0 0.0
      %2474 = vmatprep.subr.mxu0 0.0
      %2475 = vmatpush2.msra.mxu0 0.0
      %2476 = vmatprep.subr.mxu0 0.0
      %2477 = vmatpush2.msra.mxu0 0.0
      %2478 = vmatprep.subr.mxu0 0.0
      %2479 = vmatpush2.msra.mxu0 0.0
      %2480 = vmatprep.subr.mxu0 0.0
      %2481 = vmatpush2.msra.mxu0 0.0
      %2482 = vmatprep.subr.mxu0 0.0
      %2483 = vmatpush2.msra.mxu0 0.0
      %2484 = vmatprep.subr.mxu0 0.0
      %2485 = vmatpush2.msra.mxu0 0.0
      %2486 = vmatprep.subr.mxu0 0.0
      %2487 = vmatpush2.msra.mxu0 0.0
      %2488 = vmatprep.subr.mxu0 0.0
      %2489 = vmatpush2.msra.mxu0 0.0
      %2490 = vmatprep.subr.mxu0 0.0
      %2491 = vmatpush2.msra.mxu0 0.0
      %2492 = vmatprep.subr.mxu0 0.0
      %2493 = vmatpush2.msra.mxu0 0.0
      %2494 = vmatprep.subr.mxu0 0.0
      %2495 = vmatpush2.msra.mxu0 0.0
      %2496 = vmatprep.subr.mxu0 0.0
      %2497 = vmatpush2.msra.mxu0 0.0
      %2498 = vmatprep.mubr.f32.mxu0 0.0
      %v2499 = vand.u32 %v2275, 4294901760
      %v2500 = vsub.f32 %v2275, %v2499
      %2501 = vmatmul.mubr.f32.gmra.mxu0 %v2500
      %v2502 = vpop.f32.mrf.mxu0
      %v2503 = vadd.f32 %v2429, %v2502
      %v2504 = vpop.f32.mrf.mxu0
      %2505 = vdwg.mxu0
      %2506 = vmatprep.subr.mxu0 0.0
      %2507 = vmatpush1.msra.mxu0 0.0
      %2508 = vmatprep.subr.mxu0 0.0
      %2509 = vmatpush1.msra.mxu0 0.0
      %2510 = vmatprep.subr.mxu0 0.0
      %2511 = vmatpush1.msra.mxu0 0.0
      %2512 = vmatprep.subr.mxu0 0.0
      %2513 = vmatpush1.msra.mxu0 0.0
      %2514 = vmatprep.subr.mxu0 0.0
      %2515 = vmatpush1.msra.mxu0 0.0
      %2516 = vmatprep.subr.mxu0 0.0
      %2517 = vmatpush1.msra.mxu0 0.0
      %2518 = vmatprep.subr.mxu0 0.0
      %2519 = vmatpush1.msra.mxu0 0.0
      %2520 = vmatprep.subr.mxu0 0.0
      %2521 = vmatpush1.msra.mxu0 0.0
      %2522 = vmatprep.subr.mxu0 0.0
      %2523 = vmatpush1.msra.mxu0 0.0
      %2524 = vmatprep.subr.mxu0 0.0
      %2525 = vmatpush1.msra.mxu0 0.0
      %2526 = vmatprep.subr.mxu0 0.0
      %2527 = vmatpush1.msra.mxu0 0.0
      %2528 = vmatprep.subr.mxu0 0.0
      %2529 = vmatpush1.msra.mxu0 0.0
      %2530 = vmatprep.subr.mxu0 0.0
      %2531 = vmatpush1.msra.mxu0 0.0
      %2532 = vmatprep.subr.mxu0 0.0
      %2533 = vmatpush1.msra.mxu0 0.0
      %2534 = vmatprep.subr.mxu0 0.0
      %2535 = vmatpush1.msra.mxu0 0.0
      %2536 = vmatprep.subr.mxu0 0.0
      %v2537 = vand.u32 %v2278, 4294901760
      %2538 = vmatpush1.msra.mxu0 %v2537
      %2539 = vmatprep.subr.mxu0 0.0
      %2540 = vmatpush2.msra.mxu0 0.0
      %2541 = vmatprep.subr.mxu0 0.0
      %2542 = vmatpush2.msra.mxu0 0.0
      %2543 = vmatprep.subr.mxu0 0.0
      %2544 = vmatpush2.msra.mxu0 0.0
      %2545 = vmatprep.subr.mxu0 0.0
      %2546 = vmatpush2.msra.mxu0 0.0
      %2547 = vmatprep.subr.mxu0 0.0
      %2548 = vmatpush2.msra.mxu0 0.0
      %2549 = vmatprep.subr.mxu0 0.0
      %2550 = vmatpush2.msra.mxu0 0.0
      %2551 = vmatprep.subr.mxu0 0.0
      %2552 = vmatpush2.msra.mxu0 0.0
      %2553 = vmatprep.subr.mxu0 0.0
      %2554 = vmatpush2.msra.mxu0 0.0
      %2555 = vmatprep.subr.mxu0 0.0
      %2556 = vmatpush2.msra.mxu0 0.0
      %2557 = vmatprep.subr.mxu0 0.0
      %2558 = vmatpush2.msra.mxu0 0.0
      %2559 = vmatprep.subr.mxu0 0.0
      %2560 = vmatpush2.msra.mxu0 0.0
      %2561 = vmatprep.subr.mxu0 0.0
      %2562 = vmatpush2.msra.mxu0 0.0
      %2563 = vmatprep.subr.mxu0 0.0
      %2564 = vmatpush2.msra.mxu0 0.0
      %2565 = vmatprep.subr.mxu0 0.0
      %2566 = vmatpush2.msra.mxu0 0.0
      %2567 = vmatprep.subr.mxu0 0.0
      %2568 = vmatpush2.msra.mxu0 0.0
      %2569 = vmatprep.subr.mxu0 0.0
      %2570 = vmatpush2.msra.mxu0 0.0
      %2571 = vmatprep.mubr.f32.mxu0 0.0
      %v2572 = vand.u32 %v2275, 4294901760
      %v2573 = vsub.f32 %v2275, %v2572
      %v2574 = vand.u32 %v2573, 4294901760
      %2575 = vmatmul.mubr.f32.gmra.mxu0 %v2574
      %v2576 = vpop.f32.mrf.mxu0
      %v2577 = vadd.f32 %v2503, %v2576
      %v2578 = vpop.f32.mrf.mxu0
      %2579 = vdwg.mxu0
      %2580 = vmatprep.subr.mxu0 0.0
      %2581 = vmatpush1.msra.mxu0 0.0
      %2582 = vmatprep.subr.mxu0 0.0
      %2583 = vmatpush1.msra.mxu0 0.0
      %2584 = vmatprep.subr.mxu0 0.0
      %2585 = vmatpush1.msra.mxu0 0.0
      %2586 = vmatprep.subr.mxu0 0.0
      %2587 = vmatpush1.msra.mxu0 0.0
      %2588 = vmatprep.subr.mxu0 0.0
      %2589 = vmatpush1.msra.mxu0 0.0
      %2590 = vmatprep.subr.mxu0 0.0
      %2591 = vmatpush1.msra.mxu0 0.0
      %2592 = vmatprep.subr.mxu0 0.0
      %2593 = vmatpush1.msra.mxu0 0.0
      %2594 = vmatprep.subr.mxu0 0.0
      %2595 = vmatpush1.msra.mxu0 0.0
      %2596 = vmatprep.subr.mxu0 0.0
      %2597 = vmatpush1.msra.mxu0 0.0
      %2598 = vmatprep.subr.mxu0 0.0
      %2599 = vmatpush1.msra.mxu0 0.0
      %2600 = vmatprep.subr.mxu0 0.0
      %2601 = vmatpush1.msra.mxu0 0.0
      %2602 = vmatprep.subr.mxu0 0.0
      %2603 = vmatpush1.msra.mxu0 0.0
      %2604 = vmatprep.subr.mxu0 0.0
      %2605 = vmatpush1.msra.mxu0 0.0
      %2606 = vmatprep.subr.mxu0 0.0
      %2607 = vmatpush1.msra.mxu0 0.0
      %2608 = vmatprep.subr.mxu0 0.0
      %2609 = vmatpush1.msra.mxu0 0.0
      %2610 = vmatprep.subr.mxu0 0.0
      %v2611 = vand.u32 %v2278, 4294901760
      %v2612 = vsub.f32 %v2278, %v2611
      %v2613 = vand.u32 %v2612, 4294901760
      %2614 = vmatpush1.msra.mxu0 %v2613
      %2615 = vmatprep.subr.mxu0 0.0
      %2616 = vmatpush2.msra.mxu0 0.0
      %2617 = vmatprep.subr.mxu0 0.0
      %2618 = vmatpush2.msra.mxu0 0.0
      %2619 = vmatprep.subr.mxu0 0.0
      %2620 = vmatpush2.msra.mxu0 0.0
      %2621 = vmatprep.subr.mxu0 0.0
      %2622 = vmatpush2.msra.mxu0 0.0
      %2623 = vmatprep.subr.mxu0 0.0
      %2624 = vmatpush2.msra.mxu0 0.0
      %2625 = vmatprep.subr.mxu0 0.0
      %2626 = vmatpush2.msra.mxu0 0.0
      %2627 = vmatprep.subr.mxu0 0.0
      %2628 = vmatpush2.msra.mxu0 0.0
      %2629 = vmatprep.subr.mxu0 0.0
      %2630 = vmatpush2.msra.mxu0 0.0
      %2631 = vmatprep.subr.mxu0 0.0
      %2632 = vmatpush2.msra.mxu0 0.0
      %2633 = vmatprep.subr.mxu0 0.0
      %2634 = vmatpush2.msra.mxu0 0.0
      %2635 = vmatprep.subr.mxu0 0.0
      %2636 = vmatpush2.msra.mxu0 0.0
      %2637 = vmatprep.subr.mxu0 0.0
      %2638 = vmatpush2.msra.mxu0 0.0
      %2639 = vmatprep.subr.mxu0 0.0
      %2640 = vmatpush2.msra.mxu0 0.0
      %2641 = vmatprep.subr.mxu0 0.0
      %2642 = vmatpush2.msra.mxu0 0.0
      %2643 = vmatprep.subr.mxu0 0.0
      %2644 = vmatpush2.msra.mxu0 0.0
      %2645 = vmatprep.subr.mxu0 0.0
      %2646 = vmatpush2.msra.mxu0 0.0
      %2647 = vmatprep.mubr.f32.mxu0 0.0
      %v2648 = vand.u32 %v2275, 4294901760
      %2649 = vmatmul.mubr.f32.gmra.mxu0 %v2648
      %v2650 = vpop.f32.mrf.mxu0
      %v2651 = vadd.f32 %v2577, %v2650
      %v2652 = vpop.f32.mrf.mxu0
      %2653 = vdwg.mxu0
      %2654 = vmatprep.subr.mxu0 0.0
      %2655 = vmatpush1.msra.mxu0 0.0
      %2656 = vmatprep.subr.mxu0 0.0
      %2657 = vmatpush1.msra.mxu0 0.0
      %2658 = vmatprep.subr.mxu0 0.0
      %2659 = vmatpush1.msra.mxu0 0.0
      %2660 = vmatprep.subr.mxu0 0.0
      %2661 = vmatpush1.msra.mxu0 0.0
      %2662 = vmatprep.subr.mxu0 0.0
      %2663 = vmatpush1.msra.mxu0 0.0
      %2664 = vmatprep.subr.mxu0 0.0
      %2665 = vmatpush1.msra.mxu0 0.0
      %2666 = vmatprep.subr.mxu0 0.0
      %2667 = vmatpush1.msra.mxu0 0.0
      %2668 = vmatprep.subr.mxu0 0.0
      %2669 = vmatpush1.msra.mxu0 0.0
      %2670 = vmatprep.subr.mxu0 0.0
      %2671 = vmatpush1.msra.mxu0 0.0
      %2672 = vmatprep.subr.mxu0 0.0
      %2673 = vmatpush1.msra.mxu0 0.0
      %2674 = vmatprep.subr.mxu0 0.0
      %2675 = vmatpush1.msra.mxu0 0.0
      %2676 = vmatprep.subr.mxu0 0.0
      %2677 = vmatpush1.msra.mxu0 0.0
      %2678 = vmatprep.subr.mxu0 0.0
      %2679 = vmatpush1.msra.mxu0 0.0
      %2680 = vmatprep.subr.mxu0 0.0
      %2681 = vmatpush1.msra.mxu0 0.0
      %2682 = vmatprep.subr.mxu0 0.0
      %2683 = vmatpush1.msra.mxu0 0.0
      %2684 = vmatprep.subr.mxu0 0.0
      %v2685 = vand.u32 %v2278, 4294901760
      %2686 = vmatpush1.msra.mxu0 %v2685
      %2687 = vmatprep.subr.mxu0 0.0
      %2688 = vmatpush2.msra.mxu0 0.0
      %2689 = vmatprep.subr.mxu0 0.0
      %2690 = vmatpush2.msra.mxu0 0.0
      %2691 = vmatprep.subr.mxu0 0.0
      %2692 = vmatpush2.msra.mxu0 0.0
      %2693 = vmatprep.subr.mxu0 0.0
      %2694 = vmatpush2.msra.mxu0 0.0
      %2695 = vmatprep.subr.mxu0 0.0
      %2696 = vmatpush2.msra.mxu0 0.0
      %2697 = vmatprep.subr.mxu0 0.0
      %2698 = vmatpush2.msra.mxu0 0.0
      %2699 = vmatprep.subr.mxu0 0.0
      %2700 = vmatpush2.msra.mxu0 0.0
      %2701 = vmatprep.subr.mxu0 0.0
      %2702 = vmatpush2.msra.mxu0 0.0
      %2703 = vmatprep.subr.mxu0 0.0
      %2704 = vmatpush2.msra.mxu0 0.0
      %2705 = vmatprep.subr.mxu0 0.0
      %2706 = vmatpush2.msra.mxu0 0.0
      %2707 = vmatprep.subr.mxu0 0.0
      %2708 = vmatpush2.msra.mxu0 0.0
      %2709 = vmatprep.subr.mxu0 0.0
      %2710 = vmatpush2.msra.mxu0 0.0
      %2711 = vmatprep.subr.mxu0 0.0
      %2712 = vmatpush2.msra.mxu0 0.0
      %2713 = vmatprep.subr.mxu0 0.0
      %2714 = vmatpush2.msra.mxu0 0.0
      %2715 = vmatprep.subr.mxu0 0.0
      %2716 = vmatpush2.msra.mxu0 0.0
      %2717 = vmatprep.subr.mxu0 0.0
      %2718 = vmatpush2.msra.mxu0 0.0
      %2719 = vmatprep.mubr.f32.mxu0 0.0
      %v2720 = vand.u32 %v2275, 4294901760
      %2721 = vmatmul.mubr.f32.gmra.mxu0 %v2720
      %v2722 = vpop.f32.mrf.mxu0
      %v2723 = vadd.f32 %v2651, %v2722
      %v2724 = vpop.f32.mrf.mxu0
      %2725 = vdwg.mxu0
      %v2727 = vsel %vm295, %v1824, 0
      %2729 = vmatprep.subr.mxu0 0.0
      %2730 = vmatpush1.msra.mxu0 0.0
      %2731 = vmatprep.subr.mxu0 0.0
      %2732 = vmatpush1.msra.mxu0 0.0
      %2733 = vmatprep.subr.mxu0 0.0
      %2734 = vmatpush1.msra.mxu0 0.0
      %2735 = vmatprep.subr.mxu0 0.0
      %2736 = vmatpush1.msra.mxu0 0.0
      %2737 = vmatprep.subr.mxu0 0.0
      %2738 = vmatpush1.msra.mxu0 0.0
      %2739 = vmatprep.subr.mxu0 0.0
      %2740 = vmatpush1.msra.mxu0 0.0
      %2741 = vmatprep.subr.mxu0 0.0
      %2742 = vmatpush1.msra.mxu0 0.0
      %2743 = vmatprep.subr.mxu0 0.0
      %2744 = vmatpush1.msra.mxu0 0.0
      %2745 = vmatprep.subr.mxu0 0.0
      %2746 = vmatpush1.msra.mxu0 0.0
      %2747 = vmatprep.subr.mxu0 0.0
      %2748 = vmatpush1.msra.mxu0 0.0
      %2749 = vmatprep.subr.mxu0 0.0
      %2750 = vmatpush1.msra.mxu0 0.0
      %2751 = vmatprep.subr.mxu0 0.0
      %2752 = vmatpush1.msra.mxu0 0.0
      %2753 = vmatprep.subr.mxu0 0.0
      %2754 = vmatpush1.msra.mxu0 0.0
      %2755 = vmatprep.subr.mxu0 0.0
      %2756 = vmatpush1.msra.mxu0 0.0
      %2757 = vmatprep.subr.mxu0 0.0
      %2758 = vmatpush1.msra.mxu0 0.0
      %2759 = vmatprep.subr.mxu0 0.0
      %v2760 = vand.u32 %v2727, 4294901760
      %2761 = vmatpush1.msra.mxu0 %v2760
      %2762 = vmatprep.subr.mxu0 0.0
      %2763 = vmatpush2.msra.mxu0 0.0
      %2764 = vmatprep.subr.mxu0 0.0
      %2765 = vmatpush2.msra.mxu0 0.0
      %2766 = vmatprep.subr.mxu0 0.0
      %2767 = vmatpush2.msra.mxu0 0.0
      %2768 = vmatprep.subr.mxu0 0.0
      %2769 = vmatpush2.msra.mxu0 0.0
      %2770 = vmatprep.subr.mxu0 0.0
      %2771 = vmatpush2.msra.mxu0 0.0
      %2772 = vmatprep.subr.mxu0 0.0
      %2773 = vmatpush2.msra.mxu0 0.0
      %2774 = vmatprep.subr.mxu0 0.0
      %2775 = vmatpush2.msra.mxu0 0.0
      %2776 = vmatprep.subr.mxu0 0.0
      %2777 = vmatpush2.msra.mxu0 0.0
      %2778 = vmatprep.subr.mxu0 0.0
      %2779 = vmatpush2.msra.mxu0 0.0
      %2780 = vmatprep.subr.mxu0 0.0
      %2781 = vmatpush2.msra.mxu0 0.0
      %2782 = vmatprep.subr.mxu0 0.0
      %2783 = vmatpush2.msra.mxu0 0.0
      %2784 = vmatprep.subr.mxu0 0.0
      %2785 = vmatpush2.msra.mxu0 0.0
      %2786 = vmatprep.subr.mxu0 0.0
      %2787 = vmatpush2.msra.mxu0 0.0
      %2788 = vmatprep.subr.mxu0 0.0
      %2789 = vmatpush2.msra.mxu0 0.0
      %2790 = vmatprep.subr.mxu0 0.0
      %2791 = vmatpush2.msra.mxu0 0.0
      %2792 = vmatprep.subr.mxu0 0.0
      %2793 = vmatpush2.msra.mxu0 0.0
      %2794 = vmatprep.mubr.f32.mxu0 0.0
      %v2795 = vand.u32 %v2275, 4294901760
      %v2796 = vsub.f32 %v2275, %v2795
      %v2797 = vand.u32 %v2796, 4294901760
      %v2798 = vsub.f32 %v2796, %v2797
      %v2799 = vand.u32 %v2798, 4294901760
      %2800 = vmatmul.mubr.f32.gmra.mxu0 %v2799
      %v2801 = vpop.f32.mrf.mxu0
      %v2802 = vadd.f32 %v2723, %v2801
      %v2803 = vpop.f32.mrf.mxu0
      %2804 = vdwg.mxu0
      %2805 = vmatprep.subr.mxu0 0.0
      %2806 = vmatpush1.msra.mxu0 0.0
      %2807 = vmatprep.subr.mxu0 0.0
      %2808 = vmatpush1.msra.mxu0 0.0
      %2809 = vmatprep.subr.mxu0 0.0
      %2810 = vmatpush1.msra.mxu0 0.0
      %2811 = vmatprep.subr.mxu0 0.0
      %2812 = vmatpush1.msra.mxu0 0.0
      %2813 = vmatprep.subr.mxu0 0.0
      %2814 = vmatpush1.msra.mxu0 0.0
      %2815 = vmatprep.subr.mxu0 0.0
      %2816 = vmatpush1.msra.mxu0 0.0
      %2817 = vmatprep.subr.mxu0 0.0
      %2818 = vmatpush1.msra.mxu0 0.0
      %2819 = vmatprep.subr.mxu0 0.0
      %2820 = vmatpush1.msra.mxu0 0.0
      %2821 = vmatprep.subr.mxu0 0.0
      %2822 = vmatpush1.msra.mxu0 0.0
      %2823 = vmatprep.subr.mxu0 0.0
      %2824 = vmatpush1.msra.mxu0 0.0
      %2825 = vmatprep.subr.mxu0 0.0
      %2826 = vmatpush1.msra.mxu0 0.0
      %2827 = vmatprep.subr.mxu0 0.0
      %2828 = vmatpush1.msra.mxu0 0.0
      %2829 = vmatprep.subr.mxu0 0.0
      %2830 = vmatpush1.msra.mxu0 0.0
      %2831 = vmatprep.subr.mxu0 0.0
      %2832 = vmatpush1.msra.mxu0 0.0
      %2833 = vmatprep.subr.mxu0 0.0
      %2834 = vmatpush1.msra.mxu0 0.0
      %2835 = vmatprep.subr.mxu0 0.0
      %v2836 = vand.u32 %v2727, 4294901760
      %v2837 = vsub.f32 %v2727, %v2836
      %v2838 = vand.u32 %v2837, 4294901760
      %v2839 = vsub.f32 %v2837, %v2838
      %v2840 = vand.u32 %v2839, 4294901760
      %2841 = vmatpush1.msra.mxu0 %v2840
      %2842 = vmatprep.subr.mxu0 0.0
      %2843 = vmatpush2.msra.mxu0 0.0
      %2844 = vmatprep.subr.mxu0 0.0
      %2845 = vmatpush2.msra.mxu0 0.0
      %2846 = vmatprep.subr.mxu0 0.0
      %2847 = vmatpush2.msra.mxu0 0.0
      %2848 = vmatprep.subr.mxu0 0.0
      %2849 = vmatpush2.msra.mxu0 0.0
      %2850 = vmatprep.subr.mxu0 0.0
      %2851 = vmatpush2.msra.mxu0 0.0
      %2852 = vmatprep.subr.mxu0 0.0
      %2853 = vmatpush2.msra.mxu0 0.0
      %2854 = vmatprep.subr.mxu0 0.0
      %2855 = vmatpush2.msra.mxu0 0.0
      %2856 = vmatprep.subr.mxu0 0.0
      %2857 = vmatpush2.msra.mxu0 0.0
      %2858 = vmatprep.subr.mxu0 0.0
      %2859 = vmatpush2.msra.mxu0 0.0
      %2860 = vmatprep.subr.mxu0 0.0
      %2861 = vmatpush2.msra.mxu0 0.0
      %2862 = vmatprep.subr.mxu0 0.0
      %2863 = vmatpush2.msra.mxu0 0.0
      %2864 = vmatprep.subr.mxu0 0.0
      %2865 = vmatpush2.msra.mxu0 0.0
      %2866 = vmatprep.subr.mxu0 0.0
      %2867 = vmatpush2.msra.mxu0 0.0
      %2868 = vmatprep.subr.mxu0 0.0
      %2869 = vmatpush2.msra.mxu0 0.0
      %2870 = vmatprep.subr.mxu0 0.0
      %2871 = vmatpush2.msra.mxu0 0.0
      %2872 = vmatprep.subr.mxu0 0.0
      %2873 = vmatpush2.msra.mxu0 0.0
      %2874 = vmatprep.mubr.f32.mxu0 0.0
      %v2875 = vand.u32 %v2275, 4294901760
      %2876 = vmatmul.mubr.f32.gmra.mxu0 %v2875
      %v2877 = vpop.f32.mrf.mxu0
      %v2878 = vadd.f32 %v2802, %v2877
      %v2879 = vpop.f32.mrf.mxu0
      %2880 = vdwg.mxu0
      %2881 = vmatprep.subr.mxu0 0.0
      %2882 = vmatpush1.msra.mxu0 0.0
      %2883 = vmatprep.subr.mxu0 0.0
      %2884 = vmatpush1.msra.mxu0 0.0
      %2885 = vmatprep.subr.mxu0 0.0
      %2886 = vmatpush1.msra.mxu0 0.0
      %2887 = vmatprep.subr.mxu0 0.0
      %2888 = vmatpush1.msra.mxu0 0.0
      %2889 = vmatprep.subr.mxu0 0.0
      %2890 = vmatpush1.msra.mxu0 0.0
      %2891 = vmatprep.subr.mxu0 0.0
      %2892 = vmatpush1.msra.mxu0 0.0
      %2893 = vmatprep.subr.mxu0 0.0
      %2894 = vmatpush1.msra.mxu0 0.0
      %2895 = vmatprep.subr.mxu0 0.0
      %2896 = vmatpush1.msra.mxu0 0.0
      %2897 = vmatprep.subr.mxu0 0.0
      %2898 = vmatpush1.msra.mxu0 0.0
      %2899 = vmatprep.subr.mxu0 0.0
      %2900 = vmatpush1.msra.mxu0 0.0
      %2901 = vmatprep.subr.mxu0 0.0
      %2902 = vmatpush1.msra.mxu0 0.0
      %2903 = vmatprep.subr.mxu0 0.0
      %2904 = vmatpush1.msra.mxu0 0.0
      %2905 = vmatprep.subr.mxu0 0.0
      %2906 = vmatpush1.msra.mxu0 0.0
      %2907 = vmatprep.subr.mxu0 0.0
      %2908 = vmatpush1.msra.mxu0 0.0
      %2909 = vmatprep.subr.mxu0 0.0
      %2910 = vmatpush1.msra.mxu0 0.0
      %2911 = vmatprep.subr.mxu0 0.0
      %v2912 = vand.u32 %v2727, 4294901760
      %v2913 = vsub.f32 %v2727, %v2912
      %2914 = vmatpush1.msra.mxu0 %v2913
      %2915 = vmatprep.subr.mxu0 0.0
      %2916 = vmatpush2.msra.mxu0 0.0
      %2917 = vmatprep.subr.mxu0 0.0
      %2918 = vmatpush2.msra.mxu0 0.0
      %2919 = vmatprep.subr.mxu0 0.0
      %2920 = vmatpush2.msra.mxu0 0.0
      %2921 = vmatprep.subr.mxu0 0.0
      %2922 = vmatpush2.msra.mxu0 0.0
      %2923 = vmatprep.subr.mxu0 0.0
      %2924 = vmatpush2.msra.mxu0 0.0
      %2925 = vmatprep.subr.mxu0 0.0
      %2926 = vmatpush2.msra.mxu0 0.0
      %2927 = vmatprep.subr.mxu0 0.0
      %2928 = vmatpush2.msra.mxu0 0.0
      %2929 = vmatprep.subr.mxu0 0.0
      %2930 = vmatpush2.msra.mxu0 0.0
      %2931 = vmatprep.subr.mxu0 0.0
      %2932 = vmatpush2.msra.mxu0 0.0
      %2933 = vmatprep.subr.mxu0 0.0
      %2934 = vmatpush2.msra.mxu0 0.0
      %2935 = vmatprep.subr.mxu0 0.0
      %2936 = vmatpush2.msra.mxu0 0.0
      %2937 = vmatprep.subr.mxu0 0.0
      %2938 = vmatpush2.msra.mxu0 0.0
      %2939 = vmatprep.subr.mxu0 0.0
      %2940 = vmatpush2.msra.mxu0 0.0
      %2941 = vmatprep.subr.mxu0 0.0
      %2942 = vmatpush2.msra.mxu0 0.0
      %2943 = vmatprep.subr.mxu0 0.0
      %2944 = vmatpush2.msra.mxu0 0.0
      %2945 = vmatprep.subr.mxu0 0.0
      %2946 = vmatpush2.msra.mxu0 0.0
      %2947 = vmatprep.mubr.f32.mxu0 0.0
      %v2948 = vand.u32 %v2275, 4294901760
      %v2949 = vsub.f32 %v2275, %v2948
      %2950 = vmatmul.mubr.f32.gmra.mxu0 %v2949
      %v2951 = vpop.f32.mrf.mxu0
      %v2952 = vadd.f32 %v2878, %v2951
      %v2953 = vpop.f32.mrf.mxu0
      %2954 = vdwg.mxu0
      %2955 = vmatprep.subr.mxu0 0.0
      %2956 = vmatpush1.msra.mxu0 0.0
      %2957 = vmatprep.subr.mxu0 0.0
      %2958 = vmatpush1.msra.mxu0 0.0
      %2959 = vmatprep.subr.mxu0 0.0
      %2960 = vmatpush1.msra.mxu0 0.0
      %2961 = vmatprep.subr.mxu0 0.0
      %2962 = vmatpush1.msra.mxu0 0.0
      %2963 = vmatprep.subr.mxu0 0.0
      %2964 = vmatpush1.msra.mxu0 0.0
      %2965 = vmatprep.subr.mxu0 0.0
      %2966 = vmatpush1.msra.mxu0 0.0
      %2967 = vmatprep.subr.mxu0 0.0
      %2968 = vmatpush1.msra.mxu0 0.0
      %2969 = vmatprep.subr.mxu0 0.0
      %2970 = vmatpush1.msra.mxu0 0.0
      %2971 = vmatprep.subr.mxu0 0.0
      %2972 = vmatpush1.msra.mxu0 0.0
      %2973 = vmatprep.subr.mxu0 0.0
      %2974 = vmatpush1.msra.mxu0 0.0
      %2975 = vmatprep.subr.mxu0 0.0
      %2976 = vmatpush1.msra.mxu0 0.0
      %2977 = vmatprep.subr.mxu0 0.0
      %2978 = vmatpush1.msra.mxu0 0.0
      %2979 = vmatprep.subr.mxu0 0.0
      %2980 = vmatpush1.msra.mxu0 0.0
      %2981 = vmatprep.subr.mxu0 0.0
      %2982 = vmatpush1.msra.mxu0 0.0
      %2983 = vmatprep.subr.mxu0 0.0
      %2984 = vmatpush1.msra.mxu0 0.0
      %2985 = vmatprep.subr.mxu0 0.0
      %v2986 = vand.u32 %v2727, 4294901760
      %2987 = vmatpush1.msra.mxu0 %v2986
      %2988 = vmatprep.subr.mxu0 0.0
      %2989 = vmatpush2.msra.mxu0 0.0
      %2990 = vmatprep.subr.mxu0 0.0
      %2991 = vmatpush2.msra.mxu0 0.0
      %2992 = vmatprep.subr.mxu0 0.0
      %2993 = vmatpush2.msra.mxu0 0.0
      %2994 = vmatprep.subr.mxu0 0.0
      %2995 = vmatpush2.msra.mxu0 0.0
      %2996 = vmatprep.subr.mxu0 0.0
      %2997 = vmatpush2.msra.mxu0 0.0
      %2998 = vmatprep.subr.mxu0 0.0
      %2999 = vmatpush2.msra.mxu0 0.0
      %3000 = vmatprep.subr.mxu0 0.0
      %3001 = vmatpush2.msra.mxu0 0.0
      %3002 = vmatprep.subr.mxu0 0.0
      %3003 = vmatpush2.msra.mxu0 0.0
      %3004 = vmatprep.subr.mxu0 0.0
      %3005 = vmatpush2.msra.mxu0 0.0
      %3006 = vmatprep.subr.mxu0 0.0
      %3007 = vmatpush2.msra.mxu0 0.0
      %3008 = vmatprep.subr.mxu0 0.0
      %3009 = vmatpush2.msra.mxu0 0.0
      %3010 = vmatprep.subr.mxu0 0.0
      %3011 = vmatpush2.msra.mxu0 0.0
      %3012 = vmatprep.subr.mxu0 0.0
      %3013 = vmatpush2.msra.mxu0 0.0
      %3014 = vmatprep.subr.mxu0 0.0
      %3015 = vmatpush2.msra.mxu0 0.0
      %3016 = vmatprep.subr.mxu0 0.0
      %3017 = vmatpush2.msra.mxu0 0.0
      %3018 = vmatprep.subr.mxu0 0.0
      %3019 = vmatpush2.msra.mxu0 0.0
      %3020 = vmatprep.mubr.f32.mxu0 0.0
      %v3021 = vand.u32 %v2275, 4294901760
      %v3022 = vsub.f32 %v2275, %v3021
      %v3023 = vand.u32 %v3022, 4294901760
      %3024 = vmatmul.mubr.f32.gmra.mxu0 %v3023
      %v3025 = vpop.f32.mrf.mxu0
      %v3026 = vadd.f32 %v2952, %v3025
      %v3027 = vpop.f32.mrf.mxu0
      %3028 = vdwg.mxu0
      %3029 = vmatprep.subr.mxu0 0.0
      %3030 = vmatpush1.msra.mxu0 0.0
      %3031 = vmatprep.subr.mxu0 0.0
      %3032 = vmatpush1.msra.mxu0 0.0
      %3033 = vmatprep.subr.mxu0 0.0
      %3034 = vmatpush1.msra.mxu0 0.0
      %3035 = vmatprep.subr.mxu0 0.0
      %3036 = vmatpush1.msra.mxu0 0.0
      %3037 = vmatprep.subr.mxu0 0.0
      %3038 = vmatpush1.msra.mxu0 0.0
      %3039 = vmatprep.subr.mxu0 0.0
      %3040 = vmatpush1.msra.mxu0 0.0
      %3041 = vmatprep.subr.mxu0 0.0
      %3042 = vmatpush1.msra.mxu0 0.0
      %3043 = vmatprep.subr.mxu0 0.0
      %3044 = vmatpush1.msra.mxu0 0.0
      %3045 = vmatprep.subr.mxu0 0.0
      %3046 = vmatpush1.msra.mxu0 0.0
      %3047 = vmatprep.subr.mxu0 0.0
      %3048 = vmatpush1.msra.mxu0 0.0
      %3049 = vmatprep.subr.mxu0 0.0
      %3050 = vmatpush1.msra.mxu0 0.0
      %3051 = vmatprep.subr.mxu0 0.0
      %3052 = vmatpush1.msra.mxu0 0.0
      %3053 = vmatprep.subr.mxu0 0.0
      %3054 = vmatpush1.msra.mxu0 0.0
      %3055 = vmatprep.subr.mxu0 0.0
      %3056 = vmatpush1.msra.mxu0 0.0
      %3057 = vmatprep.subr.mxu0 0.0
      %3058 = vmatpush1.msra.mxu0 0.0
      %3059 = vmatprep.subr.mxu0 0.0
      %v3060 = vand.u32 %v2727, 4294901760
      %v3061 = vsub.f32 %v2727, %v3060
      %v3062 = vand.u32 %v3061, 4294901760
      %3063 = vmatpush1.msra.mxu0 %v3062
      %3064 = vmatprep.subr.mxu0 0.0
      %3065 = vmatpush2.msra.mxu0 0.0
      %3066 = vmatprep.subr.mxu0 0.0
      %3067 = vmatpush2.msra.mxu0 0.0
      %3068 = vmatprep.subr.mxu0 0.0
      %3069 = vmatpush2.msra.mxu0 0.0
      %3070 = vmatprep.subr.mxu0 0.0
      %3071 = vmatpush2.msra.mxu0 0.0
      %3072 = vmatprep.subr.mxu0 0.0
      %3073 = vmatpush2.msra.mxu0 0.0
      %3074 = vmatprep.subr.mxu0 0.0
      %3075 = vmatpush2.msra.mxu0 0.0
      %3076 = vmatprep.subr.mxu0 0.0
      %3077 = vmatpush2.msra.mxu0 0.0
      %3078 = vmatprep.subr.mxu0 0.0
      %3079 = vmatpush2.msra.mxu0 0.0
      %3080 = vmatprep.subr.mxu0 0.0
      %3081 = vmatpush2.msra.mxu0 0.0
      %3082 = vmatprep.subr.mxu0 0.0
      %3083 = vmatpush2.msra.mxu0 0.0
      %3084 = vmatprep.subr.mxu0 0.0
      %3085 = vmatpush2.msra.mxu0 0.0
      %3086 = vmatprep.subr.mxu0 0.0
      %3087 = vmatpush2.msra.mxu0 0.0
      %3088 = vmatprep.subr.mxu0 0.0
      %3089 = vmatpush2.msra.mxu0 0.0
      %3090 = vmatprep.subr.mxu0 0.0
      %3091 = vmatpush2.msra.mxu0 0.0
      %3092 = vmatprep.subr.mxu0 0.0
      %3093 = vmatpush2.msra.mxu0 0.0
      %3094 = vmatprep.subr.mxu0 0.0
      %3095 = vmatpush2.msra.mxu0 0.0
      %3096 = vmatprep.mubr.f32.mxu0 0.0
      %v3097 = vand.u32 %v2275, 4294901760
      %3098 = vmatmul.mubr.f32.gmra.mxu0 %v3097
      %v3099 = vpop.f32.mrf.mxu0
      %v3100 = vadd.f32 %v3026, %v3099
      %v3101 = vpop.f32.mrf.mxu0
      %3102 = vdwg.mxu0
      %3103 = vmatprep.subr.mxu0 0.0
      %3104 = vmatpush1.msra.mxu0 0.0
      %3105 = vmatprep.subr.mxu0 0.0
      %3106 = vmatpush1.msra.mxu0 0.0
      %3107 = vmatprep.subr.mxu0 0.0
      %3108 = vmatpush1.msra.mxu0 0.0
      %3109 = vmatprep.subr.mxu0 0.0
      %3110 = vmatpush1.msra.mxu0 0.0
      %3111 = vmatprep.subr.mxu0 0.0
      %3112 = vmatpush1.msra.mxu0 0.0
      %3113 = vmatprep.subr.mxu0 0.0
      %3114 = vmatpush1.msra.mxu0 0.0
      %3115 = vmatprep.subr.mxu0 0.0
      %3116 = vmatpush1.msra.mxu0 0.0
      %3117 = vmatprep.subr.mxu0 0.0
      %3118 = vmatpush1.msra.mxu0 0.0
      %3119 = vmatprep.subr.mxu0 0.0
      %3120 = vmatpush1.msra.mxu0 0.0
      %3121 = vmatprep.subr.mxu0 0.0
      %3122 = vmatpush1.msra.mxu0 0.0
      %3123 = vmatprep.subr.mxu0 0.0
      %3124 = vmatpush1.msra.mxu0 0.0
      %3125 = vmatprep.subr.mxu0 0.0
      %3126 = vmatpush1.msra.mxu0 0.0
      %3127 = vmatprep.subr.mxu0 0.0
      %3128 = vmatpush1.msra.mxu0 0.0
      %3129 = vmatprep.subr.mxu0 0.0
      %3130 = vmatpush1.msra.mxu0 0.0
      %3131 = vmatprep.subr.mxu0 0.0
      %3132 = vmatpush1.msra.mxu0 0.0
      %3133 = vmatprep.subr.mxu0 0.0
      %v3134 = vand.u32 %v2727, 4294901760
      %3135 = vmatpush1.msra.mxu0 %v3134
      %3136 = vmatprep.subr.mxu0 0.0
      %3137 = vmatpush2.msra.mxu0 0.0
      %3138 = vmatprep.subr.mxu0 0.0
      %3139 = vmatpush2.msra.mxu0 0.0
      %3140 = vmatprep.subr.mxu0 0.0
      %3141 = vmatpush2.msra.mxu0 0.0
      %3142 = vmatprep.subr.mxu0 0.0
      %3143 = vmatpush2.msra.mxu0 0.0
      %3144 = vmatprep.subr.mxu0 0.0
      %3145 = vmatpush2.msra.mxu0 0.0
      %3146 = vmatprep.subr.mxu0 0.0
      %3147 = vmatpush2.msra.mxu0 0.0
      %3148 = vmatprep.subr.mxu0 0.0
      %3149 = vmatpush2.msra.mxu0 0.0
      %3150 = vmatprep.subr.mxu0 0.0
      %3151 = vmatpush2.msra.mxu0 0.0
      %3152 = vmatprep.subr.mxu0 0.0
      %3153 = vmatpush2.msra.mxu0 0.0
      %3154 = vmatprep.subr.mxu0 0.0
      %3155 = vmatpush2.msra.mxu0 0.0
      %3156 = vmatprep.subr.mxu0 0.0
      %3157 = vmatpush2.msra.mxu0 0.0
      %3158 = vmatprep.subr.mxu0 0.0
      %3159 = vmatpush2.msra.mxu0 0.0
      %3160 = vmatprep.subr.mxu0 0.0
      %3161 = vmatpush2.msra.mxu0 0.0
      %3162 = vmatprep.subr.mxu0 0.0
      %3163 = vmatpush2.msra.mxu0 0.0
      %3164 = vmatprep.subr.mxu0 0.0
      %3165 = vmatpush2.msra.mxu0 0.0
      %3166 = vmatprep.subr.mxu0 0.0
      %3167 = vmatpush2.msra.mxu0 0.0
      %3168 = vmatprep.mubr.f32.mxu0 0.0
      %v3169 = vand.u32 %v2275, 4294901760
      %3170 = vmatmul.mubr.f32.gmra.mxu0 %v3169
      %v3171 = vpop.f32.mrf.mxu0
      %v3172 = vadd.f32 %v3100, %v3171
      %v3173 = vpop.f32.mrf.mxu0
      %3174 = vdwg.mxu0
      %v3175 = vxor.u32 %v3172, 2147483648
      %v3176 = vmul.f32 %v3175, 1.442695
      %v3177 = vpow.pop %v3176
      %v3178 = vadd.f32 %v3177, 1.0
      %v3179 = vrcp.pop %v3178
      %v3180 = vmul.f32 1.0, %v3179
      %3182 = vset.pattern.permute.xlu0 0
      %3183 = vperm.xlu0 %3182, %v3180
      %v3184 = vpop.permute.xlu0 %3183
      %v3186 = vmul.f32 %v1362, %v3184
      %v3187 = vmul.f32 %v1364, %v3184
      %v3188 = vrot.slane %v3186, 4
      %v3189 = vadd.f32 %v3186, %v3188
      %v3190 = vrot.slane %v3189, 2
      %v3191 = vadd.f32 %v3189, %v3190
      %v3192 = vrot.slane %v3191, 1
      %v3193 = vadd.f32 %v3191, %v3192
      %v3194 = vrot.slane %v3187, 4
      %v3195 = vadd.f32 %v3187, %v3194
      %v3196 = vrot.slane %v3195, 2
      %v3197 = vadd.f32 %v3195, %v3196
      %v3198 = vrot.slane %v3197, 1
      %v3199 = vadd.f32 %v3197, %v3198
      %v3200 = vrcp.pop 8.0
      %v3201 = vmul.f32 %v3193, %v3200
      %v3202 = vmul.f32 %v3199, %v3200
      %v3203 = vrot.slane %v3186, 4
      %v3204 = vmax.f32 %v3186, %v3203
      %v3205 = vrot.slane %v3204, 2
      %v3206 = vmax.f32 %v3204, %v3205
      %v3207 = vrot.slane %v3206, 1
      %v3208 = vmax.f32 %v3206, %v3207
      %v3209 = vrot.slane %v3187, 4
      %v3210 = vmax.f32 %v3187, %v3209
      %v3211 = vrot.slane %v3210, 2
      %v3212 = vmax.f32 %v3210, %v3211
      %v3213 = vrot.slane %v3212, 1
      %v3214 = vmax.f32 %v3212, %v3213
      %v3215 = vld [vmem:[%s5] sm:$0xff]
      %v3216 = vld [vmem:[%s5 + $0x8] sm:$0xff]
      %v3217 = vld [vmem:[%s5 + $0x10] sm:$0xff]
      %v3218 = vld [vmem:[%s5 + $0x18] sm:$0xff]
      %v3219 = vld [vmem:[%s5 + $0x20] sm:$0xff]
      %v3220 = vld [vmem:[%s5 + $0x28] sm:$0xff]
      %v3221 = vld [vmem:[%s5 + $0x30] sm:$0xff]
      %v3222 = vld [vmem:[%s5 + $0x38] sm:$0xff]
      %v3223 = vld [vmem:[%s5 + $0x40] sm:$0xff]
      %v3224 = vld [vmem:[%s5 + $0x48] sm:$0xff]
      %v3225 = vld [vmem:[%s5 + $0x50] sm:$0xff]
      %v3226 = vld [vmem:[%s5 + $0x58] sm:$0xff]
      %v3227 = vld [vmem:[%s5 + $0x60] sm:$0xff]
      %v3228 = vld [vmem:[%s5 + $0x68] sm:$0xff]
      %v3229 = vld [vmem:[%s5 + $0x70] sm:$0xff]
      %v3230 = vld [vmem:[%s5 + $0x78] sm:$0xff]
      %v3231 = vld [vmem:[%s5 + $0x80] sm:$0xff]
      %v3232 = vld [vmem:[%s5 + $0x88] sm:$0xff]
      %v3233 = vld [vmem:[%s5 + $0x90] sm:$0xff]
      %v3234 = vld [vmem:[%s5 + $0x98] sm:$0xff]
      %v3235 = vld [vmem:[%s5 + $0xa0] sm:$0xff]
      %v3236 = vld [vmem:[%s5 + $0xa8] sm:$0xff]
      %v3237 = vld [vmem:[%s5 + $0xb0] sm:$0xff]
      %v3238 = vld [vmem:[%s5 + $0xb8] sm:$0xff]
      %v3239 = vld [vmem:[%s5 + $0xc0] sm:$0xff]
      %v3240 = vld [vmem:[%s5 + $0xc8] sm:$0xff]
      %v3241 = vld [vmem:[%s5 + $0xd0] sm:$0xff]
      %v3242 = vld [vmem:[%s5 + $0xd8] sm:$0xff]
      %v3243 = vld [vmem:[%s5 + $0xe0] sm:$0xff]
      %v3244 = vld [vmem:[%s5 + $0xe8] sm:$0xff]
      %v3245 = vld [vmem:[%s5 + $0xf0] sm:$0xff]
      %v3246 = vld [vmem:[%s5 + $0xf8] sm:$0xff]
      %v3247 = vld [vmem:[%s5 + $0x100] sm:$0xff]
      %v3248 = vld [vmem:[%s5 + $0x108] sm:$0xff]
      %v3249 = vld [vmem:[%s5 + $0x110] sm:$0xff]
      %v3250 = vld [vmem:[%s5 + $0x118] sm:$0xff]
      %v3251 = vld [vmem:[%s5 + $0x120] sm:$0xff]
      %v3252 = vld [vmem:[%s5 + $0x128] sm:$0xff]
      %v3253 = vld [vmem:[%s5 + $0x130] sm:$0xff]
      %v3254 = vld [vmem:[%s5 + $0x138] sm:$0xff]
      %v3255 = vld [vmem:[%s5 + $0x140] sm:$0xff]
      %v3256 = vld [vmem:[%s5 + $0x148] sm:$0xff]
      %v3257 = vld [vmem:[%s5 + $0x150] sm:$0xff]
      %v3258 = vld [vmem:[%s5 + $0x158] sm:$0xff]
      %v3259 = vld [vmem:[%s5 + $0x160] sm:$0xff]
      %v3260 = vld [vmem:[%s5 + $0x168] sm:$0xff]
      %v3261 = vld [vmem:[%s5 + $0x170] sm:$0xff]
      %v3262 = vld [vmem:[%s5 + $0x178] sm:$0xff]
      %v3263 = vld [vmem:[%s5 + $0x180] sm:$0xff]
      %v3264 = vld [vmem:[%s5 + $0x188] sm:$0xff]
      %v3265 = vld [vmem:[%s5 + $0x190] sm:$0xff]
      %v3266 = vld [vmem:[%s5 + $0x198] sm:$0xff]
      %v3267 = vld [vmem:[%s5 + $0x1a0] sm:$0xff]
      %v3268 = vld [vmem:[%s5 + $0x1a8] sm:$0xff]
      %v3269 = vld [vmem:[%s5 + $0x1b0] sm:$0xff]
      %v3270 = vld [vmem:[%s5 + $0x1b8] sm:$0xff]
      %v3271 = vld [vmem:[%s5 + $0x1c0] sm:$0xff]
      %v3272 = vld [vmem:[%s5 + $0x1c8] sm:$0xff]
      %v3273 = vld [vmem:[%s5 + $0x1d0] sm:$0xff]
      %v3274 = vld [vmem:[%s5 + $0x1d8] sm:$0xff]
      %v3275 = vld [vmem:[%s5 + $0x1e0] sm:$0xff]
      %v3276 = vld [vmem:[%s5 + $0x1e8] sm:$0xff]
      %v3277 = vld [vmem:[%s5 + $0x1f0] sm:$0xff]
      %v3278 = vld [vmem:[%s5 + $0x1f8] sm:$0xff]
      %s3279 = scalar_lea.vmem %s5, 512
      %v3280 = vld [vmem:[%s3279] sm:$0xff]
      %v3281 = vld [vmem:[%s3279 + $0x8] sm:$0xff]
      %v3282 = vld [vmem:[%s3279 + $0x10] sm:$0xff]
      %v3283 = vld [vmem:[%s3279 + $0x18] sm:$0xff]
      %v3284 = vld [vmem:[%s3279 + $0x20] sm:$0xff]
      %v3285 = vld [vmem:[%s3279 + $0x28] sm:$0xff]
      %v3286 = vld [vmem:[%s3279 + $0x30] sm:$0xff]
      %v3287 = vld [vmem:[%s3279 + $0x38] sm:$0xff]
      %v3288 = vld [vmem:[%s3279 + $0x40] sm:$0xff]
      %v3289 = vld [vmem:[%s3279 + $0x48] sm:$0xff]
      %v3290 = vld [vmem:[%s3279 + $0x50] sm:$0xff]
      %v3291 = vld [vmem:[%s3279 + $0x58] sm:$0xff]
      %v3292 = vld [vmem:[%s3279 + $0x60] sm:$0xff]
      %v3293 = vld [vmem:[%s3279 + $0x68] sm:$0xff]
      %v3294 = vld [vmem:[%s3279 + $0x70] sm:$0xff]
      %v3295 = vld [vmem:[%s3279 + $0x78] sm:$0xff]
      %v3296 = vld [vmem:[%s3279 + $0x80] sm:$0xff]
      %v3297 = vld [vmem:[%s3279 + $0x88] sm:$0xff]
      %v3298 = vld [vmem:[%s3279 + $0x90] sm:$0xff]
      %v3299 = vld [vmem:[%s3279 + $0x98] sm:$0xff]
      %v3300 = vld [vmem:[%s3279 + $0xa0] sm:$0xff]
      %v3301 = vld [vmem:[%s3279 + $0xa8] sm:$0xff]
      %v3302 = vld [vmem:[%s3279 + $0xb0] sm:$0xff]
      %v3303 = vld [vmem:[%s3279 + $0xb8] sm:$0xff]
      %v3304 = vld [vmem:[%s3279 + $0xc0] sm:$0xff]
      %v3305 = vld [vmem:[%s3279 + $0xc8] sm:$0xff]
      %v3306 = vld [vmem:[%s3279 + $0xd0] sm:$0xff]
      %v3307 = vld [vmem:[%s3279 + $0xd8] sm:$0xff]
      %v3308 = vld [vmem:[%s3279 + $0xe0] sm:$0xff]
      %v3309 = vld [vmem:[%s3279 + $0xe8] sm:$0xff]
      %v3310 = vld [vmem:[%s3279 + $0xf0] sm:$0xff]
      %v3311 = vld [vmem:[%s3279 + $0xf8] sm:$0xff]
      %v3312 = vld [vmem:[%s3279 + $0x100] sm:$0xff]
      %v3313 = vld [vmem:[%s3279 + $0x108] sm:$0xff]
      %v3314 = vld [vmem:[%s3279 + $0x110] sm:$0xff]
      %v3315 = vld [vmem:[%s3279 + $0x118] sm:$0xff]
      %v3316 = vld [vmem:[%s3279 + $0x120] sm:$0xff]
      %v3317 = vld [vmem:[%s3279 + $0x128] sm:$0xff]
      %v3318 = vld [vmem:[%s3279 + $0x130] sm:$0xff]
      %v3319 = vld [vmem:[%s3279 + $0x138] sm:$0xff]
      %v3320 = vld [vmem:[%s3279 + $0x140] sm:$0xff]
      %v3321 = vld [vmem:[%s3279 + $0x148] sm:$0xff]
      %v3322 = vld [vmem:[%s3279 + $0x150] sm:$0xff]
      %v3323 = vld [vmem:[%s3279 + $0x158] sm:$0xff]
      %v3324 = vld [vmem:[%s3279 + $0x160] sm:$0xff]
      %v3325 = vld [vmem:[%s3279 + $0x168] sm:$0xff]
      %v3326 = vld [vmem:[%s3279 + $0x170] sm:$0xff]
      %v3327 = vld [vmem:[%s3279 + $0x178] sm:$0xff]
      %v3328 = vld [vmem:[%s3279 + $0x180] sm:$0xff]
      %v3329 = vld [vmem:[%s3279 + $0x188] sm:$0xff]
      %v3330 = vld [vmem:[%s3279 + $0x190] sm:$0xff]
      %v3331 = vld [vmem:[%s3279 + $0x198] sm:$0xff]
      %v3332 = vld [vmem:[%s3279 + $0x1a0] sm:$0xff]
      %v3333 = vld [vmem:[%s3279 + $0x1a8] sm:$0xff]
      %v3334 = vld [vmem:[%s3279 + $0x1b0] sm:$0xff]
      %v3335 = vld [vmem:[%s3279 + $0x1b8] sm:$0xff]
      %v3336 = vld [vmem:[%s3279 + $0x1c0] sm:$0xff]
      %v3337 = vld [vmem:[%s3279 + $0x1c8] sm:$0xff]
      %v3338 = vld [vmem:[%s3279 + $0x1d0] sm:$0xff]
      %v3339 = vld [vmem:[%s3279 + $0x1d8] sm:$0xff]
      %v3340 = vld [vmem:[%s3279 + $0x1e0] sm:$0xff]
      %v3341 = vld [vmem:[%s3279 + $0x1e8] sm:$0xff]
      %v3342 = vld [vmem:[%s3279 + $0x1f0] sm:$0xff]
      %v3343 = vld [vmem:[%s3279 + $0x1f8] sm:$0xff]
      %v3344 = vand.u32 %v3311, 4294901760
      %3345 = vmatprep.subr.mxu0 %v3344
      %v3346 = vand.u32 %v3310, 4294901760
      %3347 = vmatpush1.msra.mxu0 %v3346
      %v3348 = vand.u32 %v3309, 4294901760
      %3349 = vmatprep.subr.mxu0 %v3348
      %v3350 = vand.u32 %v3308, 4294901760
      %3351 = vmatpush1.msra.mxu0 %v3350
      %v3352 = vand.u32 %v3307, 4294901760
      %3353 = vmatprep.subr.mxu0 %v3352
      %v3354 = vand.u32 %v3306, 4294901760
      %3355 = vmatpush1.msra.mxu0 %v3354
      %v3356 = vand.u32 %v3305, 4294901760
      %3357 = vmatprep.subr.mxu0 %v3356
      %v3358 = vand.u32 %v3304, 4294901760
      %3359 = vmatpush1.msra.mxu0 %v3358
      %v3360 = vand.u32 %v3303, 4294901760
      %3361 = vmatprep.subr.mxu0 %v3360
      %v3362 = vand.u32 %v3302, 4294901760
      %3363 = vmatpush1.msra.mxu0 %v3362
      %v3364 = vand.u32 %v3301, 4294901760
      %3365 = vmatprep.subr.mxu0 %v3364
      %v3366 = vand.u32 %v3300, 4294901760
      %3367 = vmatpush1.msra.mxu0 %v3366
      %v3368 = vand.u32 %v3299, 4294901760
      %3369 = vmatprep.subr.mxu0 %v3368
      %v3370 = vand.u32 %v3298, 4294901760
      %3371 = vmatpush1.msra.mxu0 %v3370
      %v3372 = vand.u32 %v3297, 4294901760
      %3373 = vmatprep.subr.mxu0 %v3372
      %v3374 = vand.u32 %v3296, 4294901760
      %3375 = vmatpush1.msra.mxu0 %v3374
      %v3376 = vand.u32 %v3295, 4294901760
      %3377 = vmatprep.subr.mxu0 %v3376
      %v3378 = vand.u32 %v3294, 4294901760
      %3379 = vmatpush1.msra.mxu0 %v3378
      %v3380 = vand.u32 %v3293, 4294901760
      %3381 = vmatprep.subr.mxu0 %v3380
      %v3382 = vand.u32 %v3292, 4294901760
      %3383 = vmatpush1.msra.mxu0 %v3382
      %v3384 = vand.u32 %v3291, 4294901760
      %3385 = vmatprep.subr.mxu0 %v3384
      %v3386 = vand.u32 %v3290, 4294901760
      %3387 = vmatpush1.msra.mxu0 %v3386
      %v3388 = vand.u32 %v3289, 4294901760
      %3389 = vmatprep.subr.mxu0 %v3388
      %v3390 = vand.u32 %v3288, 4294901760
      %3391 = vmatpush1.msra.mxu0 %v3390
      %v3392 = vand.u32 %v3287, 4294901760
      %3393 = vmatprep.subr.mxu0 %v3392
      %v3394 = vand.u32 %v3286, 4294901760
      %3395 = vmatpush1.msra.mxu0 %v3394
      %v3396 = vand.u32 %v3285, 4294901760
      %3397 = vmatprep.subr.mxu0 %v3396
      %v3398 = vand.u32 %v3284, 4294901760
      %3399 = vmatpush1.msra.mxu0 %v3398
      %v3400 = vand.u32 %v3283, 4294901760
      %3401 = vmatprep.subr.mxu0 %v3400
      %v3402 = vand.u32 %v3282, 4294901760
      %3403 = vmatpush1.msra.mxu0 %v3402
      %v3404 = vand.u32 %v3281, 4294901760
      %3405 = vmatprep.subr.mxu0 %v3404
      %v3406 = vand.u32 %v3280, 4294901760
      %3407 = vmatpush1.msra.mxu0 %v3406
      %v3408 = vand.u32 %v3343, 4294901760
      %3409 = vmatprep.subr.mxu0 %v3408
      %v3410 = vand.u32 %v3342, 4294901760
      %3411 = vmatpush2.msra.mxu0 %v3410
      %v3412 = vand.u32 %v3341, 4294901760
      %3413 = vmatprep.subr.mxu0 %v3412
      %v3414 = vand.u32 %v3340, 4294901760
      %3415 = vmatpush2.msra.mxu0 %v3414
      %v3416 = vand.u32 %v3339, 4294901760
      %3417 = vmatprep.subr.mxu0 %v3416
      %v3418 = vand.u32 %v3338, 4294901760
      %3419 = vmatpush2.msra.mxu0 %v3418
      %v3420 = vand.u32 %v3337, 4294901760
      %3421 = vmatprep.subr.mxu0 %v3420
      %v3422 = vand.u32 %v3336, 4294901760
      %3423 = vmatpush2.msra.mxu0 %v3422
      %v3424 = vand.u32 %v3335, 4294901760
      %3425 = vmatprep.subr.mxu0 %v3424
      %v3426 = vand.u32 %v3334, 4294901760
      %3427 = vmatpush2.msra.mxu0 %v3426
      %v3428 = vand.u32 %v3333, 4294901760
      %3429 = vmatprep.subr.mxu0 %v3428
      %v3430 = vand.u32 %v3332, 4294901760
      %3431 = vmatpush2.msra.mxu0 %v3430
      %v3432 = vand.u32 %v3331, 4294901760
      %3433 = vmatprep.subr.mxu0 %v3432
      %v3434 = vand.u32 %v3330, 4294901760
      %3435 = vmatpush2.msra.mxu0 %v3434
      %v3436 = vand.u32 %v3329, 4294901760
      %3437 = vmatprep.subr.mxu0 %v3436
      %v3438 = vand.u32 %v3328, 4294901760
      %3439 = vmatpush2.msra.mxu0 %v3438
      %v3440 = vand.u32 %v3327, 4294901760
      %3441 = vmatprep.subr.mxu0 %v3440
      %v3442 = vand.u32 %v3326, 4294901760
      %3443 = vmatpush2.msra.mxu0 %v3442
      %v3444 = vand.u32 %v3325, 4294901760
      %3445 = vmatprep.subr.mxu0 %v3444
      %v3446 = vand.u32 %v3324, 4294901760
      %3447 = vmatpush2.msra.mxu0 %v3446
      %v3448 = vand.u32 %v3323, 4294901760
      %3449 = vmatprep.subr.mxu0 %v3448
      %v3450 = vand.u32 %v3322, 4294901760
      %3451 = vmatpush2.msra.mxu0 %v3450
      %v3452 = vand.u32 %v3321, 4294901760
      %3453 = vmatprep.subr.mxu0 %v3452
      %v3454 = vand.u32 %v3320, 4294901760
      %3455 = vmatpush2.msra.mxu0 %v3454
      %v3456 = vand.u32 %v3319, 4294901760
      %3457 = vmatprep.subr.mxu0 %v3456
      %v3458 = vand.u32 %v3318, 4294901760
      %3459 = vmatpush2.msra.mxu0 %v3458
      %v3460 = vand.u32 %v3317, 4294901760
      %3461 = vmatprep.subr.mxu0 %v3460
      %v3462 = vand.u32 %v3316, 4294901760
      %3463 = vmatpush2.msra.mxu0 %v3462
      %v3464 = vand.u32 %v3315, 4294901760
      %3465 = vmatprep.subr.mxu0 %v3464
      %v3466 = vand.u32 %v3314, 4294901760
      %3467 = vmatpush2.msra.mxu0 %v3466
      %v3468 = vand.u32 %v3313, 4294901760
      %3469 = vmatprep.subr.mxu0 %v3468
      %v3470 = vand.u32 %v3312, 4294901760
      %3471 = vmatpush2.msra.mxu0 %v3470
      %v3472 = vand.u32 %v3214, 4294901760
      %v3473 = vsub.f32 %v3214, %v3472
      %v3474 = vand.u32 %v3473, 4294901760
      %v3475 = vsub.f32 %v3473, %v3474
      %v3476 = vand.u32 %v3475, 4294901760
      %3477 = vmatprep.mubr.f32.mxu0 %v3476
      %v3478 = vand.u32 %v3208, 4294901760
      %v3479 = vsub.f32 %v3208, %v3478
      %v3480 = vand.u32 %v3479, 4294901760
      %v3481 = vsub.f32 %v3479, %v3480
      %v3482 = vand.u32 %v3481, 4294901760
      %3483 = vmatmul.mubr.f32.gmra.mxu0 %v3482
      %v3484 = vpop.f32.mrf.mxu0
      %v3485 = vadd.f32 0.0, %v3484
      %v3486 = vpop.f32.mrf.mxu0
      %v3487 = vadd.f32 0.0, %v3486
      %3488 = vdwg.mxu0
      %v3489 = vand.u32 %v3311, 4294901760
      %v3490 = vsub.f32 %v3311, %v3489
      %v3491 = vand.u32 %v3490, 4294901760
      %v3492 = vsub.f32 %v3490, %v3491
      %v3493 = vand.u32 %v3492, 4294901760
      %3494 = vmatprep.subr.mxu0 %v3493
      %v3495 = vand.u32 %v3310, 4294901760
      %v3496 = vsub.f32 %v3310, %v3495
      %v3497 = vand.u32 %v3496, 4294901760
      %v3498 = vsub.f32 %v3496, %v3497
      %v3499 = vand.u32 %v3498, 4294901760
      %3500 = vmatpush1.msra.mxu0 %v3499
      %v3501 = vand.u32 %v3309, 4294901760
      %v3502 = vsub.f32 %v3309, %v3501
      %v3503 = vand.u32 %v3502, 4294901760
      %v3504 = vsub.f32 %v3502, %v3503
      %v3505 = vand.u32 %v3504, 4294901760
      %3506 = vmatprep.subr.mxu0 %v3505
      %v3507 = vand.u32 %v3308, 4294901760
      %v3508 = vsub.f32 %v3308, %v3507
      %v3509 = vand.u32 %v3508, 4294901760
      %v3510 = vsub.f32 %v3508, %v3509
      %v3511 = vand.u32 %v3510, 4294901760
      %3512 = vmatpush1.msra.mxu0 %v3511
      %v3513 = vand.u32 %v3307, 4294901760
      %v3514 = vsub.f32 %v3307, %v3513
      %v3515 = vand.u32 %v3514, 4294901760
      %v3516 = vsub.f32 %v3514, %v3515
      %v3517 = vand.u32 %v3516, 4294901760
      %3518 = vmatprep.subr.mxu0 %v3517
      %v3519 = vand.u32 %v3306, 4294901760
      %v3520 = vsub.f32 %v3306, %v3519
      %v3521 = vand.u32 %v3520, 4294901760
      %v3522 = vsub.f32 %v3520, %v3521
      %v3523 = vand.u32 %v3522, 4294901760
      %3524 = vmatpush1.msra.mxu0 %v3523
      %v3525 = vand.u32 %v3305, 4294901760
      %v3526 = vsub.f32 %v3305, %v3525
      %v3527 = vand.u32 %v3526, 4294901760
      %v3528 = vsub.f32 %v3526, %v3527
      %v3529 = vand.u32 %v3528, 4294901760
      %3530 = vmatprep.subr.mxu0 %v3529
      %v3531 = vand.u32 %v3304, 4294901760
      %v3532 = vsub.f32 %v3304, %v3531
      %v3533 = vand.u32 %v3532, 4294901760
      %v3534 = vsub.f32 %v3532, %v3533
      %v3535 = vand.u32 %v3534, 4294901760
      %3536 = vmatpush1.msra.mxu0 %v3535
      %v3537 = vand.u32 %v3303, 4294901760
      %v3538 = vsub.f32 %v3303, %v3537
      %v3539 = vand.u32 %v3538, 4294901760
      %v3540 = vsub.f32 %v3538, %v3539
      %v3541 = vand.u32 %v3540, 4294901760
      %3542 = vmatprep.subr.mxu0 %v3541
      %v3543 = vand.u32 %v3302, 4294901760
      %v3544 = vsub.f32 %v3302, %v3543
      %v3545 = vand.u32 %v3544, 4294901760
      %v3546 = vsub.f32 %v3544, %v3545
      %v3547 = vand.u32 %v3546, 4294901760
      %3548 = vmatpush1.msra.mxu0 %v3547
      %v3549 = vand.u32 %v3301, 4294901760
      %v3550 = vsub.f32 %v3301, %v3549
      %v3551 = vand.u32 %v3550, 4294901760
      %v3552 = vsub.f32 %v3550, %v3551
      %v3553 = vand.u32 %v3552, 4294901760
      %3554 = vmatprep.subr.mxu0 %v3553
      %v3555 = vand.u32 %v3300, 4294901760
      %v3556 = vsub.f32 %v3300, %v3555
      %v3557 = vand.u32 %v3556, 4294901760
      %v3558 = vsub.f32 %v3556, %v3557
      %v3559 = vand.u32 %v3558, 4294901760
      %3560 = vmatpush1.msra.mxu0 %v3559
      %v3561 = vand.u32 %v3299, 4294901760
      %v3562 = vsub.f32 %v3299, %v3561
      %v3563 = vand.u32 %v3562, 4294901760
      %v3564 = vsub.f32 %v3562, %v3563
      %v3565 = vand.u32 %v3564, 4294901760
      %3566 = vmatprep.subr.mxu0 %v3565
      %v3567 = vand.u32 %v3298, 4294901760
      %v3568 = vsub.f32 %v3298, %v3567
      %v3569 = vand.u32 %v3568, 4294901760
      %v3570 = vsub.f32 %v3568, %v3569
      %v3571 = vand.u32 %v3570, 4294901760
      %3572 = vmatpush1.msra.mxu0 %v3571
      %v3573 = vand.u32 %v3297, 4294901760
      %v3574 = vsub.f32 %v3297, %v3573
      %v3575 = vand.u32 %v3574, 4294901760
      %v3576 = vsub.f32 %v3574, %v3575
      %v3577 = vand.u32 %v3576, 4294901760
      %3578 = vmatprep.subr.mxu0 %v3577
      %v3579 = vand.u32 %v3296, 4294901760
      %v3580 = vsub.f32 %v3296, %v3579
      %v3581 = vand.u32 %v3580, 4294901760
      %v3582 = vsub.f32 %v3580, %v3581
      %v3583 = vand.u32 %v3582, 4294901760
      %3584 = vmatpush1.msra.mxu0 %v3583
      %v3585 = vand.u32 %v3295, 4294901760
      %v3586 = vsub.f32 %v3295, %v3585
      %v3587 = vand.u32 %v3586, 4294901760
      %v3588 = vsub.f32 %v3586, %v3587
      %v3589 = vand.u32 %v3588, 4294901760
      %3590 = vmatprep.subr.mxu0 %v3589
      %v3591 = vand.u32 %v3294, 4294901760
      %v3592 = vsub.f32 %v3294, %v3591
      %v3593 = vand.u32 %v3592, 4294901760
      %v3594 = vsub.f32 %v3592, %v3593
      %v3595 = vand.u32 %v3594, 4294901760
      %3596 = vmatpush1.msra.mxu0 %v3595
      %v3597 = vand.u32 %v3293, 4294901760
      %v3598 = vsub.f32 %v3293, %v3597
      %v3599 = vand.u32 %v3598, 4294901760
      %v3600 = vsub.f32 %v3598, %v3599
      %v3601 = vand.u32 %v3600, 4294901760
      %3602 = vmatprep.subr.mxu0 %v3601
      %v3603 = vand.u32 %v3292, 4294901760
      %v3604 = vsub.f32 %v3292, %v3603
      %v3605 = vand.u32 %v3604, 4294901760
      %v3606 = vsub.f32 %v3604, %v3605
      %v3607 = vand.u32 %v3606, 4294901760
      %3608 = vmatpush1.msra.mxu0 %v3607
      %v3609 = vand.u32 %v3291, 4294901760
      %v3610 = vsub.f32 %v3291, %v3609
      %v3611 = vand.u32 %v3610, 4294901760
      %v3612 = vsub.f32 %v3610, %v3611
      %v3613 = vand.u32 %v3612, 4294901760
      %3614 = vmatprep.subr.mxu0 %v3613
      %v3615 = vand.u32 %v3290, 4294901760
      %v3616 = vsub.f32 %v3290, %v3615
      %v3617 = vand.u32 %v3616, 4294901760
      %v3618 = vsub.f32 %v3616, %v3617
      %v3619 = vand.u32 %v3618, 4294901760
      %3620 = vmatpush1.msra.mxu0 %v3619
      %v3621 = vand.u32 %v3289, 4294901760
      %v3622 = vsub.f32 %v3289, %v3621
      %v3623 = vand.u32 %v3622, 4294901760
      %v3624 = vsub.f32 %v3622, %v3623
      %v3625 = vand.u32 %v3624, 4294901760
      %3626 = vmatprep.subr.mxu0 %v3625
      %v3627 = vand.u32 %v3288, 4294901760
      %v3628 = vsub.f32 %v3288, %v3627
      %v3629 = vand.u32 %v3628, 4294901760
      %v3630 = vsub.f32 %v3628, %v3629
      %v3631 = vand.u32 %v3630, 4294901760
      %3632 = vmatpush1.msra.mxu0 %v3631
      %v3633 = vand.u32 %v3287, 4294901760
      %v3634 = vsub.f32 %v3287, %v3633
      %v3635 = vand.u32 %v3634, 4294901760
      %v3636 = vsub.f32 %v3634, %v3635
      %v3637 = vand.u32 %v3636, 4294901760
      %3638 = vmatprep.subr.mxu0 %v3637
      %v3639 = vand.u32 %v3286, 4294901760
      %v3640 = vsub.f32 %v3286, %v3639
      %v3641 = vand.u32 %v3640, 4294901760
      %v3642 = vsub.f32 %v3640, %v3641
      %v3643 = vand.u32 %v3642, 4294901760
      %3644 = vmatpush1.msra.mxu0 %v3643
      %v3645 = vand.u32 %v3285, 4294901760
      %v3646 = vsub.f32 %v3285, %v3645
      %v3647 = vand.u32 %v3646, 4294901760
      %v3648 = vsub.f32 %v3646, %v3647
      %v3649 = vand.u32 %v3648, 4294901760
      %3650 = vmatprep.subr.mxu0 %v3649
      %v3651 = vand.u32 %v3284, 4294901760
      %v3652 = vsub.f32 %v3284, %v3651
      %v3653 = vand.u32 %v3652, 4294901760
      %v3654 = vsub.f32 %v3652, %v3653
      %v3655 = vand.u32 %v3654, 4294901760
      %3656 = vmatpush1.msra.mxu0 %v3655
      %v3657 = vand.u32 %v3283, 4294901760
      %v3658 = vsub.f32 %v3283, %v3657
      %v3659 = vand.u32 %v3658, 4294901760
      %v3660 = vsub.f32 %v3658, %v3659
      %v3661 = vand.u32 %v3660, 4294901760
      %3662 = vmatprep.subr.mxu0 %v3661
      %v3663 = vand.u32 %v3282, 4294901760
      %v3664 = vsub.f32 %v3282, %v3663
      %v3665 = vand.u32 %v3664, 4294901760
      %v3666 = vsub.f32 %v3664, %v3665
      %v3667 = vand.u32 %v3666, 4294901760
      %3668 = vmatpush1.msra.mxu0 %v3667
      %v3669 = vand.u32 %v3281, 4294901760
      %v3670 = vsub.f32 %v3281, %v3669
      %v3671 = vand.u32 %v3670, 4294901760
      %v3672 = vsub.f32 %v3670, %v3671
      %v3673 = vand.u32 %v3672, 4294901760
      %3674 = vmatprep.subr.mxu0 %v3673
      %v3675 = vand.u32 %v3280, 4294901760
      %v3676 = vsub.f32 %v3280, %v3675
      %v3677 = vand.u32 %v3676, 4294901760
      %v3678 = vsub.f32 %v3676, %v3677
      %v3679 = vand.u32 %v3678, 4294901760
      %3680 = vmatpush1.msra.mxu0 %v3679
      %v3681 = vand.u32 %v3343, 4294901760
      %v3682 = vsub.f32 %v3343, %v3681
      %v3683 = vand.u32 %v3682, 4294901760
      %v3684 = vsub.f32 %v3682, %v3683
      %v3685 = vand.u32 %v3684, 4294901760
      %3686 = vmatprep.subr.mxu0 %v3685
      %v3687 = vand.u32 %v3342, 4294901760
      %v3688 = vsub.f32 %v3342, %v3687
      %v3689 = vand.u32 %v3688, 4294901760
      %v3690 = vsub.f32 %v3688, %v3689
      %v3691 = vand.u32 %v3690, 4294901760
      %3692 = vmatpush2.msra.mxu0 %v3691
      %v3693 = vand.u32 %v3341, 4294901760
      %v3694 = vsub.f32 %v3341, %v3693
      %v3695 = vand.u32 %v3694, 4294901760
      %v3696 = vsub.f32 %v3694, %v3695
      %v3697 = vand.u32 %v3696, 4294901760
      %3698 = vmatprep.subr.mxu0 %v3697
      %v3699 = vand.u32 %v3340, 4294901760
      %v3700 = vsub.f32 %v3340, %v3699
      %v3701 = vand.u32 %v3700, 4294901760
      %v3702 = vsub.f32 %v3700, %v3701
      %v3703 = vand.u32 %v3702, 4294901760
      %3704 = vmatpush2.msra.mxu0 %v3703
      %v3705 = vand.u32 %v3339, 4294901760
      %v3706 = vsub.f32 %v3339, %v3705
      %v3707 = vand.u32 %v3706, 4294901760
      %v3708 = vsub.f32 %v3706, %v3707
      %v3709 = vand.u32 %v3708, 4294901760
      %3710 = vmatprep.subr.mxu0 %v3709
      %v3711 = vand.u32 %v3338, 4294901760
      %v3712 = vsub.f32 %v3338, %v3711
      %v3713 = vand.u32 %v3712, 4294901760
      %v3714 = vsub.f32 %v3712, %v3713
      %v3715 = vand.u32 %v3714, 4294901760
      %3716 = vmatpush2.msra.mxu0 %v3715
      %v3717 = vand.u32 %v3337, 4294901760
      %v3718 = vsub.f32 %v3337, %v3717
      %v3719 = vand.u32 %v3718, 4294901760
      %v3720 = vsub.f32 %v3718, %v3719
      %v3721 = vand.u32 %v3720, 4294901760
      %3722 = vmatprep.subr.mxu0 %v3721
      %v3723 = vand.u32 %v3336, 4294901760
      %v3724 = vsub.f32 %v3336, %v3723
      %v3725 = vand.u32 %v3724, 4294901760
      %v3726 = vsub.f32 %v3724, %v3725
      %v3727 = vand.u32 %v3726, 4294901760
      %3728 = vmatpush2.msra.mxu0 %v3727
      %v3729 = vand.u32 %v3335, 4294901760
      %v3730 = vsub.f32 %v3335, %v3729
      %v3731 = vand.u32 %v3730, 4294901760
      %v3732 = vsub.f32 %v3730, %v3731
      %v3733 = vand.u32 %v3732, 4294901760
      %3734 = vmatprep.subr.mxu0 %v3733
      %v3735 = vand.u32 %v3334, 4294901760
      %v3736 = vsub.f32 %v3334, %v3735
      %v3737 = vand.u32 %v3736, 4294901760
      %v3738 = vsub.f32 %v3736, %v3737
      %v3739 = vand.u32 %v3738, 4294901760
      %3740 = vmatpush2.msra.mxu0 %v3739
      %v3741 = vand.u32 %v3333, 4294901760
      %v3742 = vsub.f32 %v3333, %v3741
      %v3743 = vand.u32 %v3742, 4294901760
      %v3744 = vsub.f32 %v3742, %v3743
      %v3745 = vand.u32 %v3744, 4294901760
      %3746 = vmatprep.subr.mxu0 %v3745
      %v3747 = vand.u32 %v3332, 4294901760
      %v3748 = vsub.f32 %v3332, %v3747
      %v3749 = vand.u32 %v3748, 4294901760
      %v3750 = vsub.f32 %v3748, %v3749
      %v3751 = vand.u32 %v3750, 4294901760
      %3752 = vmatpush2.msra.mxu0 %v3751
      %v3753 = vand.u32 %v3331, 4294901760
      %v3754 = vsub.f32 %v3331, %v3753
      %v3755 = vand.u32 %v3754, 4294901760
      %v3756 = vsub.f32 %v3754, %v3755
      %v3757 = vand.u32 %v3756, 4294901760
      %3758 = vmatprep.subr.mxu0 %v3757
      %v3759 = vand.u32 %v3330, 4294901760
      %v3760 = vsub.f32 %v3330, %v3759
      %v3761 = vand.u32 %v3760, 4294901760
      %v3762 = vsub.f32 %v3760, %v3761
      %v3763 = vand.u32 %v3762, 4294901760
      %3764 = vmatpush2.msra.mxu0 %v3763
      %v3765 = vand.u32 %v3329, 4294901760
      %v3766 = vsub.f32 %v3329, %v3765
      %v3767 = vand.u32 %v3766, 4294901760
      %v3768 = vsub.f32 %v3766, %v3767
      %v3769 = vand.u32 %v3768, 4294901760
      %3770 = vmatprep.subr.mxu0 %v3769
      %v3771 = vand.u32 %v3328, 4294901760
      %v3772 = vsub.f32 %v3328, %v3771
      %v3773 = vand.u32 %v3772, 4294901760
      %v3774 = vsub.f32 %v3772, %v3773
      %v3775 = vand.u32 %v3774, 4294901760
      %3776 = vmatpush2.msra.mxu0 %v3775
      %v3777 = vand.u32 %v3327, 4294901760
      %v3778 = vsub.f32 %v3327, %v3777
      %v3779 = vand.u32 %v3778, 4294901760
      %v3780 = vsub.f32 %v3778, %v3779
      %v3781 = vand.u32 %v3780, 4294901760
      %3782 = vmatprep.subr.mxu0 %v3781
      %v3783 = vand.u32 %v3326, 4294901760
      %v3784 = vsub.f32 %v3326, %v3783
      %v3785 = vand.u32 %v3784, 4294901760
      %v3786 = vsub.f32 %v3784, %v3785
      %v3787 = vand.u32 %v3786, 4294901760
      %3788 = vmatpush2.msra.mxu0 %v3787
      %v3789 = vand.u32 %v3325, 4294901760
      %v3790 = vsub.f32 %v3325, %v3789
      %v3791 = vand.u32 %v3790, 4294901760
      %v3792 = vsub.f32 %v3790, %v3791
      %v3793 = vand.u32 %v3792, 4294901760
      %3794 = vmatprep.subr.mxu0 %v3793
      %v3795 = vand.u32 %v3324, 4294901760
      %v3796 = vsub.f32 %v3324, %v3795
      %v3797 = vand.u32 %v3796, 4294901760
      %v3798 = vsub.f32 %v3796, %v3797
      %v3799 = vand.u32 %v3798, 4294901760
      %3800 = vmatpush2.msra.mxu0 %v3799
      %v3801 = vand.u32 %v3323, 4294901760
      %v3802 = vsub.f32 %v3323, %v3801
      %v3803 = vand.u32 %v3802, 4294901760
      %v3804 = vsub.f32 %v3802, %v3803
      %v3805 = vand.u32 %v3804, 4294901760
      %3806 = vmatprep.subr.mxu0 %v3805
      %v3807 = vand.u32 %v3322, 4294901760
      %v3808 = vsub.f32 %v3322, %v3807
      %v3809 = vand.u32 %v3808, 4294901760
      %v3810 = vsub.f32 %v3808, %v3809
      %v3811 = vand.u32 %v3810, 4294901760
      %3812 = vmatpush2.msra.mxu0 %v3811
      %v3813 = vand.u32 %v3321, 4294901760
      %v3814 = vsub.f32 %v3321, %v3813
      %v3815 = vand.u32 %v3814, 4294901760
      %v3816 = vsub.f32 %v3814, %v3815
      %v3817 = vand.u32 %v3816, 4294901760
      %3818 = vmatprep.subr.mxu0 %v3817
      %v3819 = vand.u32 %v3320, 4294901760
      %v3820 = vsub.f32 %v3320, %v3819
      %v3821 = vand.u32 %v3820, 4294901760
      %v3822 = vsub.f32 %v3820, %v3821
      %v3823 = vand.u32 %v3822, 4294901760
      %3824 = vmatpush2.msra.mxu0 %v3823
      %v3825 = vand.u32 %v3319, 4294901760
      %v3826 = vsub.f32 %v3319, %v3825
      %v3827 = vand.u32 %v3826, 4294901760
      %v3828 = vsub.f32 %v3826, %v3827
      %v3829 = vand.u32 %v3828, 4294901760
      %3830 = vmatprep.subr.mxu0 %v3829
      %v3831 = vand.u32 %v3318, 4294901760
      %v3832 = vsub.f32 %v3318, %v3831
      %v3833 = vand.u32 %v3832, 4294901760
      %v3834 = vsub.f32 %v3832, %v3833
      %v3835 = vand.u32 %v3834, 4294901760
      %3836 = vmatpush2.msra.mxu0 %v3835
      %v3837 = vand.u32 %v3317, 4294901760
      %v3838 = vsub.f32 %v3317, %v3837
      %v3839 = vand.u32 %v3838, 4294901760
      %v3840 = vsub.f32 %v3838, %v3839
      %v3841 = vand.u32 %v3840, 4294901760
      %3842 = vmatprep.subr.mxu0 %v3841
      %v3843 = vand.u32 %v3316, 4294901760
      %v3844 = vsub.f32 %v3316, %v3843
      %v3845 = vand.u32 %v3844, 4294901760
      %v3846 = vsub.f32 %v3844, %v3845
      %v3847 = vand.u32 %v3846, 4294901760
      %3848 = vmatpush2.msra.mxu0 %v3847
      %v3849 = vand.u32 %v3315, 4294901760
      %v3850 = vsub.f32 %v3315, %v3849
      %v3851 = vand.u32 %v3850, 4294901760
      %v3852 = vsub.f32 %v3850, %v3851
      %v3853 = vand.u32 %v3852, 4294901760
      %3854 = vmatprep.subr.mxu0 %v3853
      %v3855 = vand.u32 %v3314, 4294901760
      %v3856 = vsub.f32 %v3314, %v3855
      %v3857 = vand.u32 %v3856, 4294901760
      %v3858 = vsub.f32 %v3856, %v3857
      %v3859 = vand.u32 %v3858, 4294901760
      %3860 = vmatpush2.msra.mxu0 %v3859
      %v3861 = vand.u32 %v3313, 4294901760
      %v3862 = vsub.f32 %v3313, %v3861
      %v3863 = vand.u32 %v3862, 4294901760
      %v3864 = vsub.f32 %v3862, %v3863
      %v3865 = vand.u32 %v3864, 4294901760
      %3866 = vmatprep.subr.mxu0 %v3865
      %v3867 = vand.u32 %v3312, 4294901760
      %v3868 = vsub.f32 %v3312, %v3867
      %v3869 = vand.u32 %v3868, 4294901760
      %v3870 = vsub.f32 %v3868, %v3869
      %v3871 = vand.u32 %v3870, 4294901760
      %3872 = vmatpush2.msra.mxu0 %v3871
      %v3873 = vand.u32 %v3214, 4294901760
      %3874 = vmatprep.mubr.f32.mxu0 %v3873
      %v3875 = vand.u32 %v3208, 4294901760
      %3876 = vmatmul.mubr.f32.gmra.mxu0 %v3875
      %v3877 = vpop.f32.mrf.mxu0
      %v3878 = vadd.f32 %v3485, %v3877
      %v3879 = vpop.f32.mrf.mxu0
      %v3880 = vadd.f32 %v3487, %v3879
      %3881 = vdwg.mxu0
      %v3882 = vand.u32 %v3311, 4294901760
      %v3883 = vsub.f32 %v3311, %v3882
      %3884 = vmatprep.subr.mxu0 %v3883
      %v3885 = vand.u32 %v3310, 4294901760
      %v3886 = vsub.f32 %v3310, %v3885
      %3887 = vmatpush1.msra.mxu0 %v3886
      %v3888 = vand.u32 %v3309, 4294901760
      %v3889 = vsub.f32 %v3309, %v3888
      %3890 = vmatprep.subr.mxu0 %v3889
      %v3891 = vand.u32 %v3308, 4294901760
      %v3892 = vsub.f32 %v3308, %v3891
      %3893 = vmatpush1.msra.mxu0 %v3892
      %v3894 = vand.u32 %v3307, 4294901760
      %v3895 = vsub.f32 %v3307, %v3894
      %3896 = vmatprep.subr.mxu0 %v3895
      %v3897 = vand.u32 %v3306, 4294901760
      %v3898 = vsub.f32 %v3306, %v3897
      %3899 = vmatpush1.msra.mxu0 %v3898
      %v3900 = vand.u32 %v3305, 4294901760
      %v3901 = vsub.f32 %v3305, %v3900
      %3902 = vmatprep.subr.mxu0 %v3901
      %v3903 = vand.u32 %v3304, 4294901760
      %v3904 = vsub.f32 %v3304, %v3903
      %3905 = vmatpush1.msra.mxu0 %v3904
      %v3906 = vand.u32 %v3303, 4294901760
      %v3907 = vsub.f32 %v3303, %v3906
      %3908 = vmatprep.subr.mxu0 %v3907
      %v3909 = vand.u32 %v3302, 4294901760
      %v3910 = vsub.f32 %v3302, %v3909
      %3911 = vmatpush1.msra.mxu0 %v3910
      %v3912 = vand.u32 %v3301, 4294901760
      %v3913 = vsub.f32 %v3301, %v3912
      %3914 = vmatprep.subr.mxu0 %v3913
      %v3915 = vand.u32 %v3300, 4294901760
      %v3916 = vsub.f32 %v3300, %v3915
      %3917 = vmatpush1.msra.mxu0 %v3916
      %v3918 = vand.u32 %v3299, 4294901760
      %v3919 = vsub.f32 %v3299, %v3918
      %3920 = vmatprep.subr.mxu0 %v3919
      %v3921 = vand.u32 %v3298, 4294901760
      %v3922 = vsub.f32 %v3298, %v3921
      %3923 = vmatpush1.msra.mxu0 %v3922
      %v3924 = vand.u32 %v3297, 4294901760
      %v3925 = vsub.f32 %v3297, %v3924
      %3926 = vmatprep.subr.mxu0 %v3925
      %v3927 = vand.u32 %v3296, 4294901760
      %v3928 = vsub.f32 %v3296, %v3927
      %3929 = vmatpush1.msra.mxu0 %v3928
      %v3930 = vand.u32 %v3295, 4294901760
      %v3931 = vsub.f32 %v3295, %v3930
      %3932 = vmatprep.subr.mxu0 %v3931
      %v3933 = vand.u32 %v3294, 4294901760
      %v3934 = vsub.f32 %v3294, %v3933
      %3935 = vmatpush1.msra.mxu0 %v3934
      %v3936 = vand.u32 %v3293, 4294901760
      %v3937 = vsub.f32 %v3293, %v3936
      %3938 = vmatprep.subr.mxu0 %v3937
      %v3939 = vand.u32 %v3292, 4294901760
      %v3940 = vsub.f32 %v3292, %v3939
      %3941 = vmatpush1.msra.mxu0 %v3940
      %v3942 = vand.u32 %v3291, 4294901760
      %v3943 = vsub.f32 %v3291, %v3942
      %3944 = vmatprep.subr.mxu0 %v3943
      %v3945 = vand.u32 %v3290, 4294901760
      %v3946 = vsub.f32 %v3290, %v3945
      %3947 = vmatpush1.msra.mxu0 %v3946
      %v3948 = vand.u32 %v3289, 4294901760
      %v3949 = vsub.f32 %v3289, %v3948
      %3950 = vmatprep.subr.mxu0 %v3949
      %v3951 = vand.u32 %v3288, 4294901760
      %v3952 = vsub.f32 %v3288, %v3951
      %3953 = vmatpush1.msra.mxu0 %v3952
      %v3954 = vand.u32 %v3287, 4294901760
      %v3955 = vsub.f32 %v3287, %v3954
      %3956 = vmatprep.subr.mxu0 %v3955
      %v3957 = vand.u32 %v3286, 4294901760
      %v3958 = vsub.f32 %v3286, %v3957
      %3959 = vmatpush1.msra.mxu0 %v3958
      %v3960 = vand.u32 %v3285, 4294901760
      %v3961 = vsub.f32 %v3285, %v3960
      %3962 = vmatprep.subr.mxu0 %v3961
      %v3963 = vand.u32 %v3284, 4294901760
      %v3964 = vsub.f32 %v3284, %v3963
      %3965 = vmatpush1.msra.mxu0 %v3964
      %v3966 = vand.u32 %v3283, 4294901760
      %v3967 = vsub.f32 %v3283, %v3966
      %3968 = vmatprep.subr.mxu0 %v3967
      %v3969 = vand.u32 %v3282, 4294901760
      %v3970 = vsub.f32 %v3282, %v3969
      %3971 = vmatpush1.msra.mxu0 %v3970
      %v3972 = vand.u32 %v3281, 4294901760
      %v3973 = vsub.f32 %v3281, %v3972
      %3974 = vmatprep.subr.mxu0 %v3973
      %v3975 = vand.u32 %v3280, 4294901760
      %v3976 = vsub.f32 %v3280, %v3975
      %3977 = vmatpush1.msra.mxu0 %v3976
      %v3978 = vand.u32 %v3343, 4294901760
      %v3979 = vsub.f32 %v3343, %v3978
      %3980 = vmatprep.subr.mxu0 %v3979
      %v3981 = vand.u32 %v3342, 4294901760
      %v3982 = vsub.f32 %v3342, %v3981
      %3983 = vmatpush2.msra.mxu0 %v3982
      %v3984 = vand.u32 %v3341, 4294901760
      %v3985 = vsub.f32 %v3341, %v3984
      %3986 = vmatprep.subr.mxu0 %v3985
      %v3987 = vand.u32 %v3340, 4294901760
      %v3988 = vsub.f32 %v3340, %v3987
      %3989 = vmatpush2.msra.mxu0 %v3988
      %v3990 = vand.u32 %v3339, 4294901760
      %v3991 = vsub.f32 %v3339, %v3990
      %3992 = vmatprep.subr.mxu0 %v3991
      %v3993 = vand.u32 %v3338, 4294901760
      %v3994 = vsub.f32 %v3338, %v3993
      %3995 = vmatpush2.msra.mxu0 %v3994
      %v3996 = vand.u32 %v3337, 4294901760
      %v3997 = vsub.f32 %v3337, %v3996
      %3998 = vmatprep.subr.mxu0 %v3997
      %v3999 = vand.u32 %v3336, 4294901760
      %v4000 = vsub.f32 %v3336, %v3999
      %4001 = vmatpush2.msra.mxu0 %v4000
      %v4002 = vand.u32 %v3335, 4294901760
      %v4003 = vsub.f32 %v3335, %v4002
      %4004 = vmatprep.subr.mxu0 %v4003
      %v4005 = vand.u32 %v3334, 4294901760
      %v4006 = vsub.f32 %v3334, %v4005
      %4007 = vmatpush2.msra.mxu0 %v4006
      %v4008 = vand.u32 %v3333, 4294901760
      %v4009 = vsub.f32 %v3333, %v4008
      %4010 = vmatprep.subr.mxu0 %v4009
      %v4011 = vand.u32 %v3332, 4294901760
      %v4012 = vsub.f32 %v3332, %v4011
      %4013 = vmatpush2.msra.mxu0 %v4012
      %v4014 = vand.u32 %v3331, 4294901760
      %v4015 = vsub.f32 %v3331, %v4014
      %4016 = vmatprep.subr.mxu0 %v4015
      %v4017 = vand.u32 %v3330, 4294901760
      %v4018 = vsub.f32 %v3330, %v4017
      %4019 = vmatpush2.msra.mxu0 %v4018
      %v4020 = vand.u32 %v3329, 4294901760
      %v4021 = vsub.f32 %v3329, %v4020
      %4022 = vmatprep.subr.mxu0 %v4021
      %v4023 = vand.u32 %v3328, 4294901760
      %v4024 = vsub.f32 %v3328, %v4023
      %4025 = vmatpush2.msra.mxu0 %v4024
      %v4026 = vand.u32 %v3327, 4294901760
      %v4027 = vsub.f32 %v3327, %v4026
      %4028 = vmatprep.subr.mxu0 %v4027
      %v4029 = vand.u32 %v3326, 4294901760
      %v4030 = vsub.f32 %v3326, %v4029
      %4031 = vmatpush2.msra.mxu0 %v4030
      %v4032 = vand.u32 %v3325, 4294901760
      %v4033 = vsub.f32 %v3325, %v4032
      %4034 = vmatprep.subr.mxu0 %v4033
      %v4035 = vand.u32 %v3324, 4294901760
      %v4036 = vsub.f32 %v3324, %v4035
      %4037 = vmatpush2.msra.mxu0 %v4036
      %v4038 = vand.u32 %v3323, 4294901760
      %v4039 = vsub.f32 %v3323, %v4038
      %4040 = vmatprep.subr.mxu0 %v4039
      %v4041 = vand.u32 %v3322, 4294901760
      %v4042 = vsub.f32 %v3322, %v4041
      %4043 = vmatpush2.msra.mxu0 %v4042
      %v4044 = vand.u32 %v3321, 4294901760
      %v4045 = vsub.f32 %v3321, %v4044
      %4046 = vmatprep.subr.mxu0 %v4045
      %v4047 = vand.u32 %v3320, 4294901760
      %v4048 = vsub.f32 %v3320, %v4047
      %4049 = vmatpush2.msra.mxu0 %v4048
      %v4050 = vand.u32 %v3319, 4294901760
      %v4051 = vsub.f32 %v3319, %v4050
      %4052 = vmatprep.subr.mxu0 %v4051
      %v4053 = vand.u32 %v3318, 4294901760
      %v4054 = vsub.f32 %v3318, %v4053
      %4055 = vmatpush2.msra.mxu0 %v4054
      %v4056 = vand.u32 %v3317, 4294901760
      %v4057 = vsub.f32 %v3317, %v4056
      %4058 = vmatprep.subr.mxu0 %v4057
      %v4059 = vand.u32 %v3316, 4294901760
      %v4060 = vsub.f32 %v3316, %v4059
      %4061 = vmatpush2.msra.mxu0 %v4060
      %v4062 = vand.u32 %v3315, 4294901760
      %v4063 = vsub.f32 %v3315, %v4062
      %4064 = vmatprep.subr.mxu0 %v4063
      %v4065 = vand.u32 %v3314, 4294901760
      %v4066 = vsub.f32 %v3314, %v4065
      %4067 = vmatpush2.msra.mxu0 %v4066
      %v4068 = vand.u32 %v3313, 4294901760
      %v4069 = vsub.f32 %v3313, %v4068
      %4070 = vmatprep.subr.mxu0 %v4069
      %v4071 = vand.u32 %v3312, 4294901760
      %v4072 = vsub.f32 %v3312, %v4071
      %4073 = vmatpush2.msra.mxu0 %v4072
      %v4074 = vand.u32 %v3214, 4294901760
      %v4075 = vsub.f32 %v3214, %v4074
      %4076 = vmatprep.mubr.f32.mxu0 %v4075
      %v4077 = vand.u32 %v3208, 4294901760
      %v4078 = vsub.f32 %v3208, %v4077
      %4079 = vmatmul.mubr.f32.gmra.mxu0 %v4078
      %v4080 = vpop.f32.mrf.mxu0
      %v4081 = vadd.f32 %v3878, %v4080
      %v4082 = vpop.f32.mrf.mxu0
      %v4083 = vadd.f32 %v3880, %v4082
      %4084 = vdwg.mxu0
      %v4085 = vand.u32 %v3311, 4294901760
      %4086 = vmatprep.subr.mxu0 %v4085
      %v4087 = vand.u32 %v3310, 4294901760
      %4088 = vmatpush1.msra.mxu0 %v4087
      %v4089 = vand.u32 %v3309, 4294901760
      %4090 = vmatprep.subr.mxu0 %v4089
      %v4091 = vand.u32 %v3308, 4294901760
      %4092 = vmatpush1.msra.mxu0 %v4091
      %v4093 = vand.u32 %v3307, 4294901760
      %4094 = vmatprep.subr.mxu0 %v4093
      %v4095 = vand.u32 %v3306, 4294901760
      %4096 = vmatpush1.msra.mxu0 %v4095
      %v4097 = vand.u32 %v3305, 4294901760
      %4098 = vmatprep.subr.mxu0 %v4097
      %v4099 = vand.u32 %v3304, 4294901760
      %4100 = vmatpush1.msra.mxu0 %v4099
      %v4101 = vand.u32 %v3303, 4294901760
      %4102 = vmatprep.subr.mxu0 %v4101
      %v4103 = vand.u32 %v3302, 4294901760
      %4104 = vmatpush1.msra.mxu0 %v4103
      %v4105 = vand.u32 %v3301, 4294901760
      %4106 = vmatprep.subr.mxu0 %v4105
      %v4107 = vand.u32 %v3300, 4294901760
      %4108 = vmatpush1.msra.mxu0 %v4107
      %v4109 = vand.u32 %v3299, 4294901760
      %4110 = vmatprep.subr.mxu0 %v4109
      %v4111 = vand.u32 %v3298, 4294901760
      %4112 = vmatpush1.msra.mxu0 %v4111
      %v4113 = vand.u32 %v3297, 4294901760
      %4114 = vmatprep.subr.mxu0 %v4113
      %v4115 = vand.u32 %v3296, 4294901760
      %4116 = vmatpush1.msra.mxu0 %v4115
      %v4117 = vand.u32 %v3295, 4294901760
      %4118 = vmatprep.subr.mxu0 %v4117
      %v4119 = vand.u32 %v3294, 4294901760
      %4120 = vmatpush1.msra.mxu0 %v4119
      %v4121 = vand.u32 %v3293, 4294901760
      %4122 = vmatprep.subr.mxu0 %v4121
      %v4123 = vand.u32 %v3292, 4294901760
      %4124 = vmatpush1.msra.mxu0 %v4123
      %v4125 = vand.u32 %v3291, 4294901760
      %4126 = vmatprep.subr.mxu0 %v4125
      %v4127 = vand.u32 %v3290, 4294901760
      %4128 = vmatpush1.msra.mxu0 %v4127
      %v4129 = vand.u32 %v3289, 4294901760
      %4130 = vmatprep.subr.mxu0 %v4129
      %v4131 = vand.u32 %v3288, 4294901760
      %4132 = vmatpush1.msra.mxu0 %v4131
      %v4133 = vand.u32 %v3287, 4294901760
      %4134 = vmatprep.subr.mxu0 %v4133
      %v4135 = vand.u32 %v3286, 4294901760
      %4136 = vmatpush1.msra.mxu0 %v4135
      %v4137 = vand.u32 %v3285, 4294901760
      %4138 = vmatprep.subr.mxu0 %v4137
      %v4139 = vand.u32 %v3284, 4294901760
      %4140 = vmatpush1.msra.mxu0 %v4139
      %v4141 = vand.u32 %v3283, 4294901760
      %4142 = vmatprep.subr.mxu0 %v4141
      %v4143 = vand.u32 %v3282, 4294901760
      %4144 = vmatpush1.msra.mxu0 %v4143
      %v4145 = vand.u32 %v3281, 4294901760
      %4146 = vmatprep.subr.mxu0 %v4145
      %v4147 = vand.u32 %v3280, 4294901760
      %4148 = vmatpush1.msra.mxu0 %v4147
      %v4149 = vand.u32 %v3343, 4294901760
      %4150 = vmatprep.subr.mxu0 %v4149
      %v4151 = vand.u32 %v3342, 4294901760
      %4152 = vmatpush2.msra.mxu0 %v4151
      %v4153 = vand.u32 %v3341, 4294901760
      %4154 = vmatprep.subr.mxu0 %v4153
      %v4155 = vand.u32 %v3340, 4294901760
      %4156 = vmatpush2.msra.mxu0 %v4155
      %v4157 = vand.u32 %v3339, 4294901760
      %4158 = vmatprep.subr.mxu0 %v4157
      %v4159 = vand.u32 %v3338, 4294901760
      %4160 = vmatpush2.msra.mxu0 %v4159
      %v4161 = vand.u32 %v3337, 4294901760
      %4162 = vmatprep.subr.mxu0 %v4161
      %v4163 = vand.u32 %v3336, 4294901760
      %4164 = vmatpush2.msra.mxu0 %v4163
      %v4165 = vand.u32 %v3335, 4294901760
      %4166 = vmatprep.subr.mxu0 %v4165
      %v4167 = vand.u32 %v3334, 4294901760
      %4168 = vmatpush2.msra.mxu0 %v4167
      %v4169 = vand.u32 %v3333, 4294901760
      %4170 = vmatprep.subr.mxu0 %v4169
      %v4171 = vand.u32 %v3332, 4294901760
      %4172 = vmatpush2.msra.mxu0 %v4171
      %v4173 = vand.u32 %v3331, 4294901760
      %4174 = vmatprep.subr.mxu0 %v4173
      %v4175 = vand.u32 %v3330, 4294901760
      %4176 = vmatpush2.msra.mxu0 %v4175
      %v4177 = vand.u32 %v3329, 4294901760
      %4178 = vmatprep.subr.mxu0 %v4177
      %v4179 = vand.u32 %v3328, 4294901760
      %4180 = vmatpush2.msra.mxu0 %v4179
      %v4181 = vand.u32 %v3327, 4294901760
      %4182 = vmatprep.subr.mxu0 %v4181
      %v4183 = vand.u32 %v3326, 4294901760
      %4184 = vmatpush2.msra.mxu0 %v4183
      %v4185 = vand.u32 %v3325, 4294901760
      %4186 = vmatprep.subr.mxu0 %v4185
      %v4187 = vand.u32 %v3324, 4294901760
      %4188 = vmatpush2.msra.mxu0 %v4187
      %v4189 = vand.u32 %v3323, 4294901760
      %4190 = vmatprep.subr.mxu0 %v4189
      %v4191 = vand.u32 %v3322, 4294901760
      %4192 = vmatpush2.msra.mxu0 %v4191
      %v4193 = vand.u32 %v3321, 4294901760
      %4194 = vmatprep.subr.mxu0 %v4193
      %v4195 = vand.u32 %v3320, 4294901760
      %4196 = vmatpush2.msra.mxu0 %v4195
      %v4197 = vand.u32 %v3319, 4294901760
      %4198 = vmatprep.subr.mxu0 %v4197
      %v4199 = vand.u32 %v3318, 4294901760
      %4200 = vmatpush2.msra.mxu0 %v4199
      %v4201 = vand.u32 %v3317, 4294901760
      %4202 = vmatprep.subr.mxu0 %v4201
      %v4203 = vand.u32 %v3316, 4294901760
      %4204 = vmatpush2.msra.mxu0 %v4203
      %v4205 = vand.u32 %v3315, 4294901760
      %4206 = vmatprep.subr.mxu0 %v4205
      %v4207 = vand.u32 %v3314, 4294901760
      %4208 = vmatpush2.msra.mxu0 %v4207
      %v4209 = vand.u32 %v3313, 4294901760
      %4210 = vmatprep.subr.mxu0 %v4209
      %v4211 = vand.u32 %v3312, 4294901760
      %4212 = vmatpush2.msra.mxu0 %v4211
      %v4213 = vand.u32 %v3214, 4294901760
      %v4214 = vsub.f32 %v3214, %v4213
      %v4215 = vand.u32 %v4214, 4294901760
      %4216 = vmatprep.mubr.f32.mxu0 %v4215
      %v4217 = vand.u32 %v3208, 4294901760
      %v4218 = vsub.f32 %v3208, %v4217
      %v4219 = vand.u32 %v4218, 4294901760
      %4220 = vmatmul.mubr.f32.gmra.mxu0 %v4219
      %v4221 = vpop.f32.mrf.mxu0
      %v4222 = vadd.f32 %v4081, %v4221
      %v4223 = vpop.f32.mrf.mxu0
      %v4224 = vadd.f32 %v4083, %v4223
      %4225 = vdwg.mxu0
      %v4226 = vand.u32 %v3311, 4294901760
      %v4227 = vsub.f32 %v3311, %v4226
      %v4228 = vand.u32 %v4227, 4294901760
      %4229 = vmatprep.subr.mxu0 %v4228
      %v4230 = vand.u32 %v3310, 4294901760
      %v4231 = vsub.f32 %v3310, %v4230
      %v4232 = vand.u32 %v4231, 4294901760
      %4233 = vmatpush1.msra.mxu0 %v4232
      %v4234 = vand.u32 %v3309, 4294901760
      %v4235 = vsub.f32 %v3309, %v4234
      %v4236 = vand.u32 %v4235, 4294901760
      %4237 = vmatprep.subr.mxu0 %v4236
      %v4238 = vand.u32 %v3308, 4294901760
      %v4239 = vsub.f32 %v3308, %v4238
      %v4240 = vand.u32 %v4239, 4294901760
      %4241 = vmatpush1.msra.mxu0 %v4240
      %v4242 = vand.u32 %v3307, 4294901760
      %v4243 = vsub.f32 %v3307, %v4242
      %v4244 = vand.u32 %v4243, 4294901760
      %4245 = vmatprep.subr.mxu0 %v4244
      %v4246 = vand.u32 %v3306, 4294901760
      %v4247 = vsub.f32 %v3306, %v4246
      %v4248 = vand.u32 %v4247, 4294901760
      %4249 = vmatpush1.msra.mxu0 %v4248
      %v4250 = vand.u32 %v3305, 4294901760
      %v4251 = vsub.f32 %v3305, %v4250
      %v4252 = vand.u32 %v4251, 4294901760
      %4253 = vmatprep.subr.mxu0 %v4252
      %v4254 = vand.u32 %v3304, 4294901760
      %v4255 = vsub.f32 %v3304, %v4254
      %v4256 = vand.u32 %v4255, 4294901760
      %4257 = vmatpush1.msra.mxu0 %v4256
      %v4258 = vand.u32 %v3303, 4294901760
      %v4259 = vsub.f32 %v3303, %v4258
      %v4260 = vand.u32 %v4259, 4294901760
      %4261 = vmatprep.subr.mxu0 %v4260
      %v4262 = vand.u32 %v3302, 4294901760
      %v4263 = vsub.f32 %v3302, %v4262
      %v4264 = vand.u32 %v4263, 4294901760
      %4265 = vmatpush1.msra.mxu0 %v4264
      %v4266 = vand.u32 %v3301, 4294901760
      %v4267 = vsub.f32 %v3301, %v4266
      %v4268 = vand.u32 %v4267, 4294901760
      %4269 = vmatprep.subr.mxu0 %v4268
      %v4270 = vand.u32 %v3300, 4294901760
      %v4271 = vsub.f32 %v3300, %v4270
      %v4272 = vand.u32 %v4271, 4294901760
      %4273 = vmatpush1.msra.mxu0 %v4272
      %v4274 = vand.u32 %v3299, 4294901760
      %v4275 = vsub.f32 %v3299, %v4274
      %v4276 = vand.u32 %v4275, 4294901760
      %4277 = vmatprep.subr.mxu0 %v4276
      %v4278 = vand.u32 %v3298, 4294901760
      %v4279 = vsub.f32 %v3298, %v4278
      %v4280 = vand.u32 %v4279, 4294901760
      %4281 = vmatpush1.msra.mxu0 %v4280
      %v4282 = vand.u32 %v3297, 4294901760
      %v4283 = vsub.f32 %v3297, %v4282
      %v4284 = vand.u32 %v4283, 4294901760
      %4285 = vmatprep.subr.mxu0 %v4284
      %v4286 = vand.u32 %v3296, 4294901760
      %v4287 = vsub.f32 %v3296, %v4286
      %v4288 = vand.u32 %v4287, 4294901760
      %4289 = vmatpush1.msra.mxu0 %v4288
      %v4290 = vand.u32 %v3295, 4294901760
      %v4291 = vsub.f32 %v3295, %v4290
      %v4292 = vand.u32 %v4291, 4294901760
      %4293 = vmatprep.subr.mxu0 %v4292
      %v4294 = vand.u32 %v3294, 4294901760
      %v4295 = vsub.f32 %v3294, %v4294
      %v4296 = vand.u32 %v4295, 4294901760
      %4297 = vmatpush1.msra.mxu0 %v4296
      %v4298 = vand.u32 %v3293, 4294901760
      %v4299 = vsub.f32 %v3293, %v4298
      %v4300 = vand.u32 %v4299, 4294901760
      %4301 = vmatprep.subr.mxu0 %v4300
      %v4302 = vand.u32 %v3292, 4294901760
      %v4303 = vsub.f32 %v3292, %v4302
      %v4304 = vand.u32 %v4303, 4294901760
      %4305 = vmatpush1.msra.mxu0 %v4304
      %v4306 = vand.u32 %v3291, 4294901760
      %v4307 = vsub.f32 %v3291, %v4306
      %v4308 = vand.u32 %v4307, 4294901760
      %4309 = vmatprep.subr.mxu0 %v4308
      %v4310 = vand.u32 %v3290, 4294901760
      %v4311 = vsub.f32 %v3290, %v4310
      %v4312 = vand.u32 %v4311, 4294901760
      %4313 = vmatpush1.msra.mxu0 %v4312
      %v4314 = vand.u32 %v3289, 4294901760
      %v4315 = vsub.f32 %v3289, %v4314
      %v4316 = vand.u32 %v4315, 4294901760
      %4317 = vmatprep.subr.mxu0 %v4316
      %v4318 = vand.u32 %v3288, 4294901760
      %v4319 = vsub.f32 %v3288, %v4318
      %v4320 = vand.u32 %v4319, 4294901760
      %4321 = vmatpush1.msra.mxu0 %v4320
      %v4322 = vand.u32 %v3287, 4294901760
      %v4323 = vsub.f32 %v3287, %v4322
      %v4324 = vand.u32 %v4323, 4294901760
      %4325 = vmatprep.subr.mxu0 %v4324
      %v4326 = vand.u32 %v3286, 4294901760
      %v4327 = vsub.f32 %v3286, %v4326
      %v4328 = vand.u32 %v4327, 4294901760
      %4329 = vmatpush1.msra.mxu0 %v4328
      %v4330 = vand.u32 %v3285, 4294901760
      %v4331 = vsub.f32 %v3285, %v4330
      %v4332 = vand.u32 %v4331, 4294901760
      %4333 = vmatprep.subr.mxu0 %v4332
      %v4334 = vand.u32 %v3284, 4294901760
      %v4335 = vsub.f32 %v3284, %v4334
      %v4336 = vand.u32 %v4335, 4294901760
      %4337 = vmatpush1.msra.mxu0 %v4336
      %v4338 = vand.u32 %v3283, 4294901760
      %v4339 = vsub.f32 %v3283, %v4338
      %v4340 = vand.u32 %v4339, 4294901760
      %4341 = vmatprep.subr.mxu0 %v4340
      %v4342 = vand.u32 %v3282, 4294901760
      %v4343 = vsub.f32 %v3282, %v4342
      %v4344 = vand.u32 %v4343, 4294901760
      %4345 = vmatpush1.msra.mxu0 %v4344
      %v4346 = vand.u32 %v3281, 4294901760
      %v4347 = vsub.f32 %v3281, %v4346
      %v4348 = vand.u32 %v4347, 4294901760
      %4349 = vmatprep.subr.mxu0 %v4348
      %v4350 = vand.u32 %v3280, 4294901760
      %v4351 = vsub.f32 %v3280, %v4350
      %v4352 = vand.u32 %v4351, 4294901760
      %4353 = vmatpush1.msra.mxu0 %v4352
      %v4354 = vand.u32 %v3343, 4294901760
      %v4355 = vsub.f32 %v3343, %v4354
      %v4356 = vand.u32 %v4355, 4294901760
      %4357 = vmatprep.subr.mxu0 %v4356
      %v4358 = vand.u32 %v3342, 4294901760
      %v4359 = vsub.f32 %v3342, %v4358
      %v4360 = vand.u32 %v4359, 4294901760
      %4361 = vmatpush2.msra.mxu0 %v4360
      %v4362 = vand.u32 %v3341, 4294901760
      %v4363 = vsub.f32 %v3341, %v4362
      %v4364 = vand.u32 %v4363, 4294901760
      %4365 = vmatprep.subr.mxu0 %v4364
      %v4366 = vand.u32 %v3340, 4294901760
      %v4367 = vsub.f32 %v3340, %v4366
      %v4368 = vand.u32 %v4367, 4294901760
      %4369 = vmatpush2.msra.mxu0 %v4368
      %v4370 = vand.u32 %v3339, 4294901760
      %v4371 = vsub.f32 %v3339, %v4370
      %v4372 = vand.u32 %v4371, 4294901760
      %4373 = vmatprep.subr.mxu0 %v4372
      %v4374 = vand.u32 %v3338, 4294901760
      %v4375 = vsub.f32 %v3338, %v4374
      %v4376 = vand.u32 %v4375, 4294901760
      %4377 = vmatpush2.msra.mxu0 %v4376
      %v4378 = vand.u32 %v3337, 4294901760
      %v4379 = vsub.f32 %v3337, %v4378
      %v4380 = vand.u32 %v4379, 4294901760
      %4381 = vmatprep.subr.mxu0 %v4380
      %v4382 = vand.u32 %v3336, 4294901760
      %v4383 = vsub.f32 %v3336, %v4382
      %v4384 = vand.u32 %v4383, 4294901760
      %4385 = vmatpush2.msra.mxu0 %v4384
      %v4386 = vand.u32 %v3335, 4294901760
      %v4387 = vsub.f32 %v3335, %v4386
      %v4388 = vand.u32 %v4387, 4294901760
      %4389 = vmatprep.subr.mxu0 %v4388
      %v4390 = vand.u32 %v3334, 4294901760
      %v4391 = vsub.f32 %v3334, %v4390
      %v4392 = vand.u32 %v4391, 4294901760
      %4393 = vmatpush2.msra.mxu0 %v4392
      %v4394 = vand.u32 %v3333, 4294901760
      %v4395 = vsub.f32 %v3333, %v4394
      %v4396 = vand.u32 %v4395, 4294901760
      %4397 = vmatprep.subr.mxu0 %v4396
      %v4398 = vand.u32 %v3332, 4294901760
      %v4399 = vsub.f32 %v3332, %v4398
      %v4400 = vand.u32 %v4399, 4294901760
      %4401 = vmatpush2.msra.mxu0 %v4400
      %v4402 = vand.u32 %v3331, 4294901760
      %v4403 = vsub.f32 %v3331, %v4402
      %v4404 = vand.u32 %v4403, 4294901760
      %4405 = vmatprep.subr.mxu0 %v4404
      %v4406 = vand.u32 %v3330, 4294901760
      %v4407 = vsub.f32 %v3330, %v4406
      %v4408 = vand.u32 %v4407, 4294901760
      %4409 = vmatpush2.msra.mxu0 %v4408
      %v4410 = vand.u32 %v3329, 4294901760
      %v4411 = vsub.f32 %v3329, %v4410
      %v4412 = vand.u32 %v4411, 4294901760
      %4413 = vmatprep.subr.mxu0 %v4412
      %v4414 = vand.u32 %v3328, 4294901760
      %v4415 = vsub.f32 %v3328, %v4414
      %v4416 = vand.u32 %v4415, 4294901760
      %4417 = vmatpush2.msra.mxu0 %v4416
      %v4418 = vand.u32 %v3327, 4294901760
      %v4419 = vsub.f32 %v3327, %v4418
      %v4420 = vand.u32 %v4419, 4294901760
      %4421 = vmatprep.subr.mxu0 %v4420
      %v4422 = vand.u32 %v3326, 4294901760
      %v4423 = vsub.f32 %v3326, %v4422
      %v4424 = vand.u32 %v4423, 4294901760
      %4425 = vmatpush2.msra.mxu0 %v4424
      %v4426 = vand.u32 %v3325, 4294901760
      %v4427 = vsub.f32 %v3325, %v4426
      %v4428 = vand.u32 %v4427, 4294901760
      %4429 = vmatprep.subr.mxu0 %v4428
      %v4430 = vand.u32 %v3324, 4294901760
      %v4431 = vsub.f32 %v3324, %v4430
      %v4432 = vand.u32 %v4431, 4294901760
      %4433 = vmatpush2.msra.mxu0 %v4432
      %v4434 = vand.u32 %v3323, 4294901760
      %v4435 = vsub.f32 %v3323, %v4434
      %v4436 = vand.u32 %v4435, 4294901760
      %4437 = vmatprep.subr.mxu0 %v4436
      %v4438 = vand.u32 %v3322, 4294901760
      %v4439 = vsub.f32 %v3322, %v4438
      %v4440 = vand.u32 %v4439, 4294901760
      %4441 = vmatpush2.msra.mxu0 %v4440
      %v4442 = vand.u32 %v3321, 4294901760
      %v4443 = vsub.f32 %v3321, %v4442
      %v4444 = vand.u32 %v4443, 4294901760
      %4445 = vmatprep.subr.mxu0 %v4444
      %v4446 = vand.u32 %v3320, 4294901760
      %v4447 = vsub.f32 %v3320, %v4446
      %v4448 = vand.u32 %v4447, 4294901760
      %4449 = vmatpush2.msra.mxu0 %v4448
      %v4450 = vand.u32 %v3319, 4294901760
      %v4451 = vsub.f32 %v3319, %v4450
      %v4452 = vand.u32 %v4451, 4294901760
      %4453 = vmatprep.subr.mxu0 %v4452
      %v4454 = vand.u32 %v3318, 4294901760
      %v4455 = vsub.f32 %v3318, %v4454
      %v4456 = vand.u32 %v4455, 4294901760
      %4457 = vmatpush2.msra.mxu0 %v4456
      %v4458 = vand.u32 %v3317, 4294901760
      %v4459 = vsub.f32 %v3317, %v4458
      %v4460 = vand.u32 %v4459, 4294901760
      %4461 = vmatprep.subr.mxu0 %v4460
      %v4462 = vand.u32 %v3316, 4294901760
      %v4463 = vsub.f32 %v3316, %v4462
      %v4464 = vand.u32 %v4463, 4294901760
      %4465 = vmatpush2.msra.mxu0 %v4464
      %v4466 = vand.u32 %v3315, 4294901760
      %v4467 = vsub.f32 %v3315, %v4466
      %v4468 = vand.u32 %v4467, 4294901760
      %4469 = vmatprep.subr.mxu0 %v4468
      %v4470 = vand.u32 %v3314, 4294901760
      %v4471 = vsub.f32 %v3314, %v4470
      %v4472 = vand.u32 %v4471, 4294901760
      %4473 = vmatpush2.msra.mxu0 %v4472
      %v4474 = vand.u32 %v3313, 4294901760
      %v4475 = vsub.f32 %v3313, %v4474
      %v4476 = vand.u32 %v4475, 4294901760
      %4477 = vmatprep.subr.mxu0 %v4476
      %v4478 = vand.u32 %v3312, 4294901760
      %v4479 = vsub.f32 %v3312, %v4478
      %v4480 = vand.u32 %v4479, 4294901760
      %4481 = vmatpush2.msra.mxu0 %v4480
      %v4482 = vand.u32 %v3214, 4294901760
      %4483 = vmatprep.mubr.f32.mxu0 %v4482
      %v4484 = vand.u32 %v3208, 4294901760
      %4485 = vmatmul.mubr.f32.gmra.mxu0 %v4484
      %v4486 = vpop.f32.mrf.mxu0
      %v4487 = vadd.f32 %v4222, %v4486
      %v4488 = vpop.f32.mrf.mxu0
      %v4489 = vadd.f32 %v4224, %v4488
      %4490 = vdwg.mxu0
      %v4491 = vand.u32 %v3311, 4294901760
      %4492 = vmatprep.subr.mxu0 %v4491
      %v4493 = vand.u32 %v3310, 4294901760
      %4494 = vmatpush1.msra.mxu0 %v4493
      %v4495 = vand.u32 %v3309, 4294901760
      %4496 = vmatprep.subr.mxu0 %v4495
      %v4497 = vand.u32 %v3308, 4294901760
      %4498 = vmatpush1.msra.mxu0 %v4497
      %v4499 = vand.u32 %v3307, 4294901760
      %4500 = vmatprep.subr.mxu0 %v4499
      %v4501 = vand.u32 %v3306, 4294901760
      %4502 = vmatpush1.msra.mxu0 %v4501
      %v4503 = vand.u32 %v3305, 4294901760
      %4504 = vmatprep.subr.mxu0 %v4503
      %v4505 = vand.u32 %v3304, 4294901760
      %4506 = vmatpush1.msra.mxu0 %v4505
      %v4507 = vand.u32 %v3303, 4294901760
      %4508 = vmatprep.subr.mxu0 %v4507
      %v4509 = vand.u32 %v3302, 4294901760
      %4510 = vmatpush1.msra.mxu0 %v4509
      %v4511 = vand.u32 %v3301, 4294901760
      %4512 = vmatprep.subr.mxu0 %v4511
      %v4513 = vand.u32 %v3300, 4294901760
      %4514 = vmatpush1.msra.mxu0 %v4513
      %v4515 = vand.u32 %v3299, 4294901760
      %4516 = vmatprep.subr.mxu0 %v4515
      %v4517 = vand.u32 %v3298, 4294901760
      %4518 = vmatpush1.msra.mxu0 %v4517
      %v4519 = vand.u32 %v3297, 4294901760
      %4520 = vmatprep.subr.mxu0 %v4519
      %v4521 = vand.u32 %v3296, 4294901760
      %4522 = vmatpush1.msra.mxu0 %v4521
      %v4523 = vand.u32 %v3295, 4294901760
      %4524 = vmatprep.subr.mxu0 %v4523
      %v4525 = vand.u32 %v3294, 4294901760
      %4526 = vmatpush1.msra.mxu0 %v4525
      %v4527 = vand.u32 %v3293, 4294901760
      %4528 = vmatprep.subr.mxu0 %v4527
      %v4529 = vand.u32 %v3292, 4294901760
      %4530 = vmatpush1.msra.mxu0 %v4529
      %v4531 = vand.u32 %v3291, 4294901760
      %4532 = vmatprep.subr.mxu0 %v4531
      %v4533 = vand.u32 %v3290, 4294901760
      %4534 = vmatpush1.msra.mxu0 %v4533
      %v4535 = vand.u32 %v3289, 4294901760
      %4536 = vmatprep.subr.mxu0 %v4535
      %v4537 = vand.u32 %v3288, 4294901760
      %4538 = vmatpush1.msra.mxu0 %v4537
      %v4539 = vand.u32 %v3287, 4294901760
      %4540 = vmatprep.subr.mxu0 %v4539
      %v4541 = vand.u32 %v3286, 4294901760
      %4542 = vmatpush1.msra.mxu0 %v4541
      %v4543 = vand.u32 %v3285, 4294901760
      %4544 = vmatprep.subr.mxu0 %v4543
      %v4545 = vand.u32 %v3284, 4294901760
      %4546 = vmatpush1.msra.mxu0 %v4545
      %v4547 = vand.u32 %v3283, 4294901760
      %4548 = vmatprep.subr.mxu0 %v4547
      %v4549 = vand.u32 %v3282, 4294901760
      %4550 = vmatpush1.msra.mxu0 %v4549
      %v4551 = vand.u32 %v3281, 4294901760
      %4552 = vmatprep.subr.mxu0 %v4551
      %v4553 = vand.u32 %v3280, 4294901760
      %4554 = vmatpush1.msra.mxu0 %v4553
      %v4555 = vand.u32 %v3343, 4294901760
      %4556 = vmatprep.subr.mxu0 %v4555
      %v4557 = vand.u32 %v3342, 4294901760
      %4558 = vmatpush2.msra.mxu0 %v4557
      %v4559 = vand.u32 %v3341, 4294901760
      %4560 = vmatprep.subr.mxu0 %v4559
      %v4561 = vand.u32 %v3340, 4294901760
      %4562 = vmatpush2.msra.mxu0 %v4561
      %v4563 = vand.u32 %v3339, 4294901760
      %4564 = vmatprep.subr.mxu0 %v4563
      %v4565 = vand.u32 %v3338, 4294901760
      %4566 = vmatpush2.msra.mxu0 %v4565
      %v4567 = vand.u32 %v3337, 4294901760
      %4568 = vmatprep.subr.mxu0 %v4567
      %v4569 = vand.u32 %v3336, 4294901760
      %4570 = vmatpush2.msra.mxu0 %v4569
      %v4571 = vand.u32 %v3335, 4294901760
      %4572 = vmatprep.subr.mxu0 %v4571
      %v4573 = vand.u32 %v3334, 4294901760
      %4574 = vmatpush2.msra.mxu0 %v4573
      %v4575 = vand.u32 %v3333, 4294901760
      %4576 = vmatprep.subr.mxu0 %v4575
      %v4577 = vand.u32 %v3332, 4294901760
      %4578 = vmatpush2.msra.mxu0 %v4577
      %v4579 = vand.u32 %v3331, 4294901760
      %4580 = vmatprep.subr.mxu0 %v4579
      %v4581 = vand.u32 %v3330, 4294901760
      %4582 = vmatpush2.msra.mxu0 %v4581
      %v4583 = vand.u32 %v3329, 4294901760
      %4584 = vmatprep.subr.mxu0 %v4583
      %v4585 = vand.u32 %v3328, 4294901760
      %4586 = vmatpush2.msra.mxu0 %v4585
      %v4587 = vand.u32 %v3327, 4294901760
      %4588 = vmatprep.subr.mxu0 %v4587
      %v4589 = vand.u32 %v3326, 4294901760
      %4590 = vmatpush2.msra.mxu0 %v4589
      %v4591 = vand.u32 %v3325, 4294901760
      %4592 = vmatprep.subr.mxu0 %v4591
      %v4593 = vand.u32 %v3324, 4294901760
      %4594 = vmatpush2.msra.mxu0 %v4593
      %v4595 = vand.u32 %v3323, 4294901760
      %4596 = vmatprep.subr.mxu0 %v4595
      %v4597 = vand.u32 %v3322, 4294901760
      %4598 = vmatpush2.msra.mxu0 %v4597
      %v4599 = vand.u32 %v3321, 4294901760
      %4600 = vmatprep.subr.mxu0 %v4599
      %v4601 = vand.u32 %v3320, 4294901760
      %4602 = vmatpush2.msra.mxu0 %v4601
      %v4603 = vand.u32 %v3319, 4294901760
      %4604 = vmatprep.subr.mxu0 %v4603
      %v4605 = vand.u32 %v3318, 4294901760
      %4606 = vmatpush2.msra.mxu0 %v4605
      %v4607 = vand.u32 %v3317, 4294901760
      %4608 = vmatprep.subr.mxu0 %v4607
      %v4609 = vand.u32 %v3316, 4294901760
      %4610 = vmatpush2.msra.mxu0 %v4609
      %v4611 = vand.u32 %v3315, 4294901760
      %4612 = vmatprep.subr.mxu0 %v4611
      %v4613 = vand.u32 %v3314, 4294901760
      %4614 = vmatpush2.msra.mxu0 %v4613
      %v4615 = vand.u32 %v3313, 4294901760
      %4616 = vmatprep.subr.mxu0 %v4615
      %v4617 = vand.u32 %v3312, 4294901760
      %4618 = vmatpush2.msra.mxu0 %v4617
      %v4619 = vand.u32 %v3214, 4294901760
      %4620 = vmatprep.mubr.f32.mxu0 %v4619
      %v4621 = vand.u32 %v3208, 4294901760
      %4622 = vmatmul.mubr.f32.gmra.mxu0 %v4621
      %v4623 = vpop.f32.mrf.mxu0
      %v4624 = vadd.f32 %v4487, %v4623
      %v4625 = vpop.f32.mrf.mxu0
      %v4626 = vadd.f32 %v4489, %v4625
      %4627 = vdwg.mxu0
      %v4628 = vand.u32 %v3246, 4294901760
      %4629 = vmatprep.subr.mxu0 %v4628
      %v4630 = vand.u32 %v3245, 4294901760
      %4631 = vmatpush1.msra.mxu0 %v4630
      %v4632 = vand.u32 %v3244, 4294901760
      %4633 = vmatprep.subr.mxu0 %v4632
      %v4634 = vand.u32 %v3243, 4294901760
      %4635 = vmatpush1.msra.mxu0 %v4634
      %v4636 = vand.u32 %v3242, 4294901760
      %4637 = vmatprep.subr.mxu0 %v4636
      %v4638 = vand.u32 %v3241, 4294901760
      %4639 = vmatpush1.msra.mxu0 %v4638
      %v4640 = vand.u32 %v3240, 4294901760
      %4641 = vmatprep.subr.mxu0 %v4640
      %v4642 = vand.u32 %v3239, 4294901760
      %4643 = vmatpush1.msra.mxu0 %v4642
      %v4644 = vand.u32 %v3238, 4294901760
      %4645 = vmatprep.subr.mxu0 %v4644
      %v4646 = vand.u32 %v3237, 4294901760
      %4647 = vmatpush1.msra.mxu0 %v4646
      %v4648 = vand.u32 %v3236, 4294901760
      %4649 = vmatprep.subr.mxu0 %v4648
      %v4650 = vand.u32 %v3235, 4294901760
      %4651 = vmatpush1.msra.mxu0 %v4650
      %v4652 = vand.u32 %v3234, 4294901760
      %4653 = vmatprep.subr.mxu0 %v4652
      %v4654 = vand.u32 %v3233, 4294901760
      %4655 = vmatpush1.msra.mxu0 %v4654
      %v4656 = vand.u32 %v3232, 4294901760
      %4657 = vmatprep.subr.mxu0 %v4656
      %v4658 = vand.u32 %v3231, 4294901760
      %4659 = vmatpush1.msra.mxu0 %v4658
      %v4660 = vand.u32 %v3230, 4294901760
      %4661 = vmatprep.subr.mxu0 %v4660
      %v4662 = vand.u32 %v3229, 4294901760
      %4663 = vmatpush1.msra.mxu0 %v4662
      %v4664 = vand.u32 %v3228, 4294901760
      %4665 = vmatprep.subr.mxu0 %v4664
      %v4666 = vand.u32 %v3227, 4294901760
      %4667 = vmatpush1.msra.mxu0 %v4666
      %v4668 = vand.u32 %v3226, 4294901760
      %4669 = vmatprep.subr.mxu0 %v4668
      %v4670 = vand.u32 %v3225, 4294901760
      %4671 = vmatpush1.msra.mxu0 %v4670
      %v4672 = vand.u32 %v3224, 4294901760
      %4673 = vmatprep.subr.mxu0 %v4672
      %v4674 = vand.u32 %v3223, 4294901760
      %4675 = vmatpush1.msra.mxu0 %v4674
      %v4676 = vand.u32 %v3222, 4294901760
      %4677 = vmatprep.subr.mxu0 %v4676
      %v4678 = vand.u32 %v3221, 4294901760
      %4679 = vmatpush1.msra.mxu0 %v4678
      %v4680 = vand.u32 %v3220, 4294901760
      %4681 = vmatprep.subr.mxu0 %v4680
      %v4682 = vand.u32 %v3219, 4294901760
      %4683 = vmatpush1.msra.mxu0 %v4682
      %v4684 = vand.u32 %v3218, 4294901760
      %4685 = vmatprep.subr.mxu0 %v4684
      %v4686 = vand.u32 %v3217, 4294901760
      %4687 = vmatpush1.msra.mxu0 %v4686
      %v4688 = vand.u32 %v3216, 4294901760
      %4689 = vmatprep.subr.mxu0 %v4688
      %v4690 = vand.u32 %v3215, 4294901760
      %4691 = vmatpush1.msra.mxu0 %v4690
      %v4692 = vand.u32 %v3278, 4294901760
      %4693 = vmatprep.subr.mxu0 %v4692
      %v4694 = vand.u32 %v3277, 4294901760
      %4695 = vmatpush2.msra.mxu0 %v4694
      %v4696 = vand.u32 %v3276, 4294901760
      %4697 = vmatprep.subr.mxu0 %v4696
      %v4698 = vand.u32 %v3275, 4294901760
      %4699 = vmatpush2.msra.mxu0 %v4698
      %v4700 = vand.u32 %v3274, 4294901760
      %4701 = vmatprep.subr.mxu0 %v4700
      %v4702 = vand.u32 %v3273, 4294901760
      %4703 = vmatpush2.msra.mxu0 %v4702
      %v4704 = vand.u32 %v3272, 4294901760
      %4705 = vmatprep.subr.mxu0 %v4704
      %v4706 = vand.u32 %v3271, 4294901760
      %4707 = vmatpush2.msra.mxu0 %v4706
      %v4708 = vand.u32 %v3270, 4294901760
      %4709 = vmatprep.subr.mxu0 %v4708
      %v4710 = vand.u32 %v3269, 4294901760
      %4711 = vmatpush2.msra.mxu0 %v4710
      %v4712 = vand.u32 %v3268, 4294901760
      %4713 = vmatprep.subr.mxu0 %v4712
      %v4714 = vand.u32 %v3267, 4294901760
      %4715 = vmatpush2.msra.mxu0 %v4714
      %v4716 = vand.u32 %v3266, 4294901760
      %4717 = vmatprep.subr.mxu0 %v4716
      %v4718 = vand.u32 %v3265, 4294901760
      %4719 = vmatpush2.msra.mxu0 %v4718
      %v4720 = vand.u32 %v3264, 4294901760
      %4721 = vmatprep.subr.mxu0 %v4720
      %v4722 = vand.u32 %v3263, 4294901760
      %4723 = vmatpush2.msra.mxu0 %v4722
      %v4724 = vand.u32 %v3262, 4294901760
      %4725 = vmatprep.subr.mxu0 %v4724
      %v4726 = vand.u32 %v3261, 4294901760
      %4727 = vmatpush2.msra.mxu0 %v4726
      %v4728 = vand.u32 %v3260, 4294901760
      %4729 = vmatprep.subr.mxu0 %v4728
      %v4730 = vand.u32 %v3259, 4294901760
      %4731 = vmatpush2.msra.mxu0 %v4730
      %v4732 = vand.u32 %v3258, 4294901760
      %4733 = vmatprep.subr.mxu0 %v4732
      %v4734 = vand.u32 %v3257, 4294901760
      %4735 = vmatpush2.msra.mxu0 %v4734
      %v4736 = vand.u32 %v3256, 4294901760
      %4737 = vmatprep.subr.mxu0 %v4736
      %v4738 = vand.u32 %v3255, 4294901760
      %4739 = vmatpush2.msra.mxu0 %v4738
      %v4740 = vand.u32 %v3254, 4294901760
      %4741 = vmatprep.subr.mxu0 %v4740
      %v4742 = vand.u32 %v3253, 4294901760
      %4743 = vmatpush2.msra.mxu0 %v4742
      %v4744 = vand.u32 %v3252, 4294901760
      %4745 = vmatprep.subr.mxu0 %v4744
      %v4746 = vand.u32 %v3251, 4294901760
      %4747 = vmatpush2.msra.mxu0 %v4746
      %v4748 = vand.u32 %v3250, 4294901760
      %4749 = vmatprep.subr.mxu0 %v4748
      %v4750 = vand.u32 %v3249, 4294901760
      %4751 = vmatpush2.msra.mxu0 %v4750
      %v4752 = vand.u32 %v3248, 4294901760
      %4753 = vmatprep.subr.mxu0 %v4752
      %v4754 = vand.u32 %v3247, 4294901760
      %4755 = vmatpush2.msra.mxu0 %v4754
      %v4756 = vand.u32 %v3202, 4294901760
      %v4757 = vsub.f32 %v3202, %v4756
      %v4758 = vand.u32 %v4757, 4294901760
      %v4759 = vsub.f32 %v4757, %v4758
      %v4760 = vand.u32 %v4759, 4294901760
      %4761 = vmatprep.mubr.f32.mxu0 %v4760
      %v4762 = vand.u32 %v3201, 4294901760
      %v4763 = vsub.f32 %v3201, %v4762
      %v4764 = vand.u32 %v4763, 4294901760
      %v4765 = vsub.f32 %v4763, %v4764
      %v4766 = vand.u32 %v4765, 4294901760
      %4767 = vmatmul.mubr.f32.gmra.mxu0 %v4766
      %v4768 = vpop.f32.mrf.mxu0
      %v4769 = vadd.f32 %v4624, %v4768
      %v4770 = vpop.f32.mrf.mxu0
      %v4771 = vadd.f32 %v4626, %v4770
      %4772 = vdwg.mxu0
      %v4773 = vand.u32 %v3246, 4294901760
      %v4774 = vsub.f32 %v3246, %v4773
      %v4775 = vand.u32 %v4774, 4294901760
      %v4776 = vsub.f32 %v4774, %v4775
      %v4777 = vand.u32 %v4776, 4294901760
      %4778 = vmatprep.subr.mxu0 %v4777
      %v4779 = vand.u32 %v3245, 4294901760
      %v4780 = vsub.f32 %v3245, %v4779
      %v4781 = vand.u32 %v4780, 4294901760
      %v4782 = vsub.f32 %v4780, %v4781
      %v4783 = vand.u32 %v4782, 4294901760
      %4784 = vmatpush1.msra.mxu0 %v4783
      %v4785 = vand.u32 %v3244, 4294901760
      %v4786 = vsub.f32 %v3244, %v4785
      %v4787 = vand.u32 %v4786, 4294901760
      %v4788 = vsub.f32 %v4786, %v4787
      %v4789 = vand.u32 %v4788, 4294901760
      %4790 = vmatprep.subr.mxu0 %v4789
      %v4791 = vand.u32 %v3243, 4294901760
      %v4792 = vsub.f32 %v3243, %v4791
      %v4793 = vand.u32 %v4792, 4294901760
      %v4794 = vsub.f32 %v4792, %v4793
      %v4795 = vand.u32 %v4794, 4294901760
      %4796 = vmatpush1.msra.mxu0 %v4795
      %v4797 = vand.u32 %v3242, 4294901760
      %v4798 = vsub.f32 %v3242, %v4797
      %v4799 = vand.u32 %v4798, 4294901760
      %v4800 = vsub.f32 %v4798, %v4799
      %v4801 = vand.u32 %v4800, 4294901760
      %4802 = vmatprep.subr.mxu0 %v4801
      %v4803 = vand.u32 %v3241, 4294901760
      %v4804 = vsub.f32 %v3241, %v4803
      %v4805 = vand.u32 %v4804, 4294901760
      %v4806 = vsub.f32 %v4804, %v4805
      %v4807 = vand.u32 %v4806, 4294901760
      %4808 = vmatpush1.msra.mxu0 %v4807
      %v4809 = vand.u32 %v3240, 4294901760
      %v4810 = vsub.f32 %v3240, %v4809
      %v4811 = vand.u32 %v4810, 4294901760
      %v4812 = vsub.f32 %v4810, %v4811
      %v4813 = vand.u32 %v4812, 4294901760
      %4814 = vmatprep.subr.mxu0 %v4813
      %v4815 = vand.u32 %v3239, 4294901760
      %v4816 = vsub.f32 %v3239, %v4815
      %v4817 = vand.u32 %v4816, 4294901760
      %v4818 = vsub.f32 %v4816, %v4817
      %v4819 = vand.u32 %v4818, 4294901760
      %4820 = vmatpush1.msra.mxu0 %v4819
      %v4821 = vand.u32 %v3238, 4294901760
      %v4822 = vsub.f32 %v3238, %v4821
      %v4823 = vand.u32 %v4822, 4294901760
      %v4824 = vsub.f32 %v4822, %v4823
      %v4825 = vand.u32 %v4824, 4294901760
      %4826 = vmatprep.subr.mxu0 %v4825
      %v4827 = vand.u32 %v3237, 4294901760
      %v4828 = vsub.f32 %v3237, %v4827
      %v4829 = vand.u32 %v4828, 4294901760
      %v4830 = vsub.f32 %v4828, %v4829
      %v4831 = vand.u32 %v4830, 4294901760
      %4832 = vmatpush1.msra.mxu0 %v4831
      %v4833 = vand.u32 %v3236, 4294901760
      %v4834 = vsub.f32 %v3236, %v4833
      %v4835 = vand.u32 %v4834, 4294901760
      %v4836 = vsub.f32 %v4834, %v4835
      %v4837 = vand.u32 %v4836, 4294901760
      %4838 = vmatprep.subr.mxu0 %v4837
      %v4839 = vand.u32 %v3235, 4294901760
      %v4840 = vsub.f32 %v3235, %v4839
      %v4841 = vand.u32 %v4840, 4294901760
      %v4842 = vsub.f32 %v4840, %v4841
      %v4843 = vand.u32 %v4842, 4294901760
      %4844 = vmatpush1.msra.mxu0 %v4843
      %v4845 = vand.u32 %v3234, 4294901760
      %v4846 = vsub.f32 %v3234, %v4845
      %v4847 = vand.u32 %v4846, 4294901760
      %v4848 = vsub.f32 %v4846, %v4847
      %v4849 = vand.u32 %v4848, 4294901760
      %4850 = vmatprep.subr.mxu0 %v4849
      %v4851 = vand.u32 %v3233, 4294901760
      %v4852 = vsub.f32 %v3233, %v4851
      %v4853 = vand.u32 %v4852, 4294901760
      %v4854 = vsub.f32 %v4852, %v4853
      %v4855 = vand.u32 %v4854, 4294901760
      %4856 = vmatpush1.msra.mxu0 %v4855
      %v4857 = vand.u32 %v3232, 4294901760
      %v4858 = vsub.f32 %v3232, %v4857
      %v4859 = vand.u32 %v4858, 4294901760
      %v4860 = vsub.f32 %v4858, %v4859
      %v4861 = vand.u32 %v4860, 4294901760
      %4862 = vmatprep.subr.mxu0 %v4861
      %v4863 = vand.u32 %v3231, 4294901760
      %v4864 = vsub.f32 %v3231, %v4863
      %v4865 = vand.u32 %v4864, 4294901760
      %v4866 = vsub.f32 %v4864, %v4865
      %v4867 = vand.u32 %v4866, 4294901760
      %4868 = vmatpush1.msra.mxu0 %v4867
      %v4869 = vand.u32 %v3230, 4294901760
      %v4870 = vsub.f32 %v3230, %v4869
      %v4871 = vand.u32 %v4870, 4294901760
      %v4872 = vsub.f32 %v4870, %v4871
      %v4873 = vand.u32 %v4872, 4294901760
      %4874 = vmatprep.subr.mxu0 %v4873
      %v4875 = vand.u32 %v3229, 4294901760
      %v4876 = vsub.f32 %v3229, %v4875
      %v4877 = vand.u32 %v4876, 4294901760
      %v4878 = vsub.f32 %v4876, %v4877
      %v4879 = vand.u32 %v4878, 4294901760
      %4880 = vmatpush1.msra.mxu0 %v4879
      %v4881 = vand.u32 %v3228, 4294901760
      %v4882 = vsub.f32 %v3228, %v4881
      %v4883 = vand.u32 %v4882, 4294901760
      %v4884 = vsub.f32 %v4882, %v4883
      %v4885 = vand.u32 %v4884, 4294901760
      %4886 = vmatprep.subr.mxu0 %v4885
      %v4887 = vand.u32 %v3227, 4294901760
      %v4888 = vsub.f32 %v3227, %v4887
      %v4889 = vand.u32 %v4888, 4294901760
      %v4890 = vsub.f32 %v4888, %v4889
      %v4891 = vand.u32 %v4890, 4294901760
      %4892 = vmatpush1.msra.mxu0 %v4891
      %v4893 = vand.u32 %v3226, 4294901760
      %v4894 = vsub.f32 %v3226, %v4893
      %v4895 = vand.u32 %v4894, 4294901760
      %v4896 = vsub.f32 %v4894, %v4895
      %v4897 = vand.u32 %v4896, 4294901760
      %4898 = vmatprep.subr.mxu0 %v4897
      %v4899 = vand.u32 %v3225, 4294901760
      %v4900 = vsub.f32 %v3225, %v4899
      %v4901 = vand.u32 %v4900, 4294901760
      %v4902 = vsub.f32 %v4900, %v4901
      %v4903 = vand.u32 %v4902, 4294901760
      %4904 = vmatpush1.msra.mxu0 %v4903
      %v4905 = vand.u32 %v3224, 4294901760
      %v4906 = vsub.f32 %v3224, %v4905
      %v4907 = vand.u32 %v4906, 4294901760
      %v4908 = vsub.f32 %v4906, %v4907
      %v4909 = vand.u32 %v4908, 4294901760
      %4910 = vmatprep.subr.mxu0 %v4909
      %v4911 = vand.u32 %v3223, 4294901760
      %v4912 = vsub.f32 %v3223, %v4911
      %v4913 = vand.u32 %v4912, 4294901760
      %v4914 = vsub.f32 %v4912, %v4913
      %v4915 = vand.u32 %v4914, 4294901760
      %4916 = vmatpush1.msra.mxu0 %v4915
      %v4917 = vand.u32 %v3222, 4294901760
      %v4918 = vsub.f32 %v3222, %v4917
      %v4919 = vand.u32 %v4918, 4294901760
      %v4920 = vsub.f32 %v4918, %v4919
      %v4921 = vand.u32 %v4920, 4294901760
      %4922 = vmatprep.subr.mxu0 %v4921
      %v4923 = vand.u32 %v3221, 4294901760
      %v4924 = vsub.f32 %v3221, %v4923
      %v4925 = vand.u32 %v4924, 4294901760
      %v4926 = vsub.f32 %v4924, %v4925
      %v4927 = vand.u32 %v4926, 4294901760
      %4928 = vmatpush1.msra.mxu0 %v4927
      %v4929 = vand.u32 %v3220, 4294901760
      %v4930 = vsub.f32 %v3220, %v4929
      %v4931 = vand.u32 %v4930, 4294901760
      %v4932 = vsub.f32 %v4930, %v4931
      %v4933 = vand.u32 %v4932, 4294901760
      %4934 = vmatprep.subr.mxu0 %v4933
      %v4935 = vand.u32 %v3219, 4294901760
      %v4936 = vsub.f32 %v3219, %v4935
      %v4937 = vand.u32 %v4936, 4294901760
      %v4938 = vsub.f32 %v4936, %v4937
      %v4939 = vand.u32 %v4938, 4294901760
      %4940 = vmatpush1.msra.mxu0 %v4939
      %v4941 = vand.u32 %v3218, 4294901760
      %v4942 = vsub.f32 %v3218, %v4941
      %v4943 = vand.u32 %v4942, 4294901760
      %v4944 = vsub.f32 %v4942, %v4943
      %v4945 = vand.u32 %v4944, 4294901760
      %4946 = vmatprep.subr.mxu0 %v4945
      %v4947 = vand.u32 %v3217, 4294901760
      %v4948 = vsub.f32 %v3217, %v4947
      %v4949 = vand.u32 %v4948, 4294901760
      %v4950 = vsub.f32 %v4948, %v4949
      %v4951 = vand.u32 %v4950, 4294901760
      %4952 = vmatpush1.msra.mxu0 %v4951
      %v4953 = vand.u32 %v3216, 4294901760
      %v4954 = vsub.f32 %v3216, %v4953
      %v4955 = vand.u32 %v4954, 4294901760
      %v4956 = vsub.f32 %v4954, %v4955
      %v4957 = vand.u32 %v4956, 4294901760
      %4958 = vmatprep.subr.mxu0 %v4957
      %v4959 = vand.u32 %v3215, 4294901760
      %v4960 = vsub.f32 %v3215, %v4959
      %v4961 = vand.u32 %v4960, 4294901760
      %v4962 = vsub.f32 %v4960, %v4961
      %v4963 = vand.u32 %v4962, 4294901760
      %4964 = vmatpush1.msra.mxu0 %v4963
      %v4965 = vand.u32 %v3278, 4294901760
      %v4966 = vsub.f32 %v3278, %v4965
      %v4967 = vand.u32 %v4966, 4294901760
      %v4968 = vsub.f32 %v4966, %v4967
      %v4969 = vand.u32 %v4968, 4294901760
      %4970 = vmatprep.subr.mxu0 %v4969
      %v4971 = vand.u32 %v3277, 4294901760
      %v4972 = vsub.f32 %v3277, %v4971
      %v4973 = vand.u32 %v4972, 4294901760
      %v4974 = vsub.f32 %v4972, %v4973
      %v4975 = vand.u32 %v4974, 4294901760
      %4976 = vmatpush2.msra.mxu0 %v4975
      %v4977 = vand.u32 %v3276, 4294901760
      %v4978 = vsub.f32 %v3276, %v4977
      %v4979 = vand.u32 %v4978, 4294901760
      %v4980 = vsub.f32 %v4978, %v4979
      %v4981 = vand.u32 %v4980, 4294901760
      %4982 = vmatprep.subr.mxu0 %v4981
      %v4983 = vand.u32 %v3275, 4294901760
      %v4984 = vsub.f32 %v3275, %v4983
      %v4985 = vand.u32 %v4984, 4294901760
      %v4986 = vsub.f32 %v4984, %v4985
      %v4987 = vand.u32 %v4986, 4294901760
      %4988 = vmatpush2.msra.mxu0 %v4987
      %v4989 = vand.u32 %v3274, 4294901760
      %v4990 = vsub.f32 %v3274, %v4989
      %v4991 = vand.u32 %v4990, 4294901760
      %v4992 = vsub.f32 %v4990, %v4991
      %v4993 = vand.u32 %v4992, 4294901760
      %4994 = vmatprep.subr.mxu0 %v4993
      %v4995 = vand.u32 %v3273, 4294901760
      %v4996 = vsub.f32 %v3273, %v4995
      %v4997 = vand.u32 %v4996, 4294901760
      %v4998 = vsub.f32 %v4996, %v4997
      %v4999 = vand.u32 %v4998, 4294901760
      %5000 = vmatpush2.msra.mxu0 %v4999
      %v5001 = vand.u32 %v3272, 4294901760
      %v5002 = vsub.f32 %v3272, %v5001
      %v5003 = vand.u32 %v5002, 4294901760
      %v5004 = vsub.f32 %v5002, %v5003
      %v5005 = vand.u32 %v5004, 4294901760
      %5006 = vmatprep.subr.mxu0 %v5005
      %v5007 = vand.u32 %v3271, 4294901760
      %v5008 = vsub.f32 %v3271, %v5007
      %v5009 = vand.u32 %v5008, 4294901760
      %v5010 = vsub.f32 %v5008, %v5009
      %v5011 = vand.u32 %v5010, 4294901760
      %5012 = vmatpush2.msra.mxu0 %v5011
      %v5013 = vand.u32 %v3270, 4294901760
      %v5014 = vsub.f32 %v3270, %v5013
      %v5015 = vand.u32 %v5014, 4294901760
      %v5016 = vsub.f32 %v5014, %v5015
      %v5017 = vand.u32 %v5016, 4294901760
      %5018 = vmatprep.subr.mxu0 %v5017
      %v5019 = vand.u32 %v3269, 4294901760
      %v5020 = vsub.f32 %v3269, %v5019
      %v5021 = vand.u32 %v5020, 4294901760
      %v5022 = vsub.f32 %v5020, %v5021
      %v5023 = vand.u32 %v5022, 4294901760
      %5024 = vmatpush2.msra.mxu0 %v5023
      %v5025 = vand.u32 %v3268, 4294901760
      %v5026 = vsub.f32 %v3268, %v5025
      %v5027 = vand.u32 %v5026, 4294901760
      %v5028 = vsub.f32 %v5026, %v5027
      %v5029 = vand.u32 %v5028, 4294901760
      %5030 = vmatprep.subr.mxu0 %v5029
      %v5031 = vand.u32 %v3267, 4294901760
      %v5032 = vsub.f32 %v3267, %v5031
      %v5033 = vand.u32 %v5032, 4294901760
      %v5034 = vsub.f32 %v5032, %v5033
      %v5035 = vand.u32 %v5034, 4294901760
      %5036 = vmatpush2.msra.mxu0 %v5035
      %v5037 = vand.u32 %v3266, 4294901760
      %v5038 = vsub.f32 %v3266, %v5037
      %v5039 = vand.u32 %v5038, 4294901760
      %v5040 = vsub.f32 %v5038, %v5039
      %v5041 = vand.u32 %v5040, 4294901760
      %5042 = vmatprep.subr.mxu0 %v5041
      %v5043 = vand.u32 %v3265, 4294901760
      %v5044 = vsub.f32 %v3265, %v5043
      %v5045 = vand.u32 %v5044, 4294901760
      %v5046 = vsub.f32 %v5044, %v5045
      %v5047 = vand.u32 %v5046, 4294901760
      %5048 = vmatpush2.msra.mxu0 %v5047
      %v5049 = vand.u32 %v3264, 4294901760
      %v5050 = vsub.f32 %v3264, %v5049
      %v5051 = vand.u32 %v5050, 4294901760
      %v5052 = vsub.f32 %v5050, %v5051
      %v5053 = vand.u32 %v5052, 4294901760
      %5054 = vmatprep.subr.mxu0 %v5053
      %v5055 = vand.u32 %v3263, 4294901760
      %v5056 = vsub.f32 %v3263, %v5055
      %v5057 = vand.u32 %v5056, 4294901760
      %v5058 = vsub.f32 %v5056, %v5057
      %v5059 = vand.u32 %v5058, 4294901760
      %5060 = vmatpush2.msra.mxu0 %v5059
      %v5061 = vand.u32 %v3262, 4294901760
      %v5062 = vsub.f32 %v3262, %v5061
      %v5063 = vand.u32 %v5062, 4294901760
      %v5064 = vsub.f32 %v5062, %v5063
      %v5065 = vand.u32 %v5064, 4294901760
      %5066 = vmatprep.subr.mxu0 %v5065
      %v5067 = vand.u32 %v3261, 4294901760
      %v5068 = vsub.f32 %v3261, %v5067
      %v5069 = vand.u32 %v5068, 4294901760
      %v5070 = vsub.f32 %v5068, %v5069
      %v5071 = vand.u32 %v5070, 4294901760
      %5072 = vmatpush2.msra.mxu0 %v5071
      %v5073 = vand.u32 %v3260, 4294901760
      %v5074 = vsub.f32 %v3260, %v5073
      %v5075 = vand.u32 %v5074, 4294901760
      %v5076 = vsub.f32 %v5074, %v5075
      %v5077 = vand.u32 %v5076, 4294901760
      %5078 = vmatprep.subr.mxu0 %v5077
      %v5079 = vand.u32 %v3259, 4294901760
      %v5080 = vsub.f32 %v3259, %v5079
      %v5081 = vand.u32 %v5080, 4294901760
      %v5082 = vsub.f32 %v5080, %v5081
      %v5083 = vand.u32 %v5082, 4294901760
      %5084 = vmatpush2.msra.mxu0 %v5083
      %v5085 = vand.u32 %v3258, 4294901760
      %v5086 = vsub.f32 %v3258, %v5085
      %v5087 = vand.u32 %v5086, 4294901760
      %v5088 = vsub.f32 %v5086, %v5087
      %v5089 = vand.u32 %v5088, 4294901760
      %5090 = vmatprep.subr.mxu0 %v5089
      %v5091 = vand.u32 %v3257, 4294901760
      %v5092 = vsub.f32 %v3257, %v5091
      %v5093 = vand.u32 %v5092, 4294901760
      %v5094 = vsub.f32 %v5092, %v5093
      %v5095 = vand.u32 %v5094, 4294901760
      %5096 = vmatpush2.msra.mxu0 %v5095
      %v5097 = vand.u32 %v3256, 4294901760
      %v5098 = vsub.f32 %v3256, %v5097
      %v5099 = vand.u32 %v5098, 4294901760
      %v5100 = vsub.f32 %v5098, %v5099
      %v5101 = vand.u32 %v5100, 4294901760
      %5102 = vmatprep.subr.mxu0 %v5101
      %v5103 = vand.u32 %v3255, 4294901760
      %v5104 = vsub.f32 %v3255, %v5103
      %v5105 = vand.u32 %v5104, 4294901760
      %v5106 = vsub.f32 %v5104, %v5105
      %v5107 = vand.u32 %v5106, 4294901760
      %5108 = vmatpush2.msra.mxu0 %v5107
      %v5109 = vand.u32 %v3254, 4294901760
      %v5110 = vsub.f32 %v3254, %v5109
      %v5111 = vand.u32 %v5110, 4294901760
      %v5112 = vsub.f32 %v5110, %v5111
      %v5113 = vand.u32 %v5112, 4294901760
      %5114 = vmatprep.subr.mxu0 %v5113
      %v5115 = vand.u32 %v3253, 4294901760
      %v5116 = vsub.f32 %v3253, %v5115
      %v5117 = vand.u32 %v5116, 4294901760
      %v5118 = vsub.f32 %v5116, %v5117
      %v5119 = vand.u32 %v5118, 4294901760
      %5120 = vmatpush2.msra.mxu0 %v5119
      %v5121 = vand.u32 %v3252, 4294901760
      %v5122 = vsub.f32 %v3252, %v5121
      %v5123 = vand.u32 %v5122, 4294901760
      %v5124 = vsub.f32 %v5122, %v5123
      %v5125 = vand.u32 %v5124, 4294901760
      %5126 = vmatprep.subr.mxu0 %v5125
      %v5127 = vand.u32 %v3251, 4294901760
      %v5128 = vsub.f32 %v3251, %v5127
      %v5129 = vand.u32 %v5128, 4294901760
      %v5130 = vsub.f32 %v5128, %v5129
      %v5131 = vand.u32 %v5130, 4294901760
      %5132 = vmatpush2.msra.mxu0 %v5131
      %v5133 = vand.u32 %v3250, 4294901760
      %v5134 = vsub.f32 %v3250, %v5133
      %v5135 = vand.u32 %v5134, 4294901760
      %v5136 = vsub.f32 %v5134, %v5135
      %v5137 = vand.u32 %v5136, 4294901760
      %5138 = vmatprep.subr.mxu0 %v5137
      %v5139 = vand.u32 %v3249, 4294901760
      %v5140 = vsub.f32 %v3249, %v5139
      %v5141 = vand.u32 %v5140, 4294901760
      %v5142 = vsub.f32 %v5140, %v5141
      %v5143 = vand.u32 %v5142, 4294901760
      %5144 = vmatpush2.msra.mxu0 %v5143
      %v5145 = vand.u32 %v3248, 4294901760
      %v5146 = vsub.f32 %v3248, %v5145
      %v5147 = vand.u32 %v5146, 4294901760
      %v5148 = vsub.f32 %v5146, %v5147
      %v5149 = vand.u32 %v5148, 4294901760
      %5150 = vmatprep.subr.mxu0 %v5149
      %v5151 = vand.u32 %v3247, 4294901760
      %v5152 = vsub.f32 %v3247, %v5151
      %v5153 = vand.u32 %v5152, 4294901760
      %v5154 = vsub.f32 %v5152, %v5153
      %v5155 = vand.u32 %v5154, 4294901760
      %5156 = vmatpush2.msra.mxu0 %v5155
      %v5157 = vand.u32 %v3202, 4294901760
      %5158 = vmatprep.mubr.f32.mxu0 %v5157
      %v5159 = vand.u32 %v3201, 4294901760
      %5160 = vmatmul.mubr.f32.gmra.mxu0 %v5159
      %v5161 = vpop.f32.mrf.mxu0
      %v5162 = vadd.f32 %v4769, %v5161
      %v5163 = vpop.f32.mrf.mxu0
      %v5164 = vadd.f32 %v4771, %v5163
      %5165 = vdwg.mxu0
      %v5166 = vand.u32 %v3246, 4294901760
      %v5167 = vsub.f32 %v3246, %v5166
      %5168 = vmatprep.subr.mxu0 %v5167
      %v5169 = vand.u32 %v3245, 4294901760
      %v5170 = vsub.f32 %v3245, %v5169
      %5171 = vmatpush1.msra.mxu0 %v5170
      %v5172 = vand.u32 %v3244, 4294901760
      %v5173 = vsub.f32 %v3244, %v5172
      %5174 = vmatprep.subr.mxu0 %v5173
      %v5175 = vand.u32 %v3243, 4294901760
      %v5176 = vsub.f32 %v3243, %v5175
      %5177 = vmatpush1.msra.mxu0 %v5176
      %v5178 = vand.u32 %v3242, 4294901760
      %v5179 = vsub.f32 %v3242, %v5178
      %5180 = vmatprep.subr.mxu0 %v5179
      %v5181 = vand.u32 %v3241, 4294901760
      %v5182 = vsub.f32 %v3241, %v5181
      %5183 = vmatpush1.msra.mxu0 %v5182
      %v5184 = vand.u32 %v3240, 4294901760
      %v5185 = vsub.f32 %v3240, %v5184
      %5186 = vmatprep.subr.mxu0 %v5185
      %v5187 = vand.u32 %v3239, 4294901760
      %v5188 = vsub.f32 %v3239, %v5187
      %5189 = vmatpush1.msra.mxu0 %v5188
      %v5190 = vand.u32 %v3238, 4294901760
      %v5191 = vsub.f32 %v3238, %v5190
      %5192 = vmatprep.subr.mxu0 %v5191
      %v5193 = vand.u32 %v3237, 4294901760
      %v5194 = vsub.f32 %v3237, %v5193
      %5195 = vmatpush1.msra.mxu0 %v5194
      %v5196 = vand.u32 %v3236, 4294901760
      %v5197 = vsub.f32 %v3236, %v5196
      %5198 = vmatprep.subr.mxu0 %v5197
      %v5199 = vand.u32 %v3235, 4294901760
      %v5200 = vsub.f32 %v3235, %v5199
      %5201 = vmatpush1.msra.mxu0 %v5200
      %v5202 = vand.u32 %v3234, 4294901760
      %v5203 = vsub.f32 %v3234, %v5202
      %5204 = vmatprep.subr.mxu0 %v5203
      %v5205 = vand.u32 %v3233, 4294901760
      %v5206 = vsub.f32 %v3233, %v5205
      %5207 = vmatpush1.msra.mxu0 %v5206
      %v5208 = vand.u32 %v3232, 4294901760
      %v5209 = vsub.f32 %v3232, %v5208
      %5210 = vmatprep.subr.mxu0 %v5209
      %v5211 = vand.u32 %v3231, 4294901760
      %v5212 = vsub.f32 %v3231, %v5211
      %5213 = vmatpush1.msra.mxu0 %v5212
      %v5214 = vand.u32 %v3230, 4294901760
      %v5215 = vsub.f32 %v3230, %v5214
      %5216 = vmatprep.subr.mxu0 %v5215
      %v5217 = vand.u32 %v3229, 4294901760
      %v5218 = vsub.f32 %v3229, %v5217
      %5219 = vmatpush1.msra.mxu0 %v5218
      %v5220 = vand.u32 %v3228, 4294901760
      %v5221 = vsub.f32 %v3228, %v5220
      %5222 = vmatprep.subr.mxu0 %v5221
      %v5223 = vand.u32 %v3227, 4294901760
      %v5224 = vsub.f32 %v3227, %v5223
      %5225 = vmatpush1.msra.mxu0 %v5224
      %v5226 = vand.u32 %v3226, 4294901760
      %v5227 = vsub.f32 %v3226, %v5226
      %5228 = vmatprep.subr.mxu0 %v5227
      %v5229 = vand.u32 %v3225, 4294901760
      %v5230 = vsub.f32 %v3225, %v5229
      %5231 = vmatpush1.msra.mxu0 %v5230
      %v5232 = vand.u32 %v3224, 4294901760
      %v5233 = vsub.f32 %v3224, %v5232
      %5234 = vmatprep.subr.mxu0 %v5233
      %v5235 = vand.u32 %v3223, 4294901760
      %v5236 = vsub.f32 %v3223, %v5235
      %5237 = vmatpush1.msra.mxu0 %v5236
      %v5238 = vand.u32 %v3222, 4294901760
      %v5239 = vsub.f32 %v3222, %v5238
      %5240 = vmatprep.subr.mxu0 %v5239
      %v5241 = vand.u32 %v3221, 4294901760
      %v5242 = vsub.f32 %v3221, %v5241
      %5243 = vmatpush1.msra.mxu0 %v5242
      %v5244 = vand.u32 %v3220, 4294901760
      %v5245 = vsub.f32 %v3220, %v5244
      %5246 = vmatprep.subr.mxu0 %v5245
      %v5247 = vand.u32 %v3219, 4294901760
      %v5248 = vsub.f32 %v3219, %v5247
      %5249 = vmatpush1.msra.mxu0 %v5248
      %v5250 = vand.u32 %v3218, 4294901760
      %v5251 = vsub.f32 %v3218, %v5250
      %5252 = vmatprep.subr.mxu0 %v5251
      %v5253 = vand.u32 %v3217, 4294901760
      %v5254 = vsub.f32 %v3217, %v5253
      %5255 = vmatpush1.msra.mxu0 %v5254
      %v5256 = vand.u32 %v3216, 4294901760
      %v5257 = vsub.f32 %v3216, %v5256
      %5258 = vmatprep.subr.mxu0 %v5257
      %v5259 = vand.u32 %v3215, 4294901760
      %v5260 = vsub.f32 %v3215, %v5259
      %5261 = vmatpush1.msra.mxu0 %v5260
      %v5262 = vand.u32 %v3278, 4294901760
      %v5263 = vsub.f32 %v3278, %v5262
      %5264 = vmatprep.subr.mxu0 %v5263
      %v5265 = vand.u32 %v3277, 4294901760
      %v5266 = vsub.f32 %v3277, %v5265
      %5267 = vmatpush2.msra.mxu0 %v5266
      %v5268 = vand.u32 %v3276, 4294901760
      %v5269 = vsub.f32 %v3276, %v5268
      %5270 = vmatprep.subr.mxu0 %v5269
      %v5271 = vand.u32 %v3275, 4294901760
      %v5272 = vsub.f32 %v3275, %v5271
      %5273 = vmatpush2.msra.mxu0 %v5272
      %v5274 = vand.u32 %v3274, 4294901760
      %v5275 = vsub.f32 %v3274, %v5274
      %5276 = vmatprep.subr.mxu0 %v5275
      %v5277 = vand.u32 %v3273, 4294901760
      %v5278 = vsub.f32 %v3273, %v5277
      %5279 = vmatpush2.msra.mxu0 %v5278
      %v5280 = vand.u32 %v3272, 4294901760
      %v5281 = vsub.f32 %v3272, %v5280
      %5282 = vmatprep.subr.mxu0 %v5281
      %v5283 = vand.u32 %v3271, 4294901760
      %v5284 = vsub.f32 %v3271, %v5283
      %5285 = vmatpush2.msra.mxu0 %v5284
      %v5286 = vand.u32 %v3270, 4294901760
      %v5287 = vsub.f32 %v3270, %v5286
      %5288 = vmatprep.subr.mxu0 %v5287
      %v5289 = vand.u32 %v3269, 4294901760
      %v5290 = vsub.f32 %v3269, %v5289
      %5291 = vmatpush2.msra.mxu0 %v5290
      %v5292 = vand.u32 %v3268, 4294901760
      %v5293 = vsub.f32 %v3268, %v5292
      %5294 = vmatprep.subr.mxu0 %v5293
      %v5295 = vand.u32 %v3267, 4294901760
      %v5296 = vsub.f32 %v3267, %v5295
      %5297 = vmatpush2.msra.mxu0 %v5296
      %v5298 = vand.u32 %v3266, 4294901760
      %v5299 = vsub.f32 %v3266, %v5298
      %5300 = vmatprep.subr.mxu0 %v5299
      %v5301 = vand.u32 %v3265, 4294901760
      %v5302 = vsub.f32 %v3265, %v5301
      %5303 = vmatpush2.msra.mxu0 %v5302
      %v5304 = vand.u32 %v3264, 4294901760
      %v5305 = vsub.f32 %v3264, %v5304
      %5306 = vmatprep.subr.mxu0 %v5305
      %v5307 = vand.u32 %v3263, 4294901760
      %v5308 = vsub.f32 %v3263, %v5307
      %5309 = vmatpush2.msra.mxu0 %v5308
      %v5310 = vand.u32 %v3262, 4294901760
      %v5311 = vsub.f32 %v3262, %v5310
      %5312 = vmatprep.subr.mxu0 %v5311
      %v5313 = vand.u32 %v3261, 4294901760
      %v5314 = vsub.f32 %v3261, %v5313
      %5315 = vmatpush2.msra.mxu0 %v5314
      %v5316 = vand.u32 %v3260, 4294901760
      %v5317 = vsub.f32 %v3260, %v5316
      %5318 = vmatprep.subr.mxu0 %v5317
      %v5319 = vand.u32 %v3259, 4294901760
      %v5320 = vsub.f32 %v3259, %v5319
      %5321 = vmatpush2.msra.mxu0 %v5320
      %v5322 = vand.u32 %v3258, 4294901760
      %v5323 = vsub.f32 %v3258, %v5322
      %5324 = vmatprep.subr.mxu0 %v5323
      %v5325 = vand.u32 %v3257, 4294901760
      %v5326 = vsub.f32 %v3257, %v5325
      %5327 = vmatpush2.msra.mxu0 %v5326
      %v5328 = vand.u32 %v3256, 4294901760
      %v5329 = vsub.f32 %v3256, %v5328
      %5330 = vmatprep.subr.mxu0 %v5329
      %v5331 = vand.u32 %v3255, 4294901760
      %v5332 = vsub.f32 %v3255, %v5331
      %5333 = vmatpush2.msra.mxu0 %v5332
      %v5334 = vand.u32 %v3254, 4294901760
      %v5335 = vsub.f32 %v3254, %v5334
      %5336 = vmatprep.subr.mxu0 %v5335
      %v5337 = vand.u32 %v3253, 4294901760
      %v5338 = vsub.f32 %v3253, %v5337
      %5339 = vmatpush2.msra.mxu0 %v5338
      %v5340 = vand.u32 %v3252, 4294901760
      %v5341 = vsub.f32 %v3252, %v5340
      %5342 = vmatprep.subr.mxu0 %v5341
      %v5343 = vand.u32 %v3251, 4294901760
      %v5344 = vsub.f32 %v3251, %v5343
      %5345 = vmatpush2.msra.mxu0 %v5344
      %v5346 = vand.u32 %v3250, 4294901760
      %v5347 = vsub.f32 %v3250, %v5346
      %5348 = vmatprep.subr.mxu0 %v5347
      %v5349 = vand.u32 %v3249, 4294901760
      %v5350 = vsub.f32 %v3249, %v5349
      %5351 = vmatpush2.msra.mxu0 %v5350
      %v5352 = vand.u32 %v3248, 4294901760
      %v5353 = vsub.f32 %v3248, %v5352
      %5354 = vmatprep.subr.mxu0 %v5353
      %v5355 = vand.u32 %v3247, 4294901760
      %v5356 = vsub.f32 %v3247, %v5355
      %5357 = vmatpush2.msra.mxu0 %v5356
      %v5358 = vand.u32 %v3202, 4294901760
      %v5359 = vsub.f32 %v3202, %v5358
      %5360 = vmatprep.mubr.f32.mxu0 %v5359
      %v5361 = vand.u32 %v3201, 4294901760
      %v5362 = vsub.f32 %v3201, %v5361
      %5363 = vmatmul.mubr.f32.gmra.mxu0 %v5362
      %v5364 = vpop.f32.mrf.mxu0
      %v5365 = vadd.f32 %v5162, %v5364
      %v5366 = vpop.f32.mrf.mxu0
      %v5367 = vadd.f32 %v5164, %v5366
      %5368 = vdwg.mxu0
      %v5369 = vand.u32 %v3246, 4294901760
      %5370 = vmatprep.subr.mxu0 %v5369
      %v5371 = vand.u32 %v3245, 4294901760
      %5372 = vmatpush1.msra.mxu0 %v5371
      %v5373 = vand.u32 %v3244, 4294901760
      %5374 = vmatprep.subr.mxu0 %v5373
      %v5375 = vand.u32 %v3243, 4294901760
      %5376 = vmatpush1.msra.mxu0 %v5375
      %v5377 = vand.u32 %v3242, 4294901760
      %5378 = vmatprep.subr.mxu0 %v5377
      %v5379 = vand.u32 %v3241, 4294901760
      %5380 = vmatpush1.msra.mxu0 %v5379
      %v5381 = vand.u32 %v3240, 4294901760
      %5382 = vmatprep.subr.mxu0 %v5381
      %v5383 = vand.u32 %v3239, 4294901760
      %5384 = vmatpush1.msra.mxu0 %v5383
      %v5385 = vand.u32 %v3238, 4294901760
      %5386 = vmatprep.subr.mxu0 %v5385
      %v5387 = vand.u32 %v3237, 4294901760
      %5388 = vmatpush1.msra.mxu0 %v5387
      %v5389 = vand.u32 %v3236, 4294901760
      %5390 = vmatprep.subr.mxu0 %v5389
      %v5391 = vand.u32 %v3235, 4294901760
      %5392 = vmatpush1.msra.mxu0 %v5391
      %v5393 = vand.u32 %v3234, 4294901760
      %5394 = vmatprep.subr.mxu0 %v5393
      %v5395 = vand.u32 %v3233, 4294901760
      %5396 = vmatpush1.msra.mxu0 %v5395
      %v5397 = vand.u32 %v3232, 4294901760
      %5398 = vmatprep.subr.mxu0 %v5397
      %v5399 = vand.u32 %v3231, 4294901760
      %5400 = vmatpush1.msra.mxu0 %v5399
      %v5401 = vand.u32 %v3230, 4294901760
      %5402 = vmatprep.subr.mxu0 %v5401
      %v5403 = vand.u32 %v3229, 4294901760
      %5404 = vmatpush1.msra.mxu0 %v5403
      %v5405 = vand.u32 %v3228, 4294901760
      %5406 = vmatprep.subr.mxu0 %v5405
      %v5407 = vand.u32 %v3227, 4294901760
      %5408 = vmatpush1.msra.mxu0 %v5407
      %v5409 = vand.u32 %v3226, 4294901760
      %5410 = vmatprep.subr.mxu0 %v5409
      %v5411 = vand.u32 %v3225, 4294901760
      %5412 = vmatpush1.msra.mxu0 %v5411
      %v5413 = vand.u32 %v3224, 4294901760
      %5414 = vmatprep.subr.mxu0 %v5413
      %v5415 = vand.u32 %v3223, 4294901760
      %5416 = vmatpush1.msra.mxu0 %v5415
      %v5417 = vand.u32 %v3222, 4294901760
      %5418 = vmatprep.subr.mxu0 %v5417
      %v5419 = vand.u32 %v3221, 4294901760
      %5420 = vmatpush1.msra.mxu0 %v5419
      %v5421 = vand.u32 %v3220, 4294901760
      %5422 = vmatprep.subr.mxu0 %v5421
      %v5423 = vand.u32 %v3219, 4294901760
      %5424 = vmatpush1.msra.mxu0 %v5423
      %v5425 = vand.u32 %v3218, 4294901760
      %5426 = vmatprep.subr.mxu0 %v5425
      %v5427 = vand.u32 %v3217, 4294901760
      %5428 = vmatpush1.msra.mxu0 %v5427
      %v5429 = vand.u32 %v3216, 4294901760
      %5430 = vmatprep.subr.mxu0 %v5429
      %v5431 = vand.u32 %v3215, 4294901760
      %5432 = vmatpush1.msra.mxu0 %v5431
      %v5433 = vand.u32 %v3278, 4294901760
      %5434 = vmatprep.subr.mxu0 %v5433
      %v5435 = vand.u32 %v3277, 4294901760
      %5436 = vmatpush2.msra.mxu0 %v5435
      %v5437 = vand.u32 %v3276, 4294901760
      %5438 = vmatprep.subr.mxu0 %v5437
      %v5439 = vand.u32 %v3275, 4294901760
      %5440 = vmatpush2.msra.mxu0 %v5439
      %v5441 = vand.u32 %v3274, 4294901760
      %5442 = vmatprep.subr.mxu0 %v5441
      %v5443 = vand.u32 %v3273, 4294901760
      %5444 = vmatpush2.msra.mxu0 %v5443
      %v5445 = vand.u32 %v3272, 4294901760
      %5446 = vmatprep.subr.mxu0 %v5445
      %v5447 = vand.u32 %v3271, 4294901760
      %5448 = vmatpush2.msra.mxu0 %v5447
      %v5449 = vand.u32 %v3270, 4294901760
      %5450 = vmatprep.subr.mxu0 %v5449
      %v5451 = vand.u32 %v3269, 4294901760
      %5452 = vmatpush2.msra.mxu0 %v5451
      %v5453 = vand.u32 %v3268, 4294901760
      %5454 = vmatprep.subr.mxu0 %v5453
      %v5455 = vand.u32 %v3267, 4294901760
      %5456 = vmatpush2.msra.mxu0 %v5455
      %v5457 = vand.u32 %v3266, 4294901760
      %5458 = vmatprep.subr.mxu0 %v5457
      %v5459 = vand.u32 %v3265, 4294901760
      %5460 = vmatpush2.msra.mxu0 %v5459
      %v5461 = vand.u32 %v3264, 4294901760
      %5462 = vmatprep.subr.mxu0 %v5461
      %v5463 = vand.u32 %v3263, 4294901760
      %5464 = vmatpush2.msra.mxu0 %v5463
      %v5465 = vand.u32 %v3262, 4294901760
      %5466 = vmatprep.subr.mxu0 %v5465
      %v5467 = vand.u32 %v3261, 4294901760
      %5468 = vmatpush2.msra.mxu0 %v5467
      %v5469 = vand.u32 %v3260, 4294901760
      %5470 = vmatprep.subr.mxu0 %v5469
      %v5471 = vand.u32 %v3259, 4294901760
      %5472 = vmatpush2.msra.mxu0 %v5471
      %v5473 = vand.u32 %v3258, 4294901760
      %5474 = vmatprep.subr.mxu0 %v5473
      %v5475 = vand.u32 %v3257, 4294901760
      %5476 = vmatpush2.msra.mxu0 %v5475
      %v5477 = vand.u32 %v3256, 4294901760
      %5478 = vmatprep.subr.mxu0 %v5477
      %v5479 = vand.u32 %v3255, 4294901760
      %5480 = vmatpush2.msra.mxu0 %v5479
      %v5481 = vand.u32 %v3254, 4294901760
      %5482 = vmatprep.subr.mxu0 %v5481
      %v5483 = vand.u32 %v3253, 4294901760
      %5484 = vmatpush2.msra.mxu0 %v5483
      %v5485 = vand.u32 %v3252, 4294901760
      %5486 = vmatprep.subr.mxu0 %v5485
      %v5487 = vand.u32 %v3251, 4294901760
      %5488 = vmatpush2.msra.mxu0 %v5487
      %v5489 = vand.u32 %v3250, 4294901760
      %5490 = vmatprep.subr.mxu0 %v5489
      %v5491 = vand.u32 %v3249, 4294901760
      %5492 = vmatpush2.msra.mxu0 %v5491
      %v5493 = vand.u32 %v3248, 4294901760
      %5494 = vmatprep.subr.mxu0 %v5493
      %v5495 = vand.u32 %v3247, 4294901760
      %5496 = vmatpush2.msra.mxu0 %v5495
      %v5497 = vand.u32 %v3202, 4294901760
      %v5498 = vsub.f32 %v3202, %v5497
      %v5499 = vand.u32 %v5498, 4294901760
      %5500 = vmatprep.mubr.f32.mxu0 %v5499
      %v5501 = vand.u32 %v3201, 4294901760
      %v5502 = vsub.f32 %v3201, %v5501
      %v5503 = vand.u32 %v5502, 4294901760
      %5504 = vmatmul.mubr.f32.gmra.mxu0 %v5503
      %v5505 = vpop.f32.mrf.mxu0
      %v5506 = vadd.f32 %v5365, %v5505
      %v5507 = vpop.f32.mrf.mxu0
      %v5508 = vadd.f32 %v5367, %v5507
      %5509 = vdwg.mxu0
      %v5510 = vand.u32 %v3246, 4294901760
      %v5511 = vsub.f32 %v3246, %v5510
      %v5512 = vand.u32 %v5511, 4294901760
      %5513 = vmatprep.subr.mxu0 %v5512
      %v5514 = vand.u32 %v3245, 4294901760
      %v5515 = vsub.f32 %v3245, %v5514
      %v5516 = vand.u32 %v5515, 4294901760
      %5517 = vmatpush1.msra.mxu0 %v5516
      %v5518 = vand.u32 %v3244, 4294901760
      %v5519 = vsub.f32 %v3244, %v5518
      %v5520 = vand.u32 %v5519, 4294901760
      %5521 = vmatprep.subr.mxu0 %v5520
      %v5522 = vand.u32 %v3243, 4294901760
      %v5523 = vsub.f32 %v3243, %v5522
      %v5524 = vand.u32 %v5523, 4294901760
      %5525 = vmatpush1.msra.mxu0 %v5524
      %v5526 = vand.u32 %v3242, 4294901760
      %v5527 = vsub.f32 %v3242, %v5526
      %v5528 = vand.u32 %v5527, 4294901760
      %5529 = vmatprep.subr.mxu0 %v5528
      %v5530 = vand.u32 %v3241, 4294901760
      %v5531 = vsub.f32 %v3241, %v5530
      %v5532 = vand.u32 %v5531, 4294901760
      %5533 = vmatpush1.msra.mxu0 %v5532
      %v5534 = vand.u32 %v3240, 4294901760
      %v5535 = vsub.f32 %v3240, %v5534
      %v5536 = vand.u32 %v5535, 4294901760
      %5537 = vmatprep.subr.mxu0 %v5536
      %v5538 = vand.u32 %v3239, 4294901760
      %v5539 = vsub.f32 %v3239, %v5538
      %v5540 = vand.u32 %v5539, 4294901760
      %5541 = vmatpush1.msra.mxu0 %v5540
      %v5542 = vand.u32 %v3238, 4294901760
      %v5543 = vsub.f32 %v3238, %v5542
      %v5544 = vand.u32 %v5543, 4294901760
      %5545 = vmatprep.subr.mxu0 %v5544
      %v5546 = vand.u32 %v3237, 4294901760
      %v5547 = vsub.f32 %v3237, %v5546
      %v5548 = vand.u32 %v5547, 4294901760
      %5549 = vmatpush1.msra.mxu0 %v5548
      %v5550 = vand.u32 %v3236, 4294901760
      %v5551 = vsub.f32 %v3236, %v5550
      %v5552 = vand.u32 %v5551, 4294901760
      %5553 = vmatprep.subr.mxu0 %v5552
      %v5554 = vand.u32 %v3235, 4294901760
      %v5555 = vsub.f32 %v3235, %v5554
      %v5556 = vand.u32 %v5555, 4294901760
      %5557 = vmatpush1.msra.mxu0 %v5556
      %v5558 = vand.u32 %v3234, 4294901760
      %v5559 = vsub.f32 %v3234, %v5558
      %v5560 = vand.u32 %v5559, 4294901760
      %5561 = vmatprep.subr.mxu0 %v5560
      %v5562 = vand.u32 %v3233, 4294901760
      %v5563 = vsub.f32 %v3233, %v5562
      %v5564 = vand.u32 %v5563, 4294901760
      %5565 = vmatpush1.msra.mxu0 %v5564
      %v5566 = vand.u32 %v3232, 4294901760
      %v5567 = vsub.f32 %v3232, %v5566
      %v5568 = vand.u32 %v5567, 4294901760
      %5569 = vmatprep.subr.mxu0 %v5568
      %v5570 = vand.u32 %v3231, 4294901760
      %v5571 = vsub.f32 %v3231, %v5570
      %v5572 = vand.u32 %v5571, 4294901760
      %5573 = vmatpush1.msra.mxu0 %v5572
      %v5574 = vand.u32 %v3230, 4294901760
      %v5575 = vsub.f32 %v3230, %v5574
      %v5576 = vand.u32 %v5575, 4294901760
      %5577 = vmatprep.subr.mxu0 %v5576
      %v5578 = vand.u32 %v3229, 4294901760
      %v5579 = vsub.f32 %v3229, %v5578
      %v5580 = vand.u32 %v5579, 4294901760
      %5581 = vmatpush1.msra.mxu0 %v5580
      %v5582 = vand.u32 %v3228, 4294901760
      %v5583 = vsub.f32 %v3228, %v5582
      %v5584 = vand.u32 %v5583, 4294901760
      %5585 = vmatprep.subr.mxu0 %v5584
      %v5586 = vand.u32 %v3227, 4294901760
      %v5587 = vsub.f32 %v3227, %v5586
      %v5588 = vand.u32 %v5587, 4294901760
      %5589 = vmatpush1.msra.mxu0 %v5588
      %v5590 = vand.u32 %v3226, 4294901760
      %v5591 = vsub.f32 %v3226, %v5590
      %v5592 = vand.u32 %v5591, 4294901760
      %5593 = vmatprep.subr.mxu0 %v5592
      %v5594 = vand.u32 %v3225, 4294901760
      %v5595 = vsub.f32 %v3225, %v5594
      %v5596 = vand.u32 %v5595, 4294901760
      %5597 = vmatpush1.msra.mxu0 %v5596
      %v5598 = vand.u32 %v3224, 4294901760
      %v5599 = vsub.f32 %v3224, %v5598
      %v5600 = vand.u32 %v5599, 4294901760
      %5601 = vmatprep.subr.mxu0 %v5600
      %v5602 = vand.u32 %v3223, 4294901760
      %v5603 = vsub.f32 %v3223, %v5602
      %v5604 = vand.u32 %v5603, 4294901760
      %5605 = vmatpush1.msra.mxu0 %v5604
      %v5606 = vand.u32 %v3222, 4294901760
      %v5607 = vsub.f32 %v3222, %v5606
      %v5608 = vand.u32 %v5607, 4294901760
      %5609 = vmatprep.subr.mxu0 %v5608
      %v5610 = vand.u32 %v3221, 4294901760
      %v5611 = vsub.f32 %v3221, %v5610
      %v5612 = vand.u32 %v5611, 4294901760
      %5613 = vmatpush1.msra.mxu0 %v5612
      %v5614 = vand.u32 %v3220, 4294901760
      %v5615 = vsub.f32 %v3220, %v5614
      %v5616 = vand.u32 %v5615, 4294901760
      %5617 = vmatprep.subr.mxu0 %v5616
      %v5618 = vand.u32 %v3219, 4294901760
      %v5619 = vsub.f32 %v3219, %v5618
      %v5620 = vand.u32 %v5619, 4294901760
      %5621 = vmatpush1.msra.mxu0 %v5620
      %v5622 = vand.u32 %v3218, 4294901760
      %v5623 = vsub.f32 %v3218, %v5622
      %v5624 = vand.u32 %v5623, 4294901760
      %5625 = vmatprep.subr.mxu0 %v5624
      %v5626 = vand.u32 %v3217, 4294901760
      %v5627 = vsub.f32 %v3217, %v5626
      %v5628 = vand.u32 %v5627, 4294901760
      %5629 = vmatpush1.msra.mxu0 %v5628
      %v5630 = vand.u32 %v3216, 4294901760
      %v5631 = vsub.f32 %v3216, %v5630
      %v5632 = vand.u32 %v5631, 4294901760
      %5633 = vmatprep.subr.mxu0 %v5632
      %v5634 = vand.u32 %v3215, 4294901760
      %v5635 = vsub.f32 %v3215, %v5634
      %v5636 = vand.u32 %v5635, 4294901760
      %5637 = vmatpush1.msra.mxu0 %v5636
      %v5638 = vand.u32 %v3278, 4294901760
      %v5639 = vsub.f32 %v3278, %v5638
      %v5640 = vand.u32 %v5639, 4294901760
      %5641 = vmatprep.subr.mxu0 %v5640
      %v5642 = vand.u32 %v3277, 4294901760
      %v5643 = vsub.f32 %v3277, %v5642
      %v5644 = vand.u32 %v5643, 4294901760
      %5645 = vmatpush2.msra.mxu0 %v5644
      %v5646 = vand.u32 %v3276, 4294901760
      %v5647 = vsub.f32 %v3276, %v5646
      %v5648 = vand.u32 %v5647, 4294901760
      %5649 = vmatprep.subr.mxu0 %v5648
      %v5650 = vand.u32 %v3275, 4294901760
      %v5651 = vsub.f32 %v3275, %v5650
      %v5652 = vand.u32 %v5651, 4294901760
      %5653 = vmatpush2.msra.mxu0 %v5652
      %v5654 = vand.u32 %v3274, 4294901760
      %v5655 = vsub.f32 %v3274, %v5654
      %v5656 = vand.u32 %v5655, 4294901760
      %5657 = vmatprep.subr.mxu0 %v5656
      %v5658 = vand.u32 %v3273, 4294901760
      %v5659 = vsub.f32 %v3273, %v5658
      %v5660 = vand.u32 %v5659, 4294901760
      %5661 = vmatpush2.msra.mxu0 %v5660
      %v5662 = vand.u32 %v3272, 4294901760
      %v5663 = vsub.f32 %v3272, %v5662
      %v5664 = vand.u32 %v5663, 4294901760
      %5665 = vmatprep.subr.mxu0 %v5664
      %v5666 = vand.u32 %v3271, 4294901760
      %v5667 = vsub.f32 %v3271, %v5666
      %v5668 = vand.u32 %v5667, 4294901760
      %5669 = vmatpush2.msra.mxu0 %v5668
      %v5670 = vand.u32 %v3270, 4294901760
      %v5671 = vsub.f32 %v3270, %v5670
      %v5672 = vand.u32 %v5671, 4294901760
      %5673 = vmatprep.subr.mxu0 %v5672
      %v5674 = vand.u32 %v3269, 4294901760
      %v5675 = vsub.f32 %v3269, %v5674
      %v5676 = vand.u32 %v5675, 4294901760
      %5677 = vmatpush2.msra.mxu0 %v5676
      %v5678 = vand.u32 %v3268, 4294901760
      %v5679 = vsub.f32 %v3268, %v5678
      %v5680 = vand.u32 %v5679, 4294901760
      %5681 = vmatprep.subr.mxu0 %v5680
      %v5682 = vand.u32 %v3267, 4294901760
      %v5683 = vsub.f32 %v3267, %v5682
      %v5684 = vand.u32 %v5683, 4294901760
      %5685 = vmatpush2.msra.mxu0 %v5684
      %v5686 = vand.u32 %v3266, 4294901760
      %v5687 = vsub.f32 %v3266, %v5686
      %v5688 = vand.u32 %v5687, 4294901760
      %5689 = vmatprep.subr.mxu0 %v5688
      %v5690 = vand.u32 %v3265, 4294901760
      %v5691 = vsub.f32 %v3265, %v5690
      %v5692 = vand.u32 %v5691, 4294901760
      %5693 = vmatpush2.msra.mxu0 %v5692
      %v5694 = vand.u32 %v3264, 4294901760
      %v5695 = vsub.f32 %v3264, %v5694
      %v5696 = vand.u32 %v5695, 4294901760
      %5697 = vmatprep.subr.mxu0 %v5696
      %v5698 = vand.u32 %v3263, 4294901760
      %v5699 = vsub.f32 %v3263, %v5698
      %v5700 = vand.u32 %v5699, 4294901760
      %5701 = vmatpush2.msra.mxu0 %v5700
      %v5702 = vand.u32 %v3262, 4294901760
      %v5703 = vsub.f32 %v3262, %v5702
      %v5704 = vand.u32 %v5703, 4294901760
      %5705 = vmatprep.subr.mxu0 %v5704
      %v5706 = vand.u32 %v3261, 4294901760
      %v5707 = vsub.f32 %v3261, %v5706
      %v5708 = vand.u32 %v5707, 4294901760
      %5709 = vmatpush2.msra.mxu0 %v5708
      %v5710 = vand.u32 %v3260, 4294901760
      %v5711 = vsub.f32 %v3260, %v5710
      %v5712 = vand.u32 %v5711, 4294901760
      %5713 = vmatprep.subr.mxu0 %v5712
      %v5714 = vand.u32 %v3259, 4294901760
      %v5715 = vsub.f32 %v3259, %v5714
      %v5716 = vand.u32 %v5715, 4294901760
      %5717 = vmatpush2.msra.mxu0 %v5716
      %v5718 = vand.u32 %v3258, 4294901760
      %v5719 = vsub.f32 %v3258, %v5718
      %v5720 = vand.u32 %v5719, 4294901760
      %5721 = vmatprep.subr.mxu0 %v5720
      %v5722 = vand.u32 %v3257, 4294901760
      %v5723 = vsub.f32 %v3257, %v5722
      %v5724 = vand.u32 %v5723, 4294901760
      %5725 = vmatpush2.msra.mxu0 %v5724
      %v5726 = vand.u32 %v3256, 4294901760
      %v5727 = vsub.f32 %v3256, %v5726
      %v5728 = vand.u32 %v5727, 4294901760
      %5729 = vmatprep.subr.mxu0 %v5728
      %v5730 = vand.u32 %v3255, 4294901760
      %v5731 = vsub.f32 %v3255, %v5730
      %v5732 = vand.u32 %v5731, 4294901760
      %5733 = vmatpush2.msra.mxu0 %v5732
      %v5734 = vand.u32 %v3254, 4294901760
      %v5735 = vsub.f32 %v3254, %v5734
      %v5736 = vand.u32 %v5735, 4294901760
      %5737 = vmatprep.subr.mxu0 %v5736
      %v5738 = vand.u32 %v3253, 4294901760
      %v5739 = vsub.f32 %v3253, %v5738
      %v5740 = vand.u32 %v5739, 4294901760
      %5741 = vmatpush2.msra.mxu0 %v5740
      %v5742 = vand.u32 %v3252, 4294901760
      %v5743 = vsub.f32 %v3252, %v5742
      %v5744 = vand.u32 %v5743, 4294901760
      %5745 = vmatprep.subr.mxu0 %v5744
      %v5746 = vand.u32 %v3251, 4294901760
      %v5747 = vsub.f32 %v3251, %v5746
      %v5748 = vand.u32 %v5747, 4294901760
      %5749 = vmatpush2.msra.mxu0 %v5748
      %v5750 = vand.u32 %v3250, 4294901760
      %v5751 = vsub.f32 %v3250, %v5750
      %v5752 = vand.u32 %v5751, 4294901760
      %5753 = vmatprep.subr.mxu0 %v5752
      %v5754 = vand.u32 %v3249, 4294901760
      %v5755 = vsub.f32 %v3249, %v5754
      %v5756 = vand.u32 %v5755, 4294901760
      %5757 = vmatpush2.msra.mxu0 %v5756
      %v5758 = vand.u32 %v3248, 4294901760
      %v5759 = vsub.f32 %v3248, %v5758
      %v5760 = vand.u32 %v5759, 4294901760
      %5761 = vmatprep.subr.mxu0 %v5760
      %v5762 = vand.u32 %v3247, 4294901760
      %v5763 = vsub.f32 %v3247, %v5762
      %v5764 = vand.u32 %v5763, 4294901760
      %5765 = vmatpush2.msra.mxu0 %v5764
      %v5766 = vand.u32 %v3202, 4294901760
      %5767 = vmatprep.mubr.f32.mxu0 %v5766
      %v5768 = vand.u32 %v3201, 4294901760
      %5769 = vmatmul.mubr.f32.gmra.mxu0 %v5768
      %v5770 = vpop.f32.mrf.mxu0
      %v5771 = vadd.f32 %v5506, %v5770
      %v5772 = vpop.f32.mrf.mxu0
      %v5773 = vadd.f32 %v5508, %v5772
      %5774 = vdwg.mxu0
      %v5775 = vand.u32 %v3246, 4294901760
      %5776 = vmatprep.subr.mxu0 %v5775
      %v5777 = vand.u32 %v3245, 4294901760
      %5778 = vmatpush1.msra.mxu0 %v5777
      %v5779 = vand.u32 %v3244, 4294901760
      %5780 = vmatprep.subr.mxu0 %v5779
      %v5781 = vand.u32 %v3243, 4294901760
      %5782 = vmatpush1.msra.mxu0 %v5781
      %v5783 = vand.u32 %v3242, 4294901760
      %5784 = vmatprep.subr.mxu0 %v5783
      %v5785 = vand.u32 %v3241, 4294901760
      %5786 = vmatpush1.msra.mxu0 %v5785
      %v5787 = vand.u32 %v3240, 4294901760
      %5788 = vmatprep.subr.mxu0 %v5787
      %v5789 = vand.u32 %v3239, 4294901760
      %5790 = vmatpush1.msra.mxu0 %v5789
      %v5791 = vand.u32 %v3238, 4294901760
      %5792 = vmatprep.subr.mxu0 %v5791
      %v5793 = vand.u32 %v3237, 4294901760
      %5794 = vmatpush1.msra.mxu0 %v5793
      %v5795 = vand.u32 %v3236, 4294901760
      %5796 = vmatprep.subr.mxu0 %v5795
      %v5797 = vand.u32 %v3235, 4294901760
      %5798 = vmatpush1.msra.mxu0 %v5797
      %v5799 = vand.u32 %v3234, 4294901760
      %5800 = vmatprep.subr.mxu0 %v5799
      %v5801 = vand.u32 %v3233, 4294901760
      %5802 = vmatpush1.msra.mxu0 %v5801
      %v5803 = vand.u32 %v3232, 4294901760
      %5804 = vmatprep.subr.mxu0 %v5803
      %v5805 = vand.u32 %v3231, 4294901760
      %5806 = vmatpush1.msra.mxu0 %v5805
      %v5807 = vand.u32 %v3230, 4294901760
      %5808 = vmatprep.subr.mxu0 %v5807
      %v5809 = vand.u32 %v3229, 4294901760
      %5810 = vmatpush1.msra.mxu0 %v5809
      %v5811 = vand.u32 %v3228, 4294901760
      %5812 = vmatprep.subr.mxu0 %v5811
      %v5813 = vand.u32 %v3227, 4294901760
      %5814 = vmatpush1.msra.mxu0 %v5813
      %v5815 = vand.u32 %v3226, 4294901760
      %5816 = vmatprep.subr.mxu0 %v5815
      %v5817 = vand.u32 %v3225, 4294901760
      %5818 = vmatpush1.msra.mxu0 %v5817
      %v5819 = vand.u32 %v3224, 4294901760
      %5820 = vmatprep.subr.mxu0 %v5819
      %v5821 = vand.u32 %v3223, 4294901760
      %5822 = vmatpush1.msra.mxu0 %v5821
      %v5823 = vand.u32 %v3222, 4294901760
      %5824 = vmatprep.subr.mxu0 %v5823
      %v5825 = vand.u32 %v3221, 4294901760
      %5826 = vmatpush1.msra.mxu0 %v5825
      %v5827 = vand.u32 %v3220, 4294901760
      %5828 = vmatprep.subr.mxu0 %v5827
      %v5829 = vand.u32 %v3219, 4294901760
      %5830 = vmatpush1.msra.mxu0 %v5829
      %v5831 = vand.u32 %v3218, 4294901760
      %5832 = vmatprep.subr.mxu0 %v5831
      %v5833 = vand.u32 %v3217, 4294901760
      %5834 = vmatpush1.msra.mxu0 %v5833
      %v5835 = vand.u32 %v3216, 4294901760
      %5836 = vmatprep.subr.mxu0 %v5835
      %v5837 = vand.u32 %v3215, 4294901760
      %5838 = vmatpush1.msra.mxu0 %v5837
      %v5839 = vand.u32 %v3278, 4294901760
      %5840 = vmatprep.subr.mxu0 %v5839
      %v5841 = vand.u32 %v3277, 4294901760
      %5842 = vmatpush2.msra.mxu0 %v5841
      %v5843 = vand.u32 %v3276, 4294901760
      %5844 = vmatprep.subr.mxu0 %v5843
      %v5845 = vand.u32 %v3275, 4294901760
      %5846 = vmatpush2.msra.mxu0 %v5845
      %v5847 = vand.u32 %v3274, 4294901760
      %5848 = vmatprep.subr.mxu0 %v5847
      %v5849 = vand.u32 %v3273, 4294901760
      %5850 = vmatpush2.msra.mxu0 %v5849
      %v5851 = vand.u32 %v3272, 4294901760
      %5852 = vmatprep.subr.mxu0 %v5851
      %v5853 = vand.u32 %v3271, 4294901760
      %5854 = vmatpush2.msra.mxu0 %v5853
      %v5855 = vand.u32 %v3270, 4294901760
      %5856 = vmatprep.subr.mxu0 %v5855
      %v5857 = vand.u32 %v3269, 4294901760
      %5858 = vmatpush2.msra.mxu0 %v5857
      %v5859 = vand.u32 %v3268, 4294901760
      %5860 = vmatprep.subr.mxu0 %v5859
      %v5861 = vand.u32 %v3267, 4294901760
      %5862 = vmatpush2.msra.mxu0 %v5861
      %v5863 = vand.u32 %v3266, 4294901760
      %5864 = vmatprep.subr.mxu0 %v5863
      %v5865 = vand.u32 %v3265, 4294901760
      %5866 = vmatpush2.msra.mxu0 %v5865
      %v5867 = vand.u32 %v3264, 4294901760
      %5868 = vmatprep.subr.mxu0 %v5867
      %v5869 = vand.u32 %v3263, 4294901760
      %5870 = vmatpush2.msra.mxu0 %v5869
      %v5871 = vand.u32 %v3262, 4294901760
      %5872 = vmatprep.subr.mxu0 %v5871
      %v5873 = vand.u32 %v3261, 4294901760
      %5874 = vmatpush2.msra.mxu0 %v5873
      %v5875 = vand.u32 %v3260, 4294901760
      %5876 = vmatprep.subr.mxu0 %v5875
      %v5877 = vand.u32 %v3259, 4294901760
      %5878 = vmatpush2.msra.mxu0 %v5877
      %v5879 = vand.u32 %v3258, 4294901760
      %5880 = vmatprep.subr.mxu0 %v5879
      %v5881 = vand.u32 %v3257, 4294901760
      %5882 = vmatpush2.msra.mxu0 %v5881
      %v5883 = vand.u32 %v3256, 4294901760
      %5884 = vmatprep.subr.mxu0 %v5883
      %v5885 = vand.u32 %v3255, 4294901760
      %5886 = vmatpush2.msra.mxu0 %v5885
      %v5887 = vand.u32 %v3254, 4294901760
      %5888 = vmatprep.subr.mxu0 %v5887
      %v5889 = vand.u32 %v3253, 4294901760
      %5890 = vmatpush2.msra.mxu0 %v5889
      %v5891 = vand.u32 %v3252, 4294901760
      %5892 = vmatprep.subr.mxu0 %v5891
      %v5893 = vand.u32 %v3251, 4294901760
      %5894 = vmatpush2.msra.mxu0 %v5893
      %v5895 = vand.u32 %v3250, 4294901760
      %5896 = vmatprep.subr.mxu0 %v5895
      %v5897 = vand.u32 %v3249, 4294901760
      %5898 = vmatpush2.msra.mxu0 %v5897
      %v5899 = vand.u32 %v3248, 4294901760
      %5900 = vmatprep.subr.mxu0 %v5899
      %v5901 = vand.u32 %v3247, 4294901760
      %5902 = vmatpush2.msra.mxu0 %v5901
      %v5903 = vand.u32 %v3202, 4294901760
      %5904 = vmatprep.mubr.f32.mxu0 %v5903
      %v5905 = vand.u32 %v3201, 4294901760
      %5906 = vmatmul.mubr.f32.gmra.mxu0 %v5905
      %v5907 = vpop.f32.mrf.mxu0
      %v5908 = vadd.f32 %v5771, %v5907
      %v5909 = vpop.f32.mrf.mxu0
      %v5910 = vadd.f32 %v5773, %v5909
      %5911 = vdwg.mxu0
      %s5912 = sld [smem:[#allocation2]]
      %v5913 = vstv %s5912
      %v5914 = vadd.f32 %v5908, %v5913
      %v5915 = vadd.f32 %v5910, %v5913
      %v5916 = vxor.u32 %v5914, 2147483648
      %v5917 = vxor.u32 %v5915, 2147483648
      %v5918 = vmul.f32 %v5916, 1.442695
      %v5919 = vpow.pop %v5918
      %v5920 = vmul.f32 %v5917, 1.442695
      %v5921 = vpow.pop %v5920
      %v5922 = vadd.f32 %v5919, 1.0
      %v5923 = vadd.f32 %v5921, 1.0
      %v5924 = vrcp.pop %v5922
      %v5925 = vmul.f32 1.0, %v5924
      %v5926 = vrcp.pop %v5923
      %v5927 = vmul.f32 1.0, %v5926
      %v5928 = vlaneseq
      %v5929 = vshrl.u32 %v5928, 7
      %v5930 = vsub.s32 0, %v5929
      %v5931 = vrot.slane %v5925, %v5930
      %v5932 = vlaneseq
      %v5933 = vshrl.u32 %v5932, 7
      %v5934 = vsub.s32 0, %v5933
      %v5935 = vrot.slane %v5927, %v5934
      %v5936 = vmul.f32 %v3186, %v5931
      %v5937 = vmul.f32 %v3187, %v5935
      %vm5938 = vcmp.gt.f32.partialorder %v5936, 0.0
      %vm5939 = vcmp.gt.f32.partialorder %v5937, 0.0
      %v5940 = vmul.f32 %v5936, 0.1
      %v5941 = vmul.f32 %v5937, 0.1
      %v5942 = vsel %vm5938, %v5936, %v5940
      %v5943 = vsel %vm5939, %v5937, %v5941
      %5944 = vst [vmem:[%s279] sm:$0xff] %v5942
      %5945 = vst [vmem:[%s279 + $0x8] sm:$0xff] %v5943
      %p5946 = scmp.lt.s32.totalorder %s19, 1
      %s5947 = scalar_select %p5946, %s19, 1
      %s5948 = smul.addr %s5947, 2
      %s5949 = smul.addr %s5948, 8
      %s5950 = scalar_lea.vmem %s7, %s5949
      // Predicated region
      $region49: #{_lambda_.1} parent=47 // pred_check
        %p5951 = pneg %p189
      $region50: #{_lambda_.1} parent=47 // pred_check_branch
        %5953 = sbr.rel (%p5951) target = $region52
      $region51: #{_lambda_.1} parent=47 // pred_region
        _
      $region52: #{_lambda_.1} parent=47 // pred_fallthru
        _
    $region48: #{_lambda_.1} parent=5 // pred_fallthru
      _
    %p5954 = scmp.le.s32.totalorder 2, %s14
    // Predicated region
    $region53: #{_lambda_.1} parent=5 // pred_check
      %p5955 = pneg %p5954
    $region54: #{_lambda_.1} parent=5 // pred_check_branch
      %5957 = sbr.rel (%p5955) target = $region56
    $region55: #{_lambda_.1} parent=5 // pred_region
      %s5958 = ssub.s32 %s14, 2
      // Predicated region
      $region57: #{_lambda_.1} parent=55 // pred_check
        %p5959 = pneg %p195
      $region58: #{_lambda_.1} parent=55 // pred_check_branch
        %5961 = sbr.rel (%p5959) target = $region60
      $region59: #{_lambda_.1} parent=55 // pred_region
        %p5962 = scmp.lt.s32.totalorder %s20, 1
        %s5963 = scalar_select %p5962, %s20, 1
        %s5964 = smul.addr %s5963, 2
        %s5965 = smul.addr %s5964, 8
        %s5966 = scalar_lea.vmem %s7, %s5965
      $region60: #{_lambda_.1} parent=55 // pred_fallthru
        _
    $region56: #{_lambda_.1} parent=5 // pred_fallthru
      _
  $region6: #{_lambda_.1} parent=0 // loop_footer
    %s18 = sadd.s32 1, %s14
  $region7: #{_lambda_.1} parent=0 // loop_footer_branch
    %13 = sbr.rel target = $region3
  $region8: #{_lambda_.1} parent=0 // loop_exit
    _

</llo_original>
